<compile_context>
chip_gen: v7x
topology: tpu7x:2x2x1
jax: 0.10.0
libtpu: 0.0.40
codegen_flags: <defaults>
</compile_context>

<pallas_src>
import functools

import jax
import jax.numpy as jnp
from jax import lax
from jax.experimental import pallas as pl
from jax.experimental.pallas import tpu as pltpu

EPS = 1e-5
LEAKY_SLOPE = 0.2
MAX_ROW_TILE = 256          # rows per grid step for large batches


def _round_up(x, m):
    return ((x + m - 1) // m) * m


# ------------------------------ Pallas kernel ------------------------------ #

def _fused_cae_kernel(x_ref,
                      t1h, t2h, t3h, t4h, t5h, t6h,
                      b1, b2, b3, b4, b5, b6,
                      enc_ref, dec_ref,
                      t1v, t2v, t3v, t4v, t5v, t6v, sem):
    """Entire autoencoder forward on VMEM-resident activations.

    Layer l:  y = act( h_bf16 @ T_l(bf16) + bias_l )   (f32 accumulation)

    T matrices live in HBM; all six DMAs are issued at kernel entry and each is
    waited on right before its matmul, overlapping weight transfer with the
    preceding layers' compute.  Weights are fetched only on the first grid step
    and stay resident in scratch for the remaining row tiles.
    """
    t_hbm = (t1h, t2h, t3h, t4h, t5h, t6h)
    t_vmem = (t1v, t2v, t3v, t4v, t5v, t6v)
    bias = (b1, b2, b3, b4, b5, b6)

    first = pl.program_id(0) == 0

    @pl.when(first)
    def _start_weight_dmas():
        for i in range(6):
            pltpu.make_async_copy(t_hbm[i], t_vmem[i], sem.at[i]).start()

    def layer(idx, h):
        @pl.when(first)
        def _wait_weight():
            pltpu.make_async_copy(t_hbm[idx], t_vmem[idx], sem.at[idx]).wait()
        return (jnp.dot(h, t_vmem[idx][...], preferred_element_type=jnp.float32)
                + bias[idx][...])

    h = x_ref[...].astype(jnp.bfloat16)

    # ---- encoder: (Conv(4,2,1) + BN + LeakyReLU(0.2)) x 3 ----
    y = None
    for i in range(3):
        y = layer(i, h)
        y = jnp.where(y >= 0.0, y, LEAKY_SLOPE * y)
        h = y.astype(jnp.bfloat16)
    enc_ref[...] = y                                     # encoded (flat-NCHW, f32)

    # ---- decoder: (ConvT(4,2,1) + BN + ReLU) x 2 ----
    for i in range(3, 5):
        y = layer(i, h)
        y = jnp.maximum(y, 0.0)
        h = y.astype(jnp.bfloat16)

    # ---- final ConvT(4,2,1) + Sigmoid ----
    dec_ref[...] = jax.nn.sigmoid(layer(5, h))           # decoded (flat-NCHW, f32)


def fused_cae_call(x_flat, mats, biases):
    """One pallas_call for the full network."""
    n, in_cols = x_flat.shape
    enc_cols = mats[2].shape[1]
    dec_cols = mats[5].shape[1]

    if n <= MAX_ROW_TILE:
        tile, n_pad = n, n            # full-array row block: exempt from (8,128) rule
    else:
        tile = MAX_ROW_TILE
        n_pad = _round_up(n, tile)
        if n_pad != n:
            x_flat = jnp.pad(x_flat, ((0, n_pad - n), (0, 0)))
    grid = (n_pad // tile,)

    operands = [x_flat, *mats, *biases]
    in_specs = ([pl.BlockSpec((tile, in_cols), lambda i: (i, 0))]
                + [pl.BlockSpec(memory_space=pl.ANY)] * 6            # weights: HBM, manual DMA
                + [pl.BlockSpec(b.shape, lambda i: (0, 0)) for b in biases])
    out_shape = (jax.ShapeDtypeStruct((n_pad, enc_cols), jnp.float32),
                 jax.ShapeDtypeStruct((n_pad, dec_cols), jnp.float32))
    out_specs = (pl.BlockSpec((tile, enc_cols), lambda i: (i, 0)),
                 pl.BlockSpec((tile, dec_cols), lambda i: (i, 0)))
    scratch_shapes = ([pltpu.VMEM(t.shape, jnp.bfloat16) for t in mats]
                      + [pltpu.SemaphoreType.DMA((6,))])

    return pl.pallas_call(
        _fused_cae_kernel,
        out_shape=out_shape,
        grid=grid,
        in_specs=in_specs,
        out_specs=out_specs,
        scratch_shapes=scratch_shapes,
        # ~5.5 MB single-buffered bf16 weight scratch + small pipelined x/enc/dec
        # tiles -> comfortably inside v5e/v6e/v7x VMEM.
        compiler_params=pltpu.CompilerParams(
            dimension_semantics=("arbitrary",),
            vmem_limit_bytes=48 * 1024 * 1024),
    )(*operands)


# --------------------- one-time parameter preparation ---------------------- #

def _fold_bn(p):
    """Fold conv bias + eval-mode BatchNorm into per-channel scale / bias."""
    if "gamma" in p:
        s = p["gamma"] / jnp.sqrt(p["rvar"] + EPS)
        b = (p["b"] - p["rmean"]) * s + p["beta"]
        return s, b
    return jnp.ones_like(p["b"]), p["b"]


def _layer_operator(conv_apply, in_dims):
    """Exact linear operator (flat in -> flat out) of one conv layer."""
    k = in_dims[0] * in_dims[1] * in_dims[2]
    basis = jnp.eye(k, dtype=jnp.float32).reshape((k,) + tuple(in_dims))
    out = conv_apply(basis)
    return out.reshape(k, -1), out.shape[1:]


def prepare_fused_params(params, in_hw=(16, 16), in_c=3):
    """Precompute per-layer bf16 operator matrices (BN scale folded into columns,
    NCHW<->NHWC layout glue folded into row/column order) and f32 bias rows.
    Runs once, outside the per-forward hot path."""
    h, w, c = in_hw[0], in_hw[1], in_c
    mats, biases = [], []
    enc_shape = dec_shape = None

    layer_params = list(params["enc"]) + list(params["dec"])
    n_enc = len(params["enc"])
    n_total = len(layer_params)

    def in_layout_of(li):   # layer 0 and the first decoder layer take flat-NCHW
        return "NCHW" if li in (0, n_enc) else "NHWC"

    def out_layout_of(li):  # encoder output and final output are emitted flat-NCHW
        return "NCHW" if li in (n_enc - 1, n_total - 1) else "NHWC"

    for li, p in enumerate(layer_params):
        in_layout, out_layout = in_layout_of(li), out_layout_of(li)
        dn = (in_layout, "OIHW", out_layout)
        if li < n_enc:                                   # Conv2d(k=4, s=2, p=1)
            conv = functools.partial(
                lax.conv_general_dilated, rhs=p["w"], window_strides=(2, 2),
                padding=((1, 1), (1, 1)), dimension_numbers=dn,
                precision=lax.Precision.HIGHEST)
        else:                                            # ConvTranspose2d(k=4, s=2, p=1)
            wc = jnp.transpose(p["w"], (1, 0, 2, 3))[:, :, ::-1, ::-1]
            conv = functools.partial(
                lax.conv_general_dilated, rhs=wc, window_strides=(1, 1),
                padding=((2, 2), (2, 2)), lhs_dilation=(2, 2),
                dimension_numbers=dn, precision=lax.Precision.HIGHEST)

        in_dims = (c, h, w) if in_layout == "NCHW" else (h, w, c)
        T, out_dims = _layer_operator(conv, in_dims)

        scale, bias = _fold_bn(p)
        if out_layout == "NHWC":
            ho, wo, co = out_dims
            col_scale = jnp.tile(scale, ho * wo)        # channel fastest
            col_bias = jnp.tile(bias, ho * wo)
        else:
            co, ho, wo = out_dims
            col_scale = jnp.repeat(scale, ho * wo)      # channel slowest
            col_bias = jnp.repeat(bias, ho * wo)

        mats.append((T * col_scale[None, :]).astype(jnp.bfloat16))
        biases.append(col_bias.reshape(1, -1).astype(jnp.float32))

        if li == n_enc - 1:
            enc_shape = (co, ho, wo)
        if li == n_total - 1:
            dec_shape = (co, ho, wo)
        h, w, c = ho, wo, co

    return dict(mats=tuple(mats), biases=tuple(biases),
                enc_shape=enc_shape, dec_shape=dec_shape)


# ------------------------------ parameters --------------------------------- #

def init_params(key):
    enc_ch = [16, 32, 64]
    dec_ch = [32, 16, 3]        # list(reversed(enc_ch[:-1])) + [3]
    params = {"enc": [], "dec": []}
    keys = jax.random.split(key, 64)
    ki = 0
    in_c = 3
    for oc in enc_ch:
        w = 0.05 * jax.random.normal(keys[ki], (oc, in_c, 4, 4), jnp.float32); ki += 1
        b = 0.05 * jax.random.normal(keys[ki], (oc,), jnp.float32); ki += 1
        gamma = 1.0 + 0.1 * jax.random.normal(keys[ki], (oc,), jnp.float32); ki += 1
        beta = 0.1 * jax.random.normal(keys[ki], (oc,), jnp.float32); ki += 1
        rmean = 0.1 * jax.random.normal(keys[ki], (oc,), jnp.float32); ki += 1
        rvar = jnp.abs(1.0 + 0.1 * jax.random.normal(keys[ki], (oc,), jnp.float32)); ki += 1
        params["enc"].append(dict(w=w, b=b, gamma=gamma, beta=beta, rmean=rmean, rvar=rvar))
        in_c = oc
    for i, oc in enumerate(dec_ch):
        w = 0.05 * jax.random.normal(keys[ki], (in_c, oc, 4, 4), jnp.float32); ki += 1
        b = 0.05 * jax.random.normal(keys[ki], (oc,), jnp.float32); ki += 1
        if i < len(dec_ch) - 1:
            gamma = 1.0 + 0.1 * jax.random.normal(keys[ki], (oc,), jnp.float32); ki += 1
            beta = 0.1 * jax.random.normal(keys[ki], (oc,), jnp.float32); ki += 1
            rmean = 0.1 * jax.random.normal(keys[ki], (oc,), jnp.float32); ki += 1
            rvar = jnp.abs(1.0 + 0.1 * jax.random.normal(keys[ki], (oc,), jnp.float32)); ki += 1
            params["dec"].append(dict(w=w, b=b, gamma=gamma, beta=beta, rmean=rmean, rvar=rvar))
        else:
            params["dec"].append(dict(w=w, b=b))
        in_c = oc
    return params


# -------------------------------- forward ----------------------------------- #

def conv_autoencoder_forward(x_nchw, mats, biases, enc_shape, dec_shape):
    n = x_nchw.shape[0]
    # T1's rows are ordered for flat-NCHW input -> no transpose, no pad.
    x_flat = x_nchw.reshape(n, -1).astype(jnp.float32)
    enc_flat, dec_flat = fused_cae_call(x_flat, mats, biases)
    if enc_flat.shape[0] != n:                          # only for padded large batches
        enc_flat, dec_flat = enc_flat[:n], dec_flat[:n]
    # T3 / T6 columns are ordered flat-NCHW -> plain reshapes, no transposes.
    encoded = enc_flat.reshape((n,) + tuple(enc_shape))
    decoded = dec_flat.reshape((n,) + tuple(dec_shape))
    # mirrors PyTorch: return ([encoded], [decoded], x)
    return [encoded], [decoded], x_nchw


# --------------------------- pure-JAX reference ----------------------------- #

def _ref_forward(x, params):
    dn = ("NCHW", "OIHW", "NCHW")

    def act_apply(h, p, act):
        s, b = _fold_bn(p)
        h = h * s[None, :, None, None] + b[None, :, None, None]
        if act == "leaky_relu":
            return jnp.where(h >= 0.0, h, LEAKY_SLOPE * h)
        if act == "relu":
            return jnp.maximum(h, 0.0)
        return jax.nn.sigmoid(h)

    h = x
    for p in params["enc"]:
        h = lax.conv_general_dilated(h, p["w"], (2, 2), ((1, 1), (1, 1)),
                                     dimension_numbers=dn)
        h = act_apply(h, p, "leaky_relu")
    enc = h
    n_dec = len(params["dec"])
    for i, p in enumerate(params["dec"]):
        wc = jnp.transpose(p["w"], (1, 0, 2, 3))[:, :, ::-1, ::-1]
        h = lax.conv_general_dilated(h, wc, (1, 1), ((2, 2), (2, 2)),
                                     lhs_dilation=(2, 2), dimension_numbers=dn)
        h = act_apply(h, p, "relu" if i < n_dec - 1 else "sigmoid")
    return enc, h


# ---------------------------------- main ------------------------------------ #

if __name__ == "__main__":
    key = jax.random.PRNGKey(0)
    pkey, xkey = jax.random.split(key)
    params = init_params(pkey)
    x = jax.random.uniform(xkey, (2, 3, 16, 16), jnp.float32)

    # One-time parameter prep (outside the per-forward hot path).
    fused = prepare_fused_params(params)
    fwd = jax.jit(functools.partial(conv_autoencoder_forward,
                                    enc_shape=fused["enc_shape"],
                                    dec_shape=fused["dec_shape"]))

    enc_l, dec_l, x_out = fwd(x, fused["mats"], fused["biases"])
    jax.block_until_ready((enc_l, dec_l, x_out))

    assert enc_l[0].shape == (2, 64, 2, 2)
    assert dec_l[0].shape == (2, 3, 16, 16)
    assert x_out.shape == x.shape

    enc_ref, dec_ref = _ref_forward(x, params)
    # bf16 MXU operands with f32 accumulation -> looser tolerance than pure f32.
    assert jnp.allclose(enc_l[0], enc_ref, atol=1e-2, rtol=1e-2)
    assert jnp.allclose(dec_l[0], dec_ref, atol=1e-2, rtol=1e-2)

    print("KERNEL_OK")
</pallas_src>

<mosaic_0001>
module attributes {stable_mosaic.version = 11 : i64} {
  func.func @_fused_cae_kernel(%arg0: i32, %arg1: memref<2x768xf32, #tpu.memory_space<vmem>>, %arg2: memref<768x1024xbf16, #tpu.memory_space<any>>, %arg3: memref<1024x512xbf16, #tpu.memory_space<any>>, %arg4: memref<512x256xbf16, #tpu.memory_space<any>>, %arg5: memref<256x512xbf16, #tpu.memory_space<any>>, %arg6: memref<512x1024xbf16, #tpu.memory_space<any>>, %arg7: memref<1024x768xbf16, #tpu.memory_space<any>>, %arg8: memref<1x1024xf32, #tpu.memory_space<vmem>>, %arg9: memref<1x512xf32, #tpu.memory_space<vmem>>, %arg10: memref<1x256xf32, #tpu.memory_space<vmem>>, %arg11: memref<1x512xf32, #tpu.memory_space<vmem>>, %arg12: memref<1x1024xf32, #tpu.memory_space<vmem>>, %arg13: memref<1x768xf32, #tpu.memory_space<vmem>>, %arg14: memref<2x256xf32, #tpu.memory_space<vmem>>, %arg15: memref<2x768xf32, #tpu.memory_space<vmem>>, %arg16: memref<768x1024xbf16, #tpu.memory_space<vmem>>, %arg17: memref<1024x512xbf16, #tpu.memory_space<vmem>>, %arg18: memref<512x256xbf16, #tpu.memory_space<vmem>>, %arg19: memref<256x512xbf16, #tpu.memory_space<vmem>>, %arg20: memref<512x1024xbf16, #tpu.memory_space<vmem>>, %arg21: memref<1024x768xbf16, #tpu.memory_space<vmem>>, %arg22: memref<6x!tpu.dma_semaphore, #tpu.memory_space<semaphore_mem>>) attributes {dimension_semantics = [#tpu.dimension_semantics<arbitrary>], iteration_bounds = array<i64: 1>, scalar_prefetch = 0 : i64, scratch_operands = 7 : i64, tpu.core_type = #tpu.core_type<tc>, window_params = [{transform_indices = @transform_0, window_bounds = array<i64: 2, 768>}, {}, {}, {}, {}, {}, {}, {pipeline_mode = #tpu.pipeline_mode<synchronous>, transform_indices = @transform_7, window_bounds = array<i64: 1, 1024>}, {pipeline_mode = #tpu.pipeline_mode<synchronous>, transform_indices = @transform_8, window_bounds = array<i64: 1, 512>}, {pipeline_mode = #tpu.pipeline_mode<synchronous>, transform_indices = @transform_9, window_bounds = array<i64: 1, 256>}, {pipeline_mode = #tpu.pipeline_mode<synchronous>, transform_indices = @transform_10, window_bounds = array<i64: 1, 512>}, {pipeline_mode = #tpu.pipeline_mode<synchronous>, transform_indices = @transform_11, window_bounds = array<i64: 1, 1024>}, {pipeline_mode = #tpu.pipeline_mode<synchronous>, transform_indices = @transform_12, window_bounds = array<i64: 1, 768>}, {transform_indices = @transform_13, window_bounds = array<i64: 2, 256>}, {transform_indices = @transform_14, window_bounds = array<i64: 2, 768>}]} {
    %c0_i32 = arith.constant 0 : i32
    %0 = arith.cmpi eq, %arg0, %c0_i32 : i32
    %1 = arith.extui %0 : i1 to i32
    %c0_i32_0 = arith.constant 0 : i32
    %2 = arith.cmpi ne, %1, %c0_i32_0 : i32
    scf.if %2 {
      %c0_i32_50 = arith.constant 0 : i32
      %78 = tpu.memref_slice %arg22[%c0_i32_50] : memref<6x!tpu.dma_semaphore, #tpu.memory_space<semaphore_mem>> -> memref<1x!tpu.dma_semaphore, #tpu.memory_space<semaphore_mem>>
      %79 = tpu.memref_squeeze %78 : memref<1x!tpu.dma_semaphore, #tpu.memory_space<semaphore_mem>> -> memref<!tpu.dma_semaphore, #tpu.memory_space<semaphore_mem>>
      tpu.enqueue_dma source(%arg2 : memref<768x1024xbf16, #tpu.memory_space<any>>) target(%arg16 : memref<768x1024xbf16, #tpu.memory_space<vmem>>) target_semaphore(%79 : memref<!tpu.dma_semaphore, #tpu.memory_space<semaphore_mem>>)
      %c1_i32 = arith.constant 1 : i32
      %80 = tpu.memref_slice %arg22[%c1_i32] : memref<6x!tpu.dma_semaphore, #tpu.memory_space<semaphore_mem>> -> memref<1x!tpu.dma_semaphore, #tpu.memory_space<semaphore_mem>>
      %81 = tpu.memref_squeeze %80 : memref<1x!tpu.dma_semaphore, #tpu.memory_space<semaphore_mem>> -> memref<!tpu.dma_semaphore, #tpu.memory_space<semaphore_mem>>
      tpu.enqueue_dma source(%arg3 : memref<1024x512xbf16, #tpu.memory_space<any>>) target(%arg17 : memref<1024x512xbf16, #tpu.memory_space<vmem>>) target_semaphore(%81 : memref<!tpu.dma_semaphore, #tpu.memory_space<semaphore_mem>>)
      %c2_i32 = arith.constant 2 : i32
      %82 = tpu.memref_slice %arg22[%c2_i32] : memref<6x!tpu.dma_semaphore, #tpu.memory_space<semaphore_mem>> -> memref<1x!tpu.dma_semaphore, #tpu.memory_space<semaphore_mem>>
      %83 = tpu.memref_squeeze %82 : memref<1x!tpu.dma_semaphore, #tpu.memory_space<semaphore_mem>> -> memref<!tpu.dma_semaphore, #tpu.memory_space<semaphore_mem>>
      tpu.enqueue_dma source(%arg4 : memref<512x256xbf16, #tpu.memory_space<any>>) target(%arg18 : memref<512x256xbf16, #tpu.memory_space<vmem>>) target_semaphore(%83 : memref<!tpu.dma_semaphore, #tpu.memory_space<semaphore_mem>>)
      %c3_i32 = arith.constant 3 : i32
      %84 = tpu.memref_slice %arg22[%c3_i32] : memref<6x!tpu.dma_semaphore, #tpu.memory_space<semaphore_mem>> -> memref<1x!tpu.dma_semaphore, #tpu.memory_space<semaphore_mem>>
      %85 = tpu.memref_squeeze %84 : memref<1x!tpu.dma_semaphore, #tpu.memory_space<semaphore_mem>> -> memref<!tpu.dma_semaphore, #tpu.memory_space<semaphore_mem>>
      tpu.enqueue_dma source(%arg5 : memref<256x512xbf16, #tpu.memory_space<any>>) target(%arg19 : memref<256x512xbf16, #tpu.memory_space<vmem>>) target_semaphore(%85 : memref<!tpu.dma_semaphore, #tpu.memory_space<semaphore_mem>>)
      %c4_i32 = arith.constant 4 : i32
      %86 = tpu.memref_slice %arg22[%c4_i32] : memref<6x!tpu.dma_semaphore, #tpu.memory_space<semaphore_mem>> -> memref<1x!tpu.dma_semaphore, #tpu.memory_space<semaphore_mem>>
      %87 = tpu.memref_squeeze %86 : memref<1x!tpu.dma_semaphore, #tpu.memory_space<semaphore_mem>> -> memref<!tpu.dma_semaphore, #tpu.memory_space<semaphore_mem>>
      tpu.enqueue_dma source(%arg6 : memref<512x1024xbf16, #tpu.memory_space<any>>) target(%arg20 : memref<512x1024xbf16, #tpu.memory_space<vmem>>) target_semaphore(%87 : memref<!tpu.dma_semaphore, #tpu.memory_space<semaphore_mem>>)
      %c5_i32 = arith.constant 5 : i32
      %88 = tpu.memref_slice %arg22[%c5_i32] : memref<6x!tpu.dma_semaphore, #tpu.memory_space<semaphore_mem>> -> memref<1x!tpu.dma_semaphore, #tpu.memory_space<semaphore_mem>>
      %89 = tpu.memref_squeeze %88 : memref<1x!tpu.dma_semaphore, #tpu.memory_space<semaphore_mem>> -> memref<!tpu.dma_semaphore, #tpu.memory_space<semaphore_mem>>
      tpu.enqueue_dma source(%arg7 : memref<1024x768xbf16, #tpu.memory_space<any>>) target(%arg21 : memref<1024x768xbf16, #tpu.memory_space<vmem>>) target_semaphore(%89 : memref<!tpu.dma_semaphore, #tpu.memory_space<semaphore_mem>>)
    } else {
    }
    %c0 = arith.constant 0 : index
    %c0_1 = arith.constant 0 : index
    %3 = vector.load %arg1[%c0, %c0_1] : memref<2x768xf32, #tpu.memory_space<vmem>>, vector<2x768xf32>
    %4 = arith.truncf %3 : vector<2x768xf32> to vector<2x768xbf16>
    %5 = arith.extui %0 : i1 to i32
    %c0_i32_2 = arith.constant 0 : i32
    %6 = arith.cmpi ne, %5, %c0_i32_2 : i32
    scf.if %6 {
      %c0_i32_50 = arith.constant 0 : i32
      %78 = tpu.memref_slice %arg22[%c0_i32_50] : memref<6x!tpu.dma_semaphore, #tpu.memory_space<semaphore_mem>> -> memref<1x!tpu.dma_semaphore, #tpu.memory_space<semaphore_mem>>
      %79 = tpu.memref_squeeze %78 : memref<1x!tpu.dma_semaphore, #tpu.memory_space<semaphore_mem>> -> memref<!tpu.dma_semaphore, #tpu.memory_space<semaphore_mem>>
      tpu.wait_dma2 semaphore(%79 : memref<!tpu.dma_semaphore, #tpu.memory_space<semaphore_mem>>) src(%arg2 : memref<768x1024xbf16, #tpu.memory_space<any>>) dst(%arg16 : memref<768x1024xbf16, #tpu.memory_space<vmem>>)
    } else {
    }
    %c0_3 = arith.constant 0 : index
    %c0_4 = arith.constant 0 : index
    %7 = vector.load %arg16[%c0_3, %c0_4] : memref<768x1024xbf16, #tpu.memory_space<vmem>>, vector<768x1024xbf16>
    %cst = arith.constant dense<0.000000e+00> : vector<2x1024xf32>
    %8 = tpu.matmul %4, %7, %cst {dimension_numbers = #tpu.dot_dimension_numbers<[1], [0], [0], [1], [0, 0, 1, 1], [], []>} : vector<2x768xbf16>, vector<768x1024xbf16>, vector<2x1024xf32> -> vector<2x1024xf32>
    %c0_5 = arith.constant 0 : index
    %c0_6 = arith.constant 0 : index
    %9 = vector.load %arg8[%c0_5, %c0_6] : memref<1x1024xf32, #tpu.memory_space<vmem>>, vector<1x1024xf32>
    %10 = vector.broadcast %9 : vector<1x1024xf32> to vector<2x1024xf32>
    %11 = arith.addf %8, %10 : vector<2x1024xf32>
    %cst_7 = arith.constant 0.000000e+00 : f32
    %12 = vector.broadcast %cst_7 : f32 to vector<2x1024xf32>
    %13 = arith.cmpf oge, %11, %12 : vector<2x1024xf32>
    %cst_8 = arith.constant 2.000000e-01 : f32
    %14 = vector.broadcast %cst_8 : f32 to vector<2x1024xf32>
    %15 = arith.mulf %14, %11 : vector<2x1024xf32>
    %16 = arith.select %13, %11, %15 : vector<2x1024xi1>, vector<2x1024xf32>
    %17 = arith.truncf %16 : vector<2x1024xf32> to vector<2x1024xbf16>
    %18 = arith.extui %0 : i1 to i32
    %c0_i32_9 = arith.constant 0 : i32
    %19 = arith.cmpi ne, %18, %c0_i32_9 : i32
    scf.if %19 {
      %c1_i32 = arith.constant 1 : i32
      %78 = tpu.memref_slice %arg22[%c1_i32] : memref<6x!tpu.dma_semaphore, #tpu.memory_space<semaphore_mem>> -> memref<1x!tpu.dma_semaphore, #tpu.memory_space<semaphore_mem>>
      %79 = tpu.memref_squeeze %78 : memref<1x!tpu.dma_semaphore, #tpu.memory_space<semaphore_mem>> -> memref<!tpu.dma_semaphore, #tpu.memory_space<semaphore_mem>>
      tpu.wait_dma2 semaphore(%79 : memref<!tpu.dma_semaphore, #tpu.memory_space<semaphore_mem>>) src(%arg3 : memref<1024x512xbf16, #tpu.memory_space<any>>) dst(%arg17 : memref<1024x512xbf16, #tpu.memory_space<vmem>>)
    } else {
    }
    %c0_10 = arith.constant 0 : index
    %c0_11 = arith.constant 0 : index
    %20 = vector.load %arg17[%c0_10, %c0_11] : memref<1024x512xbf16, #tpu.memory_space<vmem>>, vector<1024x512xbf16>
    %cst_12 = arith.constant dense<0.000000e+00> : vector<2x512xf32>
    %21 = tpu.matmul %17, %20, %cst_12 {dimension_numbers = #tpu.dot_dimension_numbers<[1], [0], [0], [1], [0, 0, 1, 1], [], []>} : vector<2x1024xbf16>, vector<1024x512xbf16>, vector<2x512xf32> -> vector<2x512xf32>
    %c0_13 = arith.constant 0 : index
    %c0_14 = arith.constant 0 : index
    %22 = vector.load %arg9[%c0_13, %c0_14] : memref<1x512xf32, #tpu.memory_space<vmem>>, vector<1x512xf32>
    %23 = vector.broadcast %22 : vector<1x512xf32> to vector<2x512xf32>
    %24 = arith.addf %21, %23 : vector<2x512xf32>
    %cst_15 = arith.constant 0.000000e+00 : f32
    %25 = vector.broadcast %cst_15 : f32 to vector<2x512xf32>
    %26 = arith.cmpf oge, %24, %25 : vector<2x512xf32>
    %cst_16 = arith.constant 2.000000e-01 : f32
    %27 = vector.broadcast %cst_16 : f32 to vector<2x512xf32>
    %28 = arith.mulf %27, %24 : vector<2x512xf32>
    %29 = arith.select %26, %24, %28 : vector<2x512xi1>, vector<2x512xf32>
    %30 = arith.truncf %29 : vector<2x512xf32> to vector<2x512xbf16>
    %31 = arith.extui %0 : i1 to i32
    %c0_i32_17 = arith.constant 0 : i32
    %32 = arith.cmpi ne, %31, %c0_i32_17 : i32
    scf.if %32 {
      %c2_i32 = arith.constant 2 : i32
      %78 = tpu.memref_slice %arg22[%c2_i32] : memref<6x!tpu.dma_semaphore, #tpu.memory_space<semaphore_mem>> -> memref<1x!tpu.dma_semaphore, #tpu.memory_space<semaphore_mem>>
      %79 = tpu.memref_squeeze %78 : memref<1x!tpu.dma_semaphore, #tpu.memory_space<semaphore_mem>> -> memref<!tpu.dma_semaphore, #tpu.memory_space<semaphore_mem>>
      tpu.wait_dma2 semaphore(%79 : memref<!tpu.dma_semaphore, #tpu.memory_space<semaphore_mem>>) src(%arg4 : memref<512x256xbf16, #tpu.memory_space<any>>) dst(%arg18 : memref<512x256xbf16, #tpu.memory_space<vmem>>)
    } else {
    }
    %c0_18 = arith.constant 0 : index
    %c0_19 = arith.constant 0 : index
    %33 = vector.load %arg18[%c0_18, %c0_19] : memref<512x256xbf16, #tpu.memory_space<vmem>>, vector<512x256xbf16>
    %cst_20 = arith.constant dense<0.000000e+00> : vector<2x256xf32>
    %34 = tpu.matmul %30, %33, %cst_20 {dimension_numbers = #tpu.dot_dimension_numbers<[1], [0], [0], [1], [0, 0, 1, 1], [], []>} : vector<2x512xbf16>, vector<512x256xbf16>, vector<2x256xf32> -> vector<2x256xf32>
    %c0_21 = arith.constant 0 : index
    %c0_22 = arith.constant 0 : index
    %35 = vector.load %arg10[%c0_21, %c0_22] : memref<1x256xf32, #tpu.memory_space<vmem>>, vector<1x256xf32>
    %36 = vector.broadcast %35 : vector<1x256xf32> to vector<2x256xf32>
    %37 = arith.addf %34, %36 : vector<2x256xf32>
    %cst_23 = arith.constant 0.000000e+00 : f32
    %38 = vector.broadcast %cst_23 : f32 to vector<2x256xf32>
    %39 = arith.cmpf oge, %37, %38 : vector<2x256xf32>
    %cst_24 = arith.constant 2.000000e-01 : f32
    %40 = vector.broadcast %cst_24 : f32 to vector<2x256xf32>
    %41 = arith.mulf %40, %37 : vector<2x256xf32>
    %42 = arith.select %39, %37, %41 : vector<2x256xi1>, vector<2x256xf32>
    %43 = arith.truncf %42 : vector<2x256xf32> to vector<2x256xbf16>
    %c0_25 = arith.constant 0 : index
    %c0_26 = arith.constant 0 : index
    %44 = vector.load %arg14[%c0_25, %c0_26] : memref<2x256xf32, #tpu.memory_space<vmem>>, vector<2x256xf32>
    tpu.vector_store %arg14[%c0_25, %c0_26], %42 {strides = array<i32>} : memref<2x256xf32, #tpu.memory_space<vmem>>, vector<2x256xf32>,
    %45 = arith.extui %0 : i1 to i32
    %c0_i32_27 = arith.constant 0 : i32
    %46 = arith.cmpi ne, %45, %c0_i32_27 : i32
    scf.if %46 {
      %c3_i32 = arith.constant 3 : i32
      %78 = tpu.memref_slice %arg22[%c3_i32] : memref<6x!tpu.dma_semaphore, #tpu.memory_space<semaphore_mem>> -> memref<1x!tpu.dma_semaphore, #tpu.memory_space<semaphore_mem>>
      %79 = tpu.memref_squeeze %78 : memref<1x!tpu.dma_semaphore, #tpu.memory_space<semaphore_mem>> -> memref<!tpu.dma_semaphore, #tpu.memory_space<semaphore_mem>>
      tpu.wait_dma2 semaphore(%79 : memref<!tpu.dma_semaphore, #tpu.memory_space<semaphore_mem>>) src(%arg5 : memref<256x512xbf16, #tpu.memory_space<any>>) dst(%arg19 : memref<256x512xbf16, #tpu.memory_space<vmem>>)
    } else {
    }
    %c0_28 = arith.constant 0 : index
    %c0_29 = arith.constant 0 : index
    %47 = vector.load %arg19[%c0_28, %c0_29] : memref<256x512xbf16, #tpu.memory_space<vmem>>, vector<256x512xbf16>
    %cst_30 = arith.constant dense<0.000000e+00> : vector<2x512xf32>
    %48 = tpu.matmul %43, %47, %cst_30 {dimension_numbers = #tpu.dot_dimension_numbers<[1], [0], [0], [1], [0, 0, 1, 1], [], []>} : vector<2x256xbf16>, vector<256x512xbf16>, vector<2x512xf32> -> vector<2x512xf32>
    %c0_31 = arith.constant 0 : index
    %c0_32 = arith.constant 0 : index
    %49 = vector.load %arg11[%c0_31, %c0_32] : memref<1x512xf32, #tpu.memory_space<vmem>>, vector<1x512xf32>
    %50 = vector.broadcast %49 : vector<1x512xf32> to vector<2x512xf32>
    %51 = arith.addf %48, %50 : vector<2x512xf32>
    %cst_33 = arith.constant 0.000000e+00 : f32
    %52 = vector.broadcast %cst_33 : f32 to vector<2x512xf32>
    %53 = arith.maximumf %51, %52 : vector<2x512xf32>
    %54 = arith.truncf %53 : vector<2x512xf32> to vector<2x512xbf16>
    %55 = arith.extui %0 : i1 to i32
    %c0_i32_34 = arith.constant 0 : i32
    %56 = arith.cmpi ne, %55, %c0_i32_34 : i32
    scf.if %56 {
      %c4_i32 = arith.constant 4 : i32
      %78 = tpu.memref_slice %arg22[%c4_i32] : memref<6x!tpu.dma_semaphore, #tpu.memory_space<semaphore_mem>> -> memref<1x!tpu.dma_semaphore, #tpu.memory_space<semaphore_mem>>
      %79 = tpu.memref_squeeze %78 : memref<1x!tpu.dma_semaphore, #tpu.memory_space<semaphore_mem>> -> memref<!tpu.dma_semaphore, #tpu.memory_space<semaphore_mem>>
      tpu.wait_dma2 semaphore(%79 : memref<!tpu.dma_semaphore, #tpu.memory_space<semaphore_mem>>) src(%arg6 : memref<512x1024xbf16, #tpu.memory_space<any>>) dst(%arg20 : memref<512x1024xbf16, #tpu.memory_space<vmem>>)
    } else {
    }
    %c0_35 = arith.constant 0 : index
    %c0_36 = arith.constant 0 : index
    %57 = vector.load %arg20[%c0_35, %c0_36] : memref<512x1024xbf16, #tpu.memory_space<vmem>>, vector<512x1024xbf16>
    %cst_37 = arith.constant dense<0.000000e+00> : vector<2x1024xf32>
    %58 = tpu.matmul %54, %57, %cst_37 {dimension_numbers = #tpu.dot_dimension_numbers<[1], [0], [0], [1], [0, 0, 1, 1], [], []>} : vector<2x512xbf16>, vector<512x1024xbf16>, vector<2x1024xf32> -> vector<2x1024xf32>
    %c0_38 = arith.constant 0 : index
    %c0_39 = arith.constant 0 : index
    %59 = vector.load %arg12[%c0_38, %c0_39] : memref<1x1024xf32, #tpu.memory_space<vmem>>, vector<1x1024xf32>
    %60 = vector.broadcast %59 : vector<1x1024xf32> to vector<2x1024xf32>
    %61 = arith.addf %58, %60 : vector<2x1024xf32>
    %cst_40 = arith.constant 0.000000e+00 : f32
    %62 = vector.broadcast %cst_40 : f32 to vector<2x1024xf32>
    %63 = arith.maximumf %61, %62 : vector<2x1024xf32>
    %64 = arith.truncf %63 : vector<2x1024xf32> to vector<2x1024xbf16>
    %65 = arith.extui %0 : i1 to i32
    %c0_i32_41 = arith.constant 0 : i32
    %66 = arith.cmpi ne, %65, %c0_i32_41 : i32
    scf.if %66 {
      %c5_i32 = arith.constant 5 : i32
      %78 = tpu.memref_slice %arg22[%c5_i32] : memref<6x!tpu.dma_semaphore, #tpu.memory_space<semaphore_mem>> -> memref<1x!tpu.dma_semaphore, #tpu.memory_space<semaphore_mem>>
      %79 = tpu.memref_squeeze %78 : memref<1x!tpu.dma_semaphore, #tpu.memory_space<semaphore_mem>> -> memref<!tpu.dma_semaphore, #tpu.memory_space<semaphore_mem>>
      tpu.wait_dma2 semaphore(%79 : memref<!tpu.dma_semaphore, #tpu.memory_space<semaphore_mem>>) src(%arg7 : memref<1024x768xbf16, #tpu.memory_space<any>>) dst(%arg21 : memref<1024x768xbf16, #tpu.memory_space<vmem>>)
    } else {
    }
    %c0_42 = arith.constant 0 : index
    %c0_43 = arith.constant 0 : index
    %67 = vector.load %arg21[%c0_42, %c0_43] : memref<1024x768xbf16, #tpu.memory_space<vmem>>, vector<1024x768xbf16>
    %cst_44 = arith.constant dense<0.000000e+00> : vector<2x768xf32>
    %68 = tpu.matmul %64, %67, %cst_44 {dimension_numbers = #tpu.dot_dimension_numbers<[1], [0], [0], [1], [0, 0, 1, 1], [], []>} : vector<2x1024xbf16>, vector<1024x768xbf16>, vector<2x768xf32> -> vector<2x768xf32>
    %c0_45 = arith.constant 0 : index
    %c0_46 = arith.constant 0 : index
    %69 = vector.load %arg13[%c0_45, %c0_46] : memref<1x768xf32, #tpu.memory_space<vmem>>, vector<1x768xf32>
    %70 = vector.broadcast %69 : vector<1x768xf32> to vector<2x768xf32>
    %71 = arith.addf %68, %70 : vector<2x768xf32>
    %72 = arith.negf %71 : vector<2x768xf32>
    %73 = math.exp %72 : vector<2x768xf32>
    %cst_47 = arith.constant 1.000000e+00 : f32
    %74 = vector.broadcast %cst_47 : f32 to vector<2x768xf32>
    %75 = arith.addf %74, %73 : vector<2x768xf32>
    %76 = arith.divf %74, %75 : vector<2x768xf32>
    %c0_48 = arith.constant 0 : index
    %c0_49 = arith.constant 0 : index
    %77 = vector.load %arg15[%c0_48, %c0_49] : memref<2x768xf32, #tpu.memory_space<vmem>>, vector<2x768xf32>
    tpu.vector_store %arg15[%c0_48, %c0_49], %76 {strides = array<i32>} : memref<2x768xf32, #tpu.memory_space<vmem>>, vector<2x768xf32>,
    return
  }
  func.func @transform_0(%arg0: i32) -> (i32, i32) {
    %c0_i32 = arith.constant 0 : i32
    %c0_i32_0 = arith.constant 0 : i32
    return %arg0, %c0_i32 : i32, i32
  }
  func.func @transform_7(%arg0: i32) -> (i32, i32) {
    %c0_i32 = arith.constant 0 : i32
    %c0_i32_0 = arith.constant 0 : i32
    %c0_i32_1 = arith.constant 0 : i32
    return %c0_i32, %c0_i32_0 : i32, i32
  }
  func.func @transform_8(%arg0: i32) -> (i32, i32) {
    %c0_i32 = arith.constant 0 : i32
    %c0_i32_0 = arith.constant 0 : i32
    %c0_i32_1 = arith.constant 0 : i32
    return %c0_i32, %c0_i32_0 : i32, i32
  }
  func.func @transform_9(%arg0: i32) -> (i32, i32) {
    %c0_i32 = arith.constant 0 : i32
    %c0_i32_0 = arith.constant 0 : i32
    %c0_i32_1 = arith.constant 0 : i32
    return %c0_i32, %c0_i32_0 : i32, i32
  }
  func.func @transform_10(%arg0: i32) -> (i32, i32) {
    %c0_i32 = arith.constant 0 : i32
    %c0_i32_0 = arith.constant 0 : i32
    %c0_i32_1 = arith.constant 0 : i32
    return %c0_i32, %c0_i32_0 : i32, i32
  }
  func.func @transform_11(%arg0: i32) -> (i32, i32) {
    %c0_i32 = arith.constant 0 : i32
    %c0_i32_0 = arith.constant 0 : i32
    %c0_i32_1 = arith.constant 0 : i32
    return %c0_i32, %c0_i32_0 : i32, i32
  }
  func.func @transform_12(%arg0: i32) -> (i32, i32) {
    %c0_i32 = arith.constant 0 : i32
    %c0_i32_0 = arith.constant 0 : i32
    %c0_i32_1 = arith.constant 0 : i32
    return %c0_i32, %c0_i32_0 : i32, i32
  }
  func.func @transform_13(%arg0: i32) -> (i32, i32) {
    %c0_i32 = arith.constant 0 : i32
    %c0_i32_0 = arith.constant 0 : i32
    return %arg0, %c0_i32 : i32, i32
  }
  func.func @transform_14(%arg0: i32) -> (i32, i32) {
    %c0_i32 = arith.constant 0 : i32
    %c0_i32_0 = arith.constant 0 : i32
    return %arg0, %c0_i32 : i32, i32
  }
}

</mosaic_0001>

<llo_original>
// kernel: conv_autoencoder_forward.1
$region0: #{conv_autoencoder_forward.1}
  #allocation0 [shape = 'u32[]', space=smem, size = 0x4, offset = 0x4, fixed_abs, tag = 'smem constant byte address 0x4 - core index']
  #allocation1 [shape = 'u32[144,128]{1,0:T(1,128)}', space=vmem, size = 0x12000, scoped, tag = 'internal scratch']
  #allocation2 [shape = 'bf16[768,1024]{1,0:T(16,128)(2,1)}', space=vmem, size = 0x180000, scoped, tag = 'scratch operand']
  #allocation3 [shape = 'bf16[1024,512]{1,0:T(16,128)(2,1)}', space=vmem, size = 0x100000, scoped, tag = 'scratch operand']
  #allocation4 [shape = 'bf16[512,256]{1,0:T(16,128)(2,1)}', space=vmem, size = 0x40000, scoped, tag = 'scratch operand']
  #allocation5 [shape = 'bf16[256,512]{1,0:T(16,128)(2,1)}', space=vmem, size = 0x40000, scoped, tag = 'scratch operand']
  #allocation6 [shape = 'bf16[512,1024]{1,0:T(16,128)(2,1)}', space=vmem, size = 0x100000, scoped, tag = 'scratch operand']
  #allocation7 [shape = 'bf16[1024,768]{1,0:T(16,128)(2,1)}', space=vmem, size = 0x180000, scoped, tag = 'scratch operand']
  #allocation8 [shape = 's32[6]{0}', space=sflag, size = 0x18, scoped, tag = 'scratch operand']
  #allocation19 [shape = 's32[]', space=sflag, size = 0x4, offset = 0, fixed_abs, tag = 'sflag constant byte address 0x0 - dummy sync flag']
  #allocation21 [shape = 's32[]', space=sflag, size = 0x4, offset = 0, fixed_abs, tag = 'sflag constant byte address 0x0 - dummy sync flag']
  #allocation23 [shape = 's32[]', space=sflag, size = 0x4, offset = 0, fixed_abs, tag = 'sflag constant byte address 0x0 - dummy sync flag']
  #allocation25 [shape = 's32[]', space=sflag, size = 0x4, offset = 0, fixed_abs, tag = 'sflag constant byte address 0x0 - dummy sync flag']
  #allocation27 [shape = 's32[]', space=sflag, size = 0x4, offset = 0, fixed_abs, tag = 'sflag constant byte address 0x0 - dummy sync flag']
  #allocation29 [shape = 's32[]', space=sflag, size = 0x4, offset = 0, fixed_abs, tag = 'sflag constant byte address 0x0 - dummy sync flag']
  %s0 = inlined_call_operand.vmem [shape: f32[2,768], index: 0, kind: input, shape index: {}]
  %s1 = inlined_call_operand.hbm [shape: bf16[768,1024], index: 1, kind: input, shape index: {}]
  %s2 = inlined_call_operand.hbm [shape: bf16[1024,512], index: 2, kind: input, shape index: {}]
  %s3 = inlined_call_operand.hbm [shape: bf16[512,256], index: 3, kind: input, shape index: {}]
  %s4 = inlined_call_operand.hbm [shape: bf16[256,512], index: 4, kind: input, shape index: {}]
  %s5 = inlined_call_operand.hbm [shape: bf16[512,1024], index: 5, kind: input, shape index: {}]
  %s6 = inlined_call_operand.hbm [shape: bf16[1024,768], index: 6, kind: input, shape index: {}]
  %s7 = inlined_call_operand.hbm [shape: f32[1,1024], index: 7, kind: input, shape index: {}]
  %s8 = inlined_call_operand.hbm [shape: f32[1,512], index: 8, kind: input, shape index: {}]
  %s9 = inlined_call_operand.hbm [shape: f32[1,256], index: 9, kind: input, shape index: {}]
  %s10 = inlined_call_operand.hbm [shape: f32[1,512], index: 10, kind: input, shape index: {}]
  %s11 = inlined_call_operand.hbm [shape: f32[1,1024], index: 11, kind: input, shape index: {}]
  %s12 = inlined_call_operand.hbm [shape: f32[1,768], index: 12, kind: input, shape index: {}]
  %s13 = inlined_call_operand.vmem [shape: f32[2,256], index: 13, kind: output, shape index: {0}]
  %s14 = inlined_call_operand.vmem [shape: f32[2,768], index: 14, kind: output, shape index: {1}]
  %15 = xla_tuple %s13, %s14
  %s16 = sld [smem:[#allocation0]]
  $region98: #{conv_autoencoder_forward.1} parent=0
    _
  %s18 = ssub.s32 1, %s16
  %s19 = scalar_select 0, %s18, %s16
  $region1: #{conv_autoencoder_forward.1} parent=0
    #allocation9 [shape = 'u8[4096]{0}', space=vmem, size = 0x1000, scoped, tag = 'input window, operand 7, single buffered']
    #allocation10 [shape = 's32[1]{0}', space=sflag, size = 0x4, scoped, tag = 'scoped memory for conv_autoencoder_forward.1']
    #allocation11 [shape = 'u8[2048]{0}', space=vmem, size = 0x800, scoped, tag = 'input window, operand 8, single buffered']
    #allocation12 [shape = 's32[1]{0}', space=sflag, size = 0x4, scoped, tag = 'scoped memory for conv_autoencoder_forward.1']
    #allocation13 [shape = 'u8[1024]{0}', space=vmem, size = 0x400, scoped, tag = 'input window, operand 9, single buffered']
    #allocation14 [shape = 'u8[2048]{0}', space=vmem, size = 0x800, scoped, tag = 'input window, operand 10, single buffered']
    #allocation15 [shape = 's32[1]{0}', space=sflag, size = 0x4, scoped, tag = 'scoped memory for conv_autoencoder_forward.1']
    #allocation16 [shape = 'u8[4096]{0}', space=vmem, size = 0x1000, scoped, tag = 'input window, operand 11, single buffered']
    #allocation17 [shape = 'u8[3072]{0}', space=vmem, size = 0xc00, scoped, tag = 'input window, operand 12, single buffered']
    #allocation18 [shape = 's32[1]{0}', space=sflag, size = 0x4, scoped, tag = 'scoped memory for conv_autoencoder_forward.1']
    %20 = vsyncpa [#allocation10], 0
    %21 = vsyncpa [#allocation12], 0
    %22 = vsyncpa [#allocation15], 0
    %23 = vsyncpa [#allocation18], 0
    // Predicated region
    $region2: #{conv_autoencoder_forward.1} parent=1 // pred_check
      _
    $region3: #{conv_autoencoder_forward.1} parent=1 // pred_check_branch
      %25 = sbr.rel (0) target = $region5
    $region4: #{conv_autoencoder_forward.1} parent=1 // pred_region
      _
    $region5: #{conv_autoencoder_forward.1} parent=1 // pred_fallthru
      _
    // Predicated region
    $region6: #{conv_autoencoder_forward.1} parent=1 // pred_check
      _
    $region7: #{conv_autoencoder_forward.1} parent=1 // pred_check_branch
      %27 = sbr.rel (0) target = $region9
    $region8: #{conv_autoencoder_forward.1} parent=1 // pred_region
      %s29 = ssub.s32 128, 128
      %30 = vsyncadd [#allocation10], %s29
      %s32 = sshll.u32 [#allocation9], 4
      %s33 = int_to_ptr.vmem [resolvable:$true] %s32
      %35 = dma.hbm_to_vmem [thread:$0]  %s7, 128, %s33, [#allocation10]
    $region9: #{conv_autoencoder_forward.1} parent=1 // pred_fallthru
      _
    // Predicated region
    $region10: #{conv_autoencoder_forward.1} parent=1 // pred_check
      _
    $region11: #{conv_autoencoder_forward.1} parent=1 // pred_check_branch
      %37 = sbr.rel (0) target = $region13
    $region12: #{conv_autoencoder_forward.1} parent=1 // pred_region
      %s39 = ssub.s32 64, 64
      %40 = vsyncadd [#allocation12], %s39
      %s42 = sshll.u32 [#allocation11], 4
      %s43 = int_to_ptr.vmem [resolvable:$true] %s42
      %45 = dma.hbm_to_vmem [thread:$0]  %s8, 64, %s43, [#allocation12]
    $region13: #{conv_autoencoder_forward.1} parent=1 // pred_fallthru
      _
    // Predicated region
    $region14: #{conv_autoencoder_forward.1} parent=1 // pred_check
      _
    $region15: #{conv_autoencoder_forward.1} parent=1 // pred_check_branch
      %47 = sbr.rel (0) target = $region17
    $region16: #{conv_autoencoder_forward.1} parent=1 // pred_region
      %s49 = ssub.s32 32, 32
      %50 = vsyncadd [#allocation12], %s49
      %s52 = sshll.u32 [#allocation13], 4
      %s53 = int_to_ptr.vmem [resolvable:$true] %s52
      %55 = dma.hbm_to_vmem [thread:$0]  %s9, 32, %s53, [#allocation12]
    $region17: #{conv_autoencoder_forward.1} parent=1 // pred_fallthru
      _
    // Predicated region
    $region18: #{conv_autoencoder_forward.1} parent=1 // pred_check
      _
    $region19: #{conv_autoencoder_forward.1} parent=1 // pred_check_branch
      %57 = sbr.rel (0) target = $region21
    $region20: #{conv_autoencoder_forward.1} parent=1 // pred_region
      %s59 = ssub.s32 64, 64
      %60 = vsyncadd [#allocation15], %s59
      %s62 = sshll.u32 [#allocation14], 4
      %s63 = int_to_ptr.vmem [resolvable:$true] %s62
      %65 = dma.hbm_to_vmem [thread:$0]  %s10, 64, %s63, [#allocation15]
    $region21: #{conv_autoencoder_forward.1} parent=1 // pred_fallthru
      _
    // Predicated region
    $region22: #{conv_autoencoder_forward.1} parent=1 // pred_check
      _
    $region23: #{conv_autoencoder_forward.1} parent=1 // pred_check_branch
      %67 = sbr.rel (0) target = $region25
    $region24: #{conv_autoencoder_forward.1} parent=1 // pred_region
      %s69 = ssub.s32 128, 128
      %70 = vsyncadd [#allocation15], %s69
      %s72 = sshll.u32 [#allocation16], 4
      %s73 = int_to_ptr.vmem [resolvable:$true] %s72
      %75 = dma.hbm_to_vmem [thread:$0]  %s11, 128, %s73, [#allocation15]
    $region25: #{conv_autoencoder_forward.1} parent=1 // pred_fallthru
      _
    // Predicated region
    $region26: #{conv_autoencoder_forward.1} parent=1 // pred_check
      _
    $region27: #{conv_autoencoder_forward.1} parent=1 // pred_check_branch
      %77 = sbr.rel (0) target = $region29
    $region28: #{conv_autoencoder_forward.1} parent=1 // pred_region
      %s79 = ssub.s32 96, 96
      %80 = vsyncadd [#allocation18], %s79
      %s82 = sshll.u32 [#allocation17], 4
      %s83 = int_to_ptr.vmem [resolvable:$true] %s82
      %85 = dma.hbm_to_vmem [thread:$0]  %s12, 96, %s83, [#allocation18]
    $region29: #{conv_autoencoder_forward.1} parent=1 // pred_fallthru
      _
    // Predicated region
    $region30: #{conv_autoencoder_forward.1} parent=1 // pred_check
      _
    $region31: #{conv_autoencoder_forward.1} parent=1 // pred_check_branch
      %87 = sbr.rel (0) target = $region33
    $region32: #{conv_autoencoder_forward.1} parent=1 // pred_region
      %88 = dma.done [#allocation10], 128
    $region33: #{conv_autoencoder_forward.1} parent=1 // pred_fallthru
      _
    // Predicated region
    $region34: #{conv_autoencoder_forward.1} parent=1 // pred_check
      _
    $region35: #{conv_autoencoder_forward.1} parent=1 // pred_check_branch
      %90 = sbr.rel (0) target = $region37
    $region36: #{conv_autoencoder_forward.1} parent=1 // pred_region
      %91 = dma.done [#allocation12], 64
    $region37: #{conv_autoencoder_forward.1} parent=1 // pred_fallthru
      _
    // Predicated region
    $region38: #{conv_autoencoder_forward.1} parent=1 // pred_check
      _
    $region39: #{conv_autoencoder_forward.1} parent=1 // pred_check_branch
      %93 = sbr.rel (0) target = $region41
    $region40: #{conv_autoencoder_forward.1} parent=1 // pred_region
      %94 = dma.done [#allocation12], 32
    $region41: #{conv_autoencoder_forward.1} parent=1 // pred_fallthru
      _
    // Predicated region
    $region42: #{conv_autoencoder_forward.1} parent=1 // pred_check
      _
    $region43: #{conv_autoencoder_forward.1} parent=1 // pred_check_branch
      %96 = sbr.rel (0) target = $region45
    $region44: #{conv_autoencoder_forward.1} parent=1 // pred_region
      %97 = dma.done [#allocation15], 64
    $region45: #{conv_autoencoder_forward.1} parent=1 // pred_fallthru
      _
    // Predicated region
    $region46: #{conv_autoencoder_forward.1} parent=1 // pred_check
      _
    $region47: #{conv_autoencoder_forward.1} parent=1 // pred_check_branch
      %99 = sbr.rel (0) target = $region49
    $region48: #{conv_autoencoder_forward.1} parent=1 // pred_region
      %100 = dma.done [#allocation15], 128
    $region49: #{conv_autoencoder_forward.1} parent=1 // pred_fallthru
      _
    // Predicated region
    $region50: #{conv_autoencoder_forward.1} parent=1 // pred_check
      _
    $region51: #{conv_autoencoder_forward.1} parent=1 // pred_check_branch
      %102 = sbr.rel (0) target = $region53
    $region52: #{conv_autoencoder_forward.1} parent=1 // pred_region
      %103 = dma.done [#allocation18], 96
    $region53: #{conv_autoencoder_forward.1} parent=1 // pred_fallthru
      _
    %p104 = scmp.eq.s32.totalorder 0, 0
    // Predicated region
    $region54: #{conv_autoencoder_forward.1} parent=1 // pred_check
      %p105 = pneg %p104
    $region55: #{conv_autoencoder_forward.1} parent=1 // pred_check_branch
      %107 = sbr.rel (%p105) target = $region57
    $region56: #{conv_autoencoder_forward.1} parent=1 // pred_region
      #allocation20 [shape = 'u32[9]{0}', space=smem, size = 0x24, scoped, tag = 'DMA stride descriptor']
      #allocation22 [shape = 'u32[9]{0}', space=smem, size = 0x24, scoped, tag = 'DMA stride descriptor']
      #allocation24 [shape = 'u32[9]{0}', space=smem, size = 0x24, scoped, tag = 'DMA stride descriptor']
      #allocation26 [shape = 'u32[9]{0}', space=smem, size = 0x24, scoped, tag = 'DMA stride descriptor']
      #allocation28 [shape = 'u32[9]{0}', space=smem, size = 0x24, scoped, tag = 'DMA stride descriptor']
      #allocation30 [shape = 'u32[9]{0}', space=smem, size = 0x24, scoped, tag = 'DMA stride descriptor']
      %s109 = sshll.u32 1, 14
      %s110 = sxor.u32 4294967295, %s109
      %s112 = sld [smem:[#allocation0]]
      %s113 = sadd.s32 2, %s112
      %s115 = sshll.u32 7, 26
      %s116 = sxor.u32 4294967295, %s115
      %s117 = sand.u32 0, %s116
      %s118 = sshll.u32 %s113, 26
      %s119 = sor.u32 %s117, %s118
      %s120 = sshll.u32 [#allocation2], 4
      %s121 = int_to_ptr.vmem [resolvable:$true] %s120
      %124 = sst [smem:[#allocation20]] 1024
      %s125 = scalar_lea.smem [#allocation20], 1
      %126 = sst [smem:[%s125]] 1024
      %s127 = scalar_lea.smem [#allocation20], 2
      %128 = sst [smem:[%s127]] 8
      %s129 = scalar_lea.smem [#allocation20], 3
      %130 = sst [smem:[%s129]] 64
      %s131 = scalar_lea.smem [#allocation20], 4
      %132 = sst [smem:[%s131]] 128
      %s133 = scalar_lea.smem [#allocation20], 5
      %134 = sst [smem:[%s133]] 2
      %s135 = scalar_lea.smem [#allocation20], 6
      %136 = sst [smem:[%s135]] 512
      %s137 = scalar_lea.smem [#allocation20], 7
      %138 = sst [smem:[%s137]] 64
      %s139 = scalar_lea.smem [#allocation20], 8
      %140 = sst [smem:[%s139]] 4
      %142 = dma.general %s1, 49152, %s121, [#allocation8], [#allocation19], [#allocation20], %s119, 0
      %s143 = scalar_lea.sflag [#allocation8], 1
      %s145 = sshll.u32 1, 14
      %s146 = sxor.u32 4294967295, %s145
      %s148 = sadd.s32 2, %s112
      %s150 = sshll.u32 7, 26
      %s151 = sxor.u32 4294967295, %s150
      %s152 = sand.u32 0, %s151
      %s153 = sshll.u32 %s148, 26
      %s154 = sor.u32 %s152, %s153
      %s155 = sshll.u32 [#allocation3], 4
      %s156 = int_to_ptr.vmem [resolvable:$true] %s155
      %159 = sst [smem:[#allocation22]] 512
      %s160 = scalar_lea.smem [#allocation22], 1
      %161 = sst [smem:[%s160]] 512
      %s162 = scalar_lea.smem [#allocation22], 2
      %163 = sst [smem:[%s162]] 4
      %s164 = scalar_lea.smem [#allocation22], 3
      %165 = sst [smem:[%s164]] 64
      %s166 = scalar_lea.smem [#allocation22], 4
      %167 = sst [smem:[%s166]] 128
      %s168 = scalar_lea.smem [#allocation22], 5
      %169 = sst [smem:[%s168]] 2
      %s170 = scalar_lea.smem [#allocation22], 6
      %171 = sst [smem:[%s170]] 256
      %s172 = scalar_lea.smem [#allocation22], 7
      %173 = sst [smem:[%s172]] 64
      %s174 = scalar_lea.smem [#allocation22], 8
      %175 = sst [smem:[%s174]] 4
      %177 = dma.general %s2, 32768, %s156, %s143, [#allocation21], [#allocation22], %s154, 0
      %s178 = scalar_lea.sflag [#allocation8], 2
      %s180 = sshll.u32 1, 14
      %s181 = sxor.u32 4294967295, %s180
      %s183 = sadd.s32 2, %s112
      %s185 = sshll.u32 7, 26
      %s186 = sxor.u32 4294967295, %s185
      %s187 = sand.u32 0, %s186
      %s188 = sshll.u32 %s183, 26
      %s189 = sor.u32 %s187, %s188
      %s190 = sshll.u32 [#allocation4], 4
      %s191 = int_to_ptr.vmem [resolvable:$true] %s190
      %194 = sst [smem:[#allocation24]] 256
      %s195 = scalar_lea.smem [#allocation24], 1
      %196 = sst [smem:[%s195]] 256
      %s197 = scalar_lea.smem [#allocation24], 2
      %198 = sst [smem:[%s197]] 2
      %s199 = scalar_lea.smem [#allocation24], 3
      %200 = sst [smem:[%s199]] 64
      %s201 = scalar_lea.smem [#allocation24], 4
      %202 = sst [smem:[%s201]] 128
      %s203 = scalar_lea.smem [#allocation24], 5
      %204 = sst [smem:[%s203]] 2
      %s205 = scalar_lea.smem [#allocation24], 6
      %206 = sst [smem:[%s205]] 128
      %s207 = scalar_lea.smem [#allocation24], 7
      %208 = sst [smem:[%s207]] 64
      %s209 = scalar_lea.smem [#allocation24], 8
      %210 = sst [smem:[%s209]] 4
      %212 = dma.general %s3, 8192, %s191, %s178, [#allocation23], [#allocation24], %s189, 0
      %s213 = scalar_lea.sflag [#allocation8], 3
      %s215 = sshll.u32 1, 14
      %s216 = sxor.u32 4294967295, %s215
      %s218 = sadd.s32 2, %s112
      %s220 = sshll.u32 7, 26
      %s221 = sxor.u32 4294967295, %s220
      %s222 = sand.u32 0, %s221
      %s223 = sshll.u32 %s218, 26
      %s224 = sor.u32 %s222, %s223
      %s225 = sshll.u32 [#allocation5], 4
      %s226 = int_to_ptr.vmem [resolvable:$true] %s225
      %229 = sst [smem:[#allocation26]] 512
      %s230 = scalar_lea.smem [#allocation26], 1
      %231 = sst [smem:[%s230]] 512
      %s232 = scalar_lea.smem [#allocation26], 2
      %233 = sst [smem:[%s232]] 4
      %s234 = scalar_lea.smem [#allocation26], 3
      %235 = sst [smem:[%s234]] 64
      %s236 = scalar_lea.smem [#allocation26], 4
      %237 = sst [smem:[%s236]] 128
      %s238 = scalar_lea.smem [#allocation26], 5
      %239 = sst [smem:[%s238]] 2
      %s240 = scalar_lea.smem [#allocation26], 6
      %241 = sst [smem:[%s240]] 256
      %s242 = scalar_lea.smem [#allocation26], 7
      %243 = sst [smem:[%s242]] 64
      %s244 = scalar_lea.smem [#allocation26], 8
      %245 = sst [smem:[%s244]] 4
      %247 = dma.general %s4, 8192, %s226, %s213, [#allocation25], [#allocation26], %s224, 0
      %s248 = scalar_lea.sflag [#allocation8], 4
      %s250 = sshll.u32 1, 14
      %s251 = sxor.u32 4294967295, %s250
      %s253 = sadd.s32 2, %s112
      %s255 = sshll.u32 7, 26
      %s256 = sxor.u32 4294967295, %s255
      %s257 = sand.u32 0, %s256
      %s258 = sshll.u32 %s253, 26
      %s259 = sor.u32 %s257, %s258
      %s260 = sshll.u32 [#allocation6], 4
      %s261 = int_to_ptr.vmem [resolvable:$true] %s260
      %264 = sst [smem:[#allocation28]] 1024
      %s265 = scalar_lea.smem [#allocation28], 1
      %266 = sst [smem:[%s265]] 1024
      %s267 = scalar_lea.smem [#allocation28], 2
      %268 = sst [smem:[%s267]] 8
      %s269 = scalar_lea.smem [#allocation28], 3
      %270 = sst [smem:[%s269]] 64
      %s271 = scalar_lea.smem [#allocation28], 4
      %272 = sst [smem:[%s271]] 128
      %s273 = scalar_lea.smem [#allocation28], 5
      %274 = sst [smem:[%s273]] 2
      %s275 = scalar_lea.smem [#allocation28], 6
      %276 = sst [smem:[%s275]] 512
      %s277 = scalar_lea.smem [#allocation28], 7
      %278 = sst [smem:[%s277]] 64
      %s279 = scalar_lea.smem [#allocation28], 8
      %280 = sst [smem:[%s279]] 4
      %282 = dma.general %s5, 32768, %s261, %s248, [#allocation27], [#allocation28], %s259, 0
      %s283 = scalar_lea.sflag [#allocation8], 5
      %s285 = sshll.u32 1, 14
      %s286 = sxor.u32 4294967295, %s285
      %s288 = sadd.s32 2, %s112
      %s290 = sshll.u32 7, 26
      %s291 = sxor.u32 4294967295, %s290
      %s292 = sand.u32 0, %s291
      %s293 = sshll.u32 %s288, 26
      %s294 = sor.u32 %s292, %s293
      %s295 = sshll.u32 [#allocation7], 4
      %s296 = int_to_ptr.vmem [resolvable:$true] %s295
      %299 = sst [smem:[#allocation30]] 768
      %s300 = scalar_lea.smem [#allocation30], 1
      %301 = sst [smem:[%s300]] 768
      %s302 = scalar_lea.smem [#allocation30], 2
      %303 = sst [smem:[%s302]] 6
      %s304 = scalar_lea.smem [#allocation30], 3
      %305 = sst [smem:[%s304]] 64
      %s306 = scalar_lea.smem [#allocation30], 4
      %307 = sst [smem:[%s306]] 128
      %s308 = scalar_lea.smem [#allocation30], 5
      %309 = sst [smem:[%s308]] 2
      %s310 = scalar_lea.smem [#allocation30], 6
      %311 = sst [smem:[%s310]] 384
      %s312 = scalar_lea.smem [#allocation30], 7
      %313 = sst [smem:[%s312]] 64
      %s314 = scalar_lea.smem [#allocation30], 8
      %315 = sst [smem:[%s314]] 4
      %317 = dma.general %s6, 49152, %s296, %s283, [#allocation29], [#allocation30], %s294, 0
    $region57: #{conv_autoencoder_forward.1} parent=1 // pred_fallthru
      _
    %v318 = vld [vmem:[%s0] sm:$0xff]
    %v319 = vld [vmem:[%s0 + $0x8] sm:$0xf]
    %v322 = vcombine.high %v318, %v318
    %v324 = vunpack.c.l.s4 1983009808
    %v325 = vunpack.c.0.s8 %v324
    %v326 = vlaneseq
    %v327 = vshrl.u32 %v326, 7
    %v328 = vsub.s32 %v325, %v327
    %v329 = vrot.slane %v318, %v328
    %v331 = vunpack.c.l.s4 1983009808
    %v332 = vunpack.c.0.s8 %v331
    %v333 = vlaneseq
    %v334 = vshrl.u32 %v333, 7
    %v335 = vsub.s32 %v332, %v334
    %v336 = vrot.slane %v322, %v335
    %v337 = vcombine.high %v329, %v329
    %v338 = vcombine.high %v336, %v336
    %v340 = vunpack.c.l.s4 1983009808
    %v341 = vunpack.c.0.s8 %v340
    %v342 = vlaneseq
    %v343 = vshrl.u32 %v342, 7
    %v344 = vsub.s32 %v341, %v343
    %v345 = vrot.slane %v319, %v344
    %v346 = vcombine.high %v345, %v345
    %v353 = vpack.c.bf16 %v329, %v329
    %v354 = vpack.c.bf16 %v337, %v337
    %v355 = vpack.c.bf16 %v336, %v336
    %v356 = vpack.c.bf16 %v338, %v338
    %v357 = vpack.c.bf16 %v345, %v345
    %v358 = vpack.c.bf16 %v346, %v346
    // Predicated region
    $region58: #{conv_autoencoder_forward.1} parent=1 // pred_check
      %p359 = pneg %p104
    $region59: #{conv_autoencoder_forward.1} parent=1 // pred_check_branch
      %361 = sbr.rel (%p359) target = $region61
    $region60: #{conv_autoencoder_forward.1} parent=1 // pred_region
      %s362 = smul.u32 4, 96
      %s363 = smul.u32 %s362, 8
      %s364 = sshll.u32 %s363, 4
      %365 = dma.done [#allocation8], %s364
    $region61: #{conv_autoencoder_forward.1} parent=1 // pred_fallthru
      _
    %v366 = vld [vmem:[#allocation2] sm:$0xff]
    %v367 = vld [vmem:[#allocation2 + $0x8] sm:$0xff]
    %v368 = vld [vmem:[#allocation2 + $0x10] sm:$0xff]
    %v369 = vld [vmem:[#allocation2 + $0x18] sm:$0xff]
    %v370 = vld [vmem:[#allocation2 + $0x20] sm:$0xff]
    %v371 = vld [vmem:[#allocation2 + $0x28] sm:$0xff]
    %v372 = vld [vmem:[#allocation2 + $0x30] sm:$0xff]
    %v373 = vld [vmem:[#allocation2 + $0x38] sm:$0xff]
    %v374 = vld [vmem:[#allocation2 + $0x40] sm:$0xff]
    %v375 = vld [vmem:[#allocation2 + $0x48] sm:$0xff]
    %v376 = vld [vmem:[#allocation2 + $0x50] sm:$0xff]
    %v377 = vld [vmem:[#allocation2 + $0x58] sm:$0xff]
    %v378 = vld [vmem:[#allocation2 + $0x60] sm:$0xff]
    %v379 = vld [vmem:[#allocation2 + $0x68] sm:$0xff]
    %v380 = vld [vmem:[#allocation2 + $0x70] sm:$0xff]
    %v381 = vld [vmem:[#allocation2 + $0x78] sm:$0xff]
    %v382 = vld [vmem:[#allocation2 + $0x80] sm:$0xff]
    %v383 = vld [vmem:[#allocation2 + $0x88] sm:$0xff]
    %v384 = vld [vmem:[#allocation2 + $0x90] sm:$0xff]
    %v385 = vld [vmem:[#allocation2 + $0x98] sm:$0xff]
    %v386 = vld [vmem:[#allocation2 + $0xa0] sm:$0xff]
    %v387 = vld [vmem:[#allocation2 + $0xa8] sm:$0xff]
    %v388 = vld [vmem:[#allocation2 + $0xb0] sm:$0xff]
    %v389 = vld [vmem:[#allocation2 + $0xb8] sm:$0xff]
    %v390 = vld [vmem:[#allocation2 + $0xc0] sm:$0xff]
    %v391 = vld [vmem:[#allocation2 + $0xc8] sm:$0xff]
    %v392 = vld [vmem:[#allocation2 + $0xd0] sm:$0xff]
    %v393 = vld [vmem:[#allocation2 + $0xd8] sm:$0xff]
    %v394 = vld [vmem:[#allocation2 + $0xe0] sm:$0xff]
    %v395 = vld [vmem:[#allocation2 + $0xe8] sm:$0xff]
    %v396 = vld [vmem:[#allocation2 + $0xf0] sm:$0xff]
    %v397 = vld [vmem:[#allocation2 + $0xf8] sm:$0xff]
    %v398 = vld [vmem:[#allocation2 + $0x100] sm:$0xff]
    %v399 = vld [vmem:[#allocation2 + $0x108] sm:$0xff]
    %v400 = vld [vmem:[#allocation2 + $0x110] sm:$0xff]
    %v401 = vld [vmem:[#allocation2 + $0x118] sm:$0xff]
    %v402 = vld [vmem:[#allocation2 + $0x120] sm:$0xff]
    %v403 = vld [vmem:[#allocation2 + $0x128] sm:$0xff]
    %v404 = vld [vmem:[#allocation2 + $0x130] sm:$0xff]
    %v405 = vld [vmem:[#allocation2 + $0x138] sm:$0xff]
    %v406 = vld [vmem:[#allocation2 + $0x140] sm:$0xff]
    %v407 = vld [vmem:[#allocation2 + $0x148] sm:$0xff]
    %v408 = vld [vmem:[#allocation2 + $0x150] sm:$0xff]
    %v409 = vld [vmem:[#allocation2 + $0x158] sm:$0xff]
    %v410 = vld [vmem:[#allocation2 + $0x160] sm:$0xff]
    %v411 = vld [vmem:[#allocation2 + $0x168] sm:$0xff]
    %v412 = vld [vmem:[#allocation2 + $0x170] sm:$0xff]
    %v413 = vld [vmem:[#allocation2 + $0x178] sm:$0xff]
    %v414 = vld [vmem:[#allocation2 + $0x180] sm:$0xff]
    %v415 = vld [vmem:[#allocation2 + $0x188] sm:$0xff]
    %v416 = vld [vmem:[#allocation2 + $0x190] sm:$0xff]
    %v417 = vld [vmem:[#allocation2 + $0x198] sm:$0xff]
    %v418 = vld [vmem:[#allocation2 + $0x1a0] sm:$0xff]
    %v419 = vld [vmem:[#allocation2 + $0x1a8] sm:$0xff]
    %v420 = vld [vmem:[#allocation2 + $0x1b0] sm:$0xff]
    %v421 = vld [vmem:[#allocation2 + $0x1b8] sm:$0xff]
    %v422 = vld [vmem:[#allocation2 + $0x1c0] sm:$0xff]
    %v423 = vld [vmem:[#allocation2 + $0x1c8] sm:$0xff]
    %v424 = vld [vmem:[#allocation2 + $0x1d0] sm:$0xff]
    %v425 = vld [vmem:[#allocation2 + $0x1d8] sm:$0xff]
    %v426 = vld [vmem:[#allocation2 + $0x1e0] sm:$0xff]
    %v427 = vld [vmem:[#allocation2 + $0x1e8] sm:$0xff]
    %v428 = vld [vmem:[#allocation2 + $0x1f0] sm:$0xff]
    %v429 = vld [vmem:[#allocation2 + $0x1f8] sm:$0xff]
    %v430 = vld [vmem:[#allocation2 + $0x200] sm:$0xff]
    %v431 = vld [vmem:[#allocation2 + $0x208] sm:$0xff]
    %v432 = vld [vmem:[#allocation2 + $0x210] sm:$0xff]
    %v433 = vld [vmem:[#allocation2 + $0x218] sm:$0xff]
    %v434 = vld [vmem:[#allocation2 + $0x220] sm:$0xff]
    %v435 = vld [vmem:[#allocation2 + $0x228] sm:$0xff]
    %v436 = vld [vmem:[#allocation2 + $0x230] sm:$0xff]
    %v437 = vld [vmem:[#allocation2 + $0x238] sm:$0xff]
    %v438 = vld [vmem:[#allocation2 + $0x240] sm:$0xff]
    %v439 = vld [vmem:[#allocation2 + $0x248] sm:$0xff]
    %v440 = vld [vmem:[#allocation2 + $0x250] sm:$0xff]
    %v441 = vld [vmem:[#allocation2 + $0x258] sm:$0xff]
    %v442 = vld [vmem:[#allocation2 + $0x260] sm:$0xff]
    %v443 = vld [vmem:[#allocation2 + $0x268] sm:$0xff]
    %v444 = vld [vmem:[#allocation2 + $0x270] sm:$0xff]
    %v445 = vld [vmem:[#allocation2 + $0x278] sm:$0xff]
    %v446 = vld [vmem:[#allocation2 + $0x280] sm:$0xff]
    %v447 = vld [vmem:[#allocation2 + $0x288] sm:$0xff]
    %v448 = vld [vmem:[#allocation2 + $0x290] sm:$0xff]
    %v449 = vld [vmem:[#allocation2 + $0x298] sm:$0xff]
    %v450 = vld [vmem:[#allocation2 + $0x2a0] sm:$0xff]
    %v451 = vld [vmem:[#allocation2 + $0x2a8] sm:$0xff]
    %v452 = vld [vmem:[#allocation2 + $0x2b0] sm:$0xff]
    %v453 = vld [vmem:[#allocation2 + $0x2b8] sm:$0xff]
    %v454 = vld [vmem:[#allocation2 + $0x2c0] sm:$0xff]
    %v455 = vld [vmem:[#allocation2 + $0x2c8] sm:$0xff]
    %v456 = vld [vmem:[#allocation2 + $0x2d0] sm:$0xff]
    %v457 = vld [vmem:[#allocation2 + $0x2d8] sm:$0xff]
    %v458 = vld [vmem:[#allocation2 + $0x2e0] sm:$0xff]
    %v459 = vld [vmem:[#allocation2 + $0x2e8] sm:$0xff]
    %v460 = vld [vmem:[#allocation2 + $0x2f0] sm:$0xff]
    %v461 = vld [vmem:[#allocation2 + $0x2f8] sm:$0xff]
    %v462 = vld [vmem:[#allocation2 + $0x300] sm:$0xff]
    %v463 = vld [vmem:[#allocation2 + $0x308] sm:$0xff]
    %v464 = vld [vmem:[#allocation2 + $0x310] sm:$0xff]
    %v465 = vld [vmem:[#allocation2 + $0x318] sm:$0xff]
    %v466 = vld [vmem:[#allocation2 + $0x320] sm:$0xff]
    %v467 = vld [vmem:[#allocation2 + $0x328] sm:$0xff]
    %v468 = vld [vmem:[#allocation2 + $0x330] sm:$0xff]
    %v469 = vld [vmem:[#allocation2 + $0x338] sm:$0xff]
    %v470 = vld [vmem:[#allocation2 + $0x340] sm:$0xff]
    %v471 = vld [vmem:[#allocation2 + $0x348] sm:$0xff]
    %v472 = vld [vmem:[#allocation2 + $0x350] sm:$0xff]
    %v473 = vld [vmem:[#allocation2 + $0x358] sm:$0xff]
    %v474 = vld [vmem:[#allocation2 + $0x360] sm:$0xff]
    %v475 = vld [vmem:[#allocation2 + $0x368] sm:$0xff]
    %v476 = vld [vmem:[#allocation2 + $0x370] sm:$0xff]
    %v477 = vld [vmem:[#allocation2 + $0x378] sm:$0xff]
    %v478 = vld [vmem:[#allocation2 + $0x380] sm:$0xff]
    %v479 = vld [vmem:[#allocation2 + $0x388] sm:$0xff]
    %v480 = vld [vmem:[#allocation2 + $0x390] sm:$0xff]
    %v481 = vld [vmem:[#allocation2 + $0x398] sm:$0xff]
    %v482 = vld [vmem:[#allocation2 + $0x3a0] sm:$0xff]
    %v483 = vld [vmem:[#allocation2 + $0x3a8] sm:$0xff]
    %v484 = vld [vmem:[#allocation2 + $0x3b0] sm:$0xff]
    %v485 = vld [vmem:[#allocation2 + $0x3b8] sm:$0xff]
    %v486 = vld [vmem:[#allocation2 + $0x3c0] sm:$0xff]
    %v487 = vld [vmem:[#allocation2 + $0x3c8] sm:$0xff]
    %v488 = vld [vmem:[#allocation2 + $0x3d0] sm:$0xff]
    %v489 = vld [vmem:[#allocation2 + $0x3d8] sm:$0xff]
    %v490 = vld [vmem:[#allocation2 + $0x3e0] sm:$0xff]
    %v491 = vld [vmem:[#allocation2 + $0x3e8] sm:$0xff]
    %v492 = vld [vmem:[#allocation2 + $0x3f0] sm:$0xff]
    %v493 = vld [vmem:[#allocation2 + $0x3f8] sm:$0xff]
    %v494 = vld [vmem:[#allocation2 + $0x400] sm:$0xff]
    %v495 = vld [vmem:[#allocation2 + $0x408] sm:$0xff]
    %v496 = vld [vmem:[#allocation2 + $0x410] sm:$0xff]
    %v497 = vld [vmem:[#allocation2 + $0x418] sm:$0xff]
    %v498 = vld [vmem:[#allocation2 + $0x420] sm:$0xff]
    %v499 = vld [vmem:[#allocation2 + $0x428] sm:$0xff]
    %v500 = vld [vmem:[#allocation2 + $0x430] sm:$0xff]
    %v501 = vld [vmem:[#allocation2 + $0x438] sm:$0xff]
    %v502 = vld [vmem:[#allocation2 + $0x440] sm:$0xff]
    %v503 = vld [vmem:[#allocation2 + $0x448] sm:$0xff]
    %v504 = vld [vmem:[#allocation2 + $0x450] sm:$0xff]
    %v505 = vld [vmem:[#allocation2 + $0x458] sm:$0xff]
    %v506 = vld [vmem:[#allocation2 + $0x460] sm:$0xff]
    %v507 = vld [vmem:[#allocation2 + $0x468] sm:$0xff]
    %v508 = vld [vmem:[#allocation2 + $0x470] sm:$0xff]
    %v509 = vld [vmem:[#allocation2 + $0x478] sm:$0xff]
    %v510 = vld [vmem:[#allocation2 + $0x480] sm:$0xff]
    %v511 = vld [vmem:[#allocation2 + $0x488] sm:$0xff]
    %v512 = vld [vmem:[#allocation2 + $0x490] sm:$0xff]
    %v513 = vld [vmem:[#allocation2 + $0x498] sm:$0xff]
    %v514 = vld [vmem:[#allocation2 + $0x4a0] sm:$0xff]
    %v515 = vld [vmem:[#allocation2 + $0x4a8] sm:$0xff]
    %v516 = vld [vmem:[#allocation2 + $0x4b0] sm:$0xff]
    %v517 = vld [vmem:[#allocation2 + $0x4b8] sm:$0xff]
    %v518 = vld [vmem:[#allocation2 + $0x4c0] sm:$0xff]
    %v519 = vld [vmem:[#allocation2 + $0x4c8] sm:$0xff]
    %v520 = vld [vmem:[#allocation2 + $0x4d0] sm:$0xff]
    %v521 = vld [vmem:[#allocation2 + $0x4d8] sm:$0xff]
    %v522 = vld [vmem:[#allocation2 + $0x4e0] sm:$0xff]
    %v523 = vld [vmem:[#allocation2 + $0x4e8] sm:$0xff]
    %v524 = vld [vmem:[#allocation2 + $0x4f0] sm:$0xff]
    %v525 = vld [vmem:[#allocation2 + $0x4f8] sm:$0xff]
    %v526 = vld [vmem:[#allocation2 + $0x500] sm:$0xff]
    %v527 = vld [vmem:[#allocation2 + $0x508] sm:$0xff]
    %v528 = vld [vmem:[#allocation2 + $0x510] sm:$0xff]
    %v529 = vld [vmem:[#allocation2 + $0x518] sm:$0xff]
    %v530 = vld [vmem:[#allocation2 + $0x520] sm:$0xff]
    %v531 = vld [vmem:[#allocation2 + $0x528] sm:$0xff]
    %v532 = vld [vmem:[#allocation2 + $0x530] sm:$0xff]
    %v533 = vld [vmem:[#allocation2 + $0x538] sm:$0xff]
    %v534 = vld [vmem:[#allocation2 + $0x540] sm:$0xff]
    %v535 = vld [vmem:[#allocation2 + $0x548] sm:$0xff]
    %v536 = vld [vmem:[#allocation2 + $0x550] sm:$0xff]
    %v537 = vld [vmem:[#allocation2 + $0x558] sm:$0xff]
    %v538 = vld [vmem:[#allocation2 + $0x560] sm:$0xff]
    %v539 = vld [vmem:[#allocation2 + $0x568] sm:$0xff]
    %v540 = vld [vmem:[#allocation2 + $0x570] sm:$0xff]
    %v541 = vld [vmem:[#allocation2 + $0x578] sm:$0xff]
    %v542 = vld [vmem:[#allocation2 + $0x580] sm:$0xff]
    %v543 = vld [vmem:[#allocation2 + $0x588] sm:$0xff]
    %v544 = vld [vmem:[#allocation2 + $0x590] sm:$0xff]
    %v545 = vld [vmem:[#allocation2 + $0x598] sm:$0xff]
    %v546 = vld [vmem:[#allocation2 + $0x5a0] sm:$0xff]
    %v547 = vld [vmem:[#allocation2 + $0x5a8] sm:$0xff]
    %v548 = vld [vmem:[#allocation2 + $0x5b0] sm:$0xff]
    %v549 = vld [vmem:[#allocation2 + $0x5b8] sm:$0xff]
    %v550 = vld [vmem:[#allocation2 + $0x5c0] sm:$0xff]
    %v551 = vld [vmem:[#allocation2 + $0x5c8] sm:$0xff]
    %v552 = vld [vmem:[#allocation2 + $0x5d0] sm:$0xff]
    %v553 = vld [vmem:[#allocation2 + $0x5d8] sm:$0xff]
    %v554 = vld [vmem:[#allocation2 + $0x5e0] sm:$0xff]
    %v555 = vld [vmem:[#allocation2 + $0x5e8] sm:$0xff]
    %v556 = vld [vmem:[#allocation2 + $0x5f0] sm:$0xff]
    %v557 = vld [vmem:[#allocation2 + $0x5f8] sm:$0xff]
    %v558 = vld [vmem:[#allocation2 + $0x600] sm:$0xff]
    %v559 = vld [vmem:[#allocation2 + $0x608] sm:$0xff]
    %v560 = vld [vmem:[#allocation2 + $0x610] sm:$0xff]
    %v561 = vld [vmem:[#allocation2 + $0x618] sm:$0xff]
    %v562 = vld [vmem:[#allocation2 + $0x620] sm:$0xff]
    %v563 = vld [vmem:[#allocation2 + $0x628] sm:$0xff]
    %v564 = vld [vmem:[#allocation2 + $0x630] sm:$0xff]
    %v565 = vld [vmem:[#allocation2 + $0x638] sm:$0xff]
    %v566 = vld [vmem:[#allocation2 + $0x640] sm:$0xff]
    %v567 = vld [vmem:[#allocation2 + $0x648] sm:$0xff]
    %v568 = vld [vmem:[#allocation2 + $0x650] sm:$0xff]
    %v569 = vld [vmem:[#allocation2 + $0x658] sm:$0xff]
    %v570 = vld [vmem:[#allocation2 + $0x660] sm:$0xff]
    %v571 = vld [vmem:[#allocation2 + $0x668] sm:$0xff]
    %v572 = vld [vmem:[#allocation2 + $0x670] sm:$0xff]
    %v573 = vld [vmem:[#allocation2 + $0x678] sm:$0xff]
    %v574 = vld [vmem:[#allocation2 + $0x680] sm:$0xff]
    %v575 = vld [vmem:[#allocation2 + $0x688] sm:$0xff]
    %v576 = vld [vmem:[#allocation2 + $0x690] sm:$0xff]
    %v577 = vld [vmem:[#allocation2 + $0x698] sm:$0xff]
    %v578 = vld [vmem:[#allocation2 + $0x6a0] sm:$0xff]
    %v579 = vld [vmem:[#allocation2 + $0x6a8] sm:$0xff]
    %v580 = vld [vmem:[#allocation2 + $0x6b0] sm:$0xff]
    %v581 = vld [vmem:[#allocation2 + $0x6b8] sm:$0xff]
    %v582 = vld [vmem:[#allocation2 + $0x6c0] sm:$0xff]
    %v583 = vld [vmem:[#allocation2 + $0x6c8] sm:$0xff]
    %v584 = vld [vmem:[#allocation2 + $0x6d0] sm:$0xff]
    %v585 = vld [vmem:[#allocation2 + $0x6d8] sm:$0xff]
    %v586 = vld [vmem:[#allocation2 + $0x6e0] sm:$0xff]
    %v587 = vld [vmem:[#allocation2 + $0x6e8] sm:$0xff]
    %v588 = vld [vmem:[#allocation2 + $0x6f0] sm:$0xff]
    %v589 = vld [vmem:[#allocation2 + $0x6f8] sm:$0xff]
    %v590 = vld [vmem:[#allocation2 + $0x700] sm:$0xff]
    %v591 = vld [vmem:[#allocation2 + $0x708] sm:$0xff]
    %v592 = vld [vmem:[#allocation2 + $0x710] sm:$0xff]
    %v593 = vld [vmem:[#allocation2 + $0x718] sm:$0xff]
    %v594 = vld [vmem:[#allocation2 + $0x720] sm:$0xff]
    %v595 = vld [vmem:[#allocation2 + $0x728] sm:$0xff]
    %v596 = vld [vmem:[#allocation2 + $0x730] sm:$0xff]
    %v597 = vld [vmem:[#allocation2 + $0x738] sm:$0xff]
    %v598 = vld [vmem:[#allocation2 + $0x740] sm:$0xff]
    %v599 = vld [vmem:[#allocation2 + $0x748] sm:$0xff]
    %v600 = vld [vmem:[#allocation2 + $0x750] sm:$0xff]
    %v601 = vld [vmem:[#allocation2 + $0x758] sm:$0xff]
    %v602 = vld [vmem:[#allocation2 + $0x760] sm:$0xff]
    %v603 = vld [vmem:[#allocation2 + $0x768] sm:$0xff]
    %v604 = vld [vmem:[#allocation2 + $0x770] sm:$0xff]
    %v605 = vld [vmem:[#allocation2 + $0x778] sm:$0xff]
    %v606 = vld [vmem:[#allocation2 + $0x780] sm:$0xff]
    %v607 = vld [vmem:[#allocation2 + $0x788] sm:$0xff]
    %v608 = vld [vmem:[#allocation2 + $0x790] sm:$0xff]
    %v609 = vld [vmem:[#allocation2 + $0x798] sm:$0xff]
    %v610 = vld [vmem:[#allocation2 + $0x7a0] sm:$0xff]
    %v611 = vld [vmem:[#allocation2 + $0x7a8] sm:$0xff]
    %v612 = vld [vmem:[#allocation2 + $0x7b0] sm:$0xff]
    %v613 = vld [vmem:[#allocation2 + $0x7b8] sm:$0xff]
    %v614 = vld [vmem:[#allocation2 + $0x7c0] sm:$0xff]
    %v615 = vld [vmem:[#allocation2 + $0x7c8] sm:$0xff]
    %v616 = vld [vmem:[#allocation2 + $0x7d0] sm:$0xff]
    %v617 = vld [vmem:[#allocation2 + $0x7d8] sm:$0xff]
    %v618 = vld [vmem:[#allocation2 + $0x7e0] sm:$0xff]
    %v619 = vld [vmem:[#allocation2 + $0x7e8] sm:$0xff]
    %v620 = vld [vmem:[#allocation2 + $0x7f0] sm:$0xff]
    %v621 = vld [vmem:[#allocation2 + $0x7f8] sm:$0xff]
    %v622 = vld [vmem:[#allocation2 + $0x800] sm:$0xff]
    %v623 = vld [vmem:[#allocation2 + $0x808] sm:$0xff]
    %v624 = vld [vmem:[#allocation2 + $0x810] sm:$0xff]
    %v625 = vld [vmem:[#allocation2 + $0x818] sm:$0xff]
    %v626 = vld [vmem:[#allocation2 + $0x820] sm:$0xff]
    %v627 = vld [vmem:[#allocation2 + $0x828] sm:$0xff]
    %v628 = vld [vmem:[#allocation2 + $0x830] sm:$0xff]
    %v629 = vld [vmem:[#allocation2 + $0x838] sm:$0xff]
    %v630 = vld [vmem:[#allocation2 + $0x840] sm:$0xff]
    %v631 = vld [vmem:[#allocation2 + $0x848] sm:$0xff]
    %v632 = vld [vmem:[#allocation2 + $0x850] sm:$0xff]
    %v633 = vld [vmem:[#allocation2 + $0x858] sm:$0xff]
    %v634 = vld [vmem:[#allocation2 + $0x860] sm:$0xff]
    %v635 = vld [vmem:[#allocation2 + $0x868] sm:$0xff]
    %v636 = vld [vmem:[#allocation2 + $0x870] sm:$0xff]
    %v637 = vld [vmem:[#allocation2 + $0x878] sm:$0xff]
    %v638 = vld [vmem:[#allocation2 + $0x880] sm:$0xff]
    %v639 = vld [vmem:[#allocation2 + $0x888] sm:$0xff]
    %v640 = vld [vmem:[#allocation2 + $0x890] sm:$0xff]
    %v641 = vld [vmem:[#allocation2 + $0x898] sm:$0xff]
    %v642 = vld [vmem:[#allocation2 + $0x8a0] sm:$0xff]
    %v643 = vld [vmem:[#allocation2 + $0x8a8] sm:$0xff]
    %v644 = vld [vmem:[#allocation2 + $0x8b0] sm:$0xff]
    %v645 = vld [vmem:[#allocation2 + $0x8b8] sm:$0xff]
    %v646 = vld [vmem:[#allocation2 + $0x8c0] sm:$0xff]
    %v647 = vld [vmem:[#allocation2 + $0x8c8] sm:$0xff]
    %v648 = vld [vmem:[#allocation2 + $0x8d0] sm:$0xff]
    %v649 = vld [vmem:[#allocation2 + $0x8d8] sm:$0xff]
    %v650 = vld [vmem:[#allocation2 + $0x8e0] sm:$0xff]
    %v651 = vld [vmem:[#allocation2 + $0x8e8] sm:$0xff]
    %v652 = vld [vmem:[#allocation2 + $0x8f0] sm:$0xff]
    %v653 = vld [vmem:[#allocation2 + $0x8f8] sm:$0xff]
    %v654 = vld [vmem:[#allocation2 + $0x900] sm:$0xff]
    %v655 = vld [vmem:[#allocation2 + $0x908] sm:$0xff]
    %v656 = vld [vmem:[#allocation2 + $0x910] sm:$0xff]
    %v657 = vld [vmem:[#allocation2 + $0x918] sm:$0xff]
    %v658 = vld [vmem:[#allocation2 + $0x920] sm:$0xff]
    %v659 = vld [vmem:[#allocation2 + $0x928] sm:$0xff]
    %v660 = vld [vmem:[#allocation2 + $0x930] sm:$0xff]
    %v661 = vld [vmem:[#allocation2 + $0x938] sm:$0xff]
    %v662 = vld [vmem:[#allocation2 + $0x940] sm:$0xff]
    %v663 = vld [vmem:[#allocation2 + $0x948] sm:$0xff]
    %v664 = vld [vmem:[#allocation2 + $0x950] sm:$0xff]
    %v665 = vld [vmem:[#allocation2 + $0x958] sm:$0xff]
    %v666 = vld [vmem:[#allocation2 + $0x960] sm:$0xff]
    %v667 = vld [vmem:[#allocation2 + $0x968] sm:$0xff]
    %v668 = vld [vmem:[#allocation2 + $0x970] sm:$0xff]
    %v669 = vld [vmem:[#allocation2 + $0x978] sm:$0xff]
    %v670 = vld [vmem:[#allocation2 + $0x980] sm:$0xff]
    %v671 = vld [vmem:[#allocation2 + $0x988] sm:$0xff]
    %v672 = vld [vmem:[#allocation2 + $0x990] sm:$0xff]
    %v673 = vld [vmem:[#allocation2 + $0x998] sm:$0xff]
    %v674 = vld [vmem:[#allocation2 + $0x9a0] sm:$0xff]
    %v675 = vld [vmem:[#allocation2 + $0x9a8] sm:$0xff]
    %v676 = vld [vmem:[#allocation2 + $0x9b0] sm:$0xff]
    %v677 = vld [vmem:[#allocation2 + $0x9b8] sm:$0xff]
    %v678 = vld [vmem:[#allocation2 + $0x9c0] sm:$0xff]
    %v679 = vld [vmem:[#allocation2 + $0x9c8] sm:$0xff]
    %v680 = vld [vmem:[#allocation2 + $0x9d0] sm:$0xff]
    %v681 = vld [vmem:[#allocation2 + $0x9d8] sm:$0xff]
    %v682 = vld [vmem:[#allocation2 + $0x9e0] sm:$0xff]
    %v683 = vld [vmem:[#allocation2 + $0x9e8] sm:$0xff]
    %v684 = vld [vmem:[#allocation2 + $0x9f0] sm:$0xff]
    %v685 = vld [vmem:[#allocation2 + $0x9f8] sm:$0xff]
    %v686 = vld [vmem:[#allocation2 + $0xa00] sm:$0xff]
    %v687 = vld [vmem:[#allocation2 + $0xa08] sm:$0xff]
    %v688 = vld [vmem:[#allocation2 + $0xa10] sm:$0xff]
    %v689 = vld [vmem:[#allocation2 + $0xa18] sm:$0xff]
    %v690 = vld [vmem:[#allocation2 + $0xa20] sm:$0xff]
    %v691 = vld [vmem:[#allocation2 + $0xa28] sm:$0xff]
    %v692 = vld [vmem:[#allocation2 + $0xa30] sm:$0xff]
    %v693 = vld [vmem:[#allocation2 + $0xa38] sm:$0xff]
    %v694 = vld [vmem:[#allocation2 + $0xa40] sm:$0xff]
    %v695 = vld [vmem:[#allocation2 + $0xa48] sm:$0xff]
    %v696 = vld [vmem:[#allocation2 + $0xa50] sm:$0xff]
    %v697 = vld [vmem:[#allocation2 + $0xa58] sm:$0xff]
    %v698 = vld [vmem:[#allocation2 + $0xa60] sm:$0xff]
    %v699 = vld [vmem:[#allocation2 + $0xa68] sm:$0xff]
    %v700 = vld [vmem:[#allocation2 + $0xa70] sm:$0xff]
    %v701 = vld [vmem:[#allocation2 + $0xa78] sm:$0xff]
    %v702 = vld [vmem:[#allocation2 + $0xa80] sm:$0xff]
    %v703 = vld [vmem:[#allocation2 + $0xa88] sm:$0xff]
    %v704 = vld [vmem:[#allocation2 + $0xa90] sm:$0xff]
    %v705 = vld [vmem:[#allocation2 + $0xa98] sm:$0xff]
    %v706 = vld [vmem:[#allocation2 + $0xaa0] sm:$0xff]
    %v707 = vld [vmem:[#allocation2 + $0xaa8] sm:$0xff]
    %v708 = vld [vmem:[#allocation2 + $0xab0] sm:$0xff]
    %v709 = vld [vmem:[#allocation2 + $0xab8] sm:$0xff]
    %v710 = vld [vmem:[#allocation2 + $0xac0] sm:$0xff]
    %v711 = vld [vmem:[#allocation2 + $0xac8] sm:$0xff]
    %v712 = vld [vmem:[#allocation2 + $0xad0] sm:$0xff]
    %v713 = vld [vmem:[#allocation2 + $0xad8] sm:$0xff]
    %v714 = vld [vmem:[#allocation2 + $0xae0] sm:$0xff]
    %v715 = vld [vmem:[#allocation2 + $0xae8] sm:$0xff]
    %v716 = vld [vmem:[#allocation2 + $0xaf0] sm:$0xff]
    %v717 = vld [vmem:[#allocation2 + $0xaf8] sm:$0xff]
    %v718 = vld [vmem:[#allocation2 + $0xb00] sm:$0xff]
    %v719 = vld [vmem:[#allocation2 + $0xb08] sm:$0xff]
    %v720 = vld [vmem:[#allocation2 + $0xb10] sm:$0xff]
    %v721 = vld [vmem:[#allocation2 + $0xb18] sm:$0xff]
    %v722 = vld [vmem:[#allocation2 + $0xb20] sm:$0xff]
    %v723 = vld [vmem:[#allocation2 + $0xb28] sm:$0xff]
    %v724 = vld [vmem:[#allocation2 + $0xb30] sm:$0xff]
    %v725 = vld [vmem:[#allocation2 + $0xb38] sm:$0xff]
    %v726 = vld [vmem:[#allocation2 + $0xb40] sm:$0xff]
    %v727 = vld [vmem:[#allocation2 + $0xb48] sm:$0xff]
    %v728 = vld [vmem:[#allocation2 + $0xb50] sm:$0xff]
    %v729 = vld [vmem:[#allocation2 + $0xb58] sm:$0xff]
    %v730 = vld [vmem:[#allocation2 + $0xb60] sm:$0xff]
    %v731 = vld [vmem:[#allocation2 + $0xb68] sm:$0xff]
    %v732 = vld [vmem:[#allocation2 + $0xb70] sm:$0xff]
    %v733 = vld [vmem:[#allocation2 + $0xb78] sm:$0xff]
    %v734 = vld [vmem:[#allocation2 + $0xb80] sm:$0xff]
    %v735 = vld [vmem:[#allocation2 + $0xb88] sm:$0xff]
    %v736 = vld [vmem:[#allocation2 + $0xb90] sm:$0xff]
    %v737 = vld [vmem:[#allocation2 + $0xb98] sm:$0xff]
    %v738 = vld [vmem:[#allocation2 + $0xba0] sm:$0xff]
    %v739 = vld [vmem:[#allocation2 + $0xba8] sm:$0xff]
    %v740 = vld [vmem:[#allocation2 + $0xbb0] sm:$0xff]
    %v741 = vld [vmem:[#allocation2 + $0xbb8] sm:$0xff]
    %v742 = vld [vmem:[#allocation2 + $0xbc0] sm:$0xff]
    %v743 = vld [vmem:[#allocation2 + $0xbc8] sm:$0xff]
    %v744 = vld [vmem:[#allocation2 + $0xbd0] sm:$0xff]
    %v745 = vld [vmem:[#allocation2 + $0xbd8] sm:$0xff]
    %v746 = vld [vmem:[#allocation2 + $0xbe0] sm:$0xff]
    %v747 = vld [vmem:[#allocation2 + $0xbe8] sm:$0xff]
    %v748 = vld [vmem:[#allocation2 + $0xbf0] sm:$0xff]
    %v749 = vld [vmem:[#allocation2 + $0xbf8] sm:$0xff]
    %v750 = vld [vmem:[#allocation9] sm:$0xff]
    %v752 = vlaneseq
    %v753 = vshrl.u32 %v752, 7
    %v754 = vsub.s32 0, %v753
    %v755 = vrot.slane %v750, %v754
    %v756 = vlaneseq
    %v757 = vshrl.u32 %v756, 7
    %v758 = vsub.s32 1, %v757
    %v759 = vrot.slane %v750, %v758
    %v760 = vlaneseq
    %v761 = vshrl.u32 %v760, 7
    %v762 = vsub.s32 2, %v761
    %v763 = vrot.slane %v750, %v762
    %v764 = vlaneseq
    %v765 = vshrl.u32 %v764, 7
    %v766 = vsub.s32 3, %v765
    %v767 = vrot.slane %v750, %v766
    %v768 = vlaneseq
    %v769 = vshrl.u32 %v768, 7
    %v770 = vsub.s32 4, %v769
    %v771 = vrot.slane %v750, %v770
    %v772 = vlaneseq
    %v773 = vshrl.u32 %v772, 7
    %v774 = vsub.s32 5, %v773
    %v775 = vrot.slane %v750, %v774
    %v776 = vlaneseq
    %v777 = vshrl.u32 %v776, 7
    %v778 = vsub.s32 6, %v777
    %v779 = vrot.slane %v750, %v778
    %v780 = vlaneseq
    %v781 = vshrl.u32 %v780, 7
    %v782 = vsub.s32 7, %v781
    %v783 = vrot.slane %v750, %v782
    %792 = vmatprep.subr.bf16.mxu0 %v367
    %793 = vmatpush1.bf16.msra.mxu0 %v366
    %794 = vmatprep.subr.bf16.mxu0 %v375
    %795 = vmatpush1.bf16.msra.mxu0 %v374
    %796 = vmatprep.subr.bf16.mxu0 %v383
    %797 = vmatpush1.bf16.msra.mxu0 %v382
    %798 = vmatprep.subr.bf16.mxu0 %v391
    %799 = vmatpush1.bf16.msra.mxu0 %v390
    %800 = vmatprep.subr.bf16.mxu0 %v399
    %801 = vmatpush1.bf16.msra.mxu0 %v398
    %802 = vmatprep.subr.bf16.mxu0 %v407
    %803 = vmatpush1.bf16.msra.mxu0 %v406
    %804 = vmatprep.subr.bf16.mxu0 %v415
    %805 = vmatpush1.bf16.msra.mxu0 %v414
    %806 = vmatprep.subr.bf16.mxu0 %v423
    %807 = vmatpush1.bf16.msra.mxu0 %v422
    %808 = vmatprep.subr.bf16.mxu0 %v431
    %809 = vmatpush1.bf16.msra.mxu0 %v430
    %810 = vmatprep.subr.bf16.mxu0 %v439
    %811 = vmatpush1.bf16.msra.mxu0 %v438
    %812 = vmatprep.subr.bf16.mxu0 %v447
    %813 = vmatpush1.bf16.msra.mxu0 %v446
    %814 = vmatprep.subr.bf16.mxu0 %v455
    %815 = vmatpush1.bf16.msra.mxu0 %v454
    %816 = vmatprep.subr.bf16.mxu0 %v463
    %817 = vmatpush1.bf16.msra.mxu0 %v462
    %818 = vmatprep.subr.bf16.mxu0 %v471
    %819 = vmatpush1.bf16.msra.mxu0 %v470
    %820 = vmatprep.subr.bf16.mxu0 %v479
    %821 = vmatpush1.bf16.msra.mxu0 %v478
    %822 = vmatprep.subr.bf16.mxu0 %v487
    %823 = vmatpush1.bf16.msra.mxu0 %v486
    %824 = vmatprep.mubr.bf16.mxu0 %v354
    %825 = vmatmul.mubr.bf16.gmra.mrb[0].mxu0 %v353
    %v826 = vpop.f32.mrb[0].mxu0
    %v827 = vadd.f32 %v755, %v826
    %v828 = vpop.f32.mrb[0].mxu0
    %v829 = vadd.f32 %v759, %v828
    %v830 = vpop.f32.mrb[0].mxu0
    %v831 = vpop.f32.mrb[0].mxu0
    %832 = vdwg.mxu0
    %833 = vmatprep.subr.bf16.mxu0 %v495
    %834 = vmatpush1.bf16.msra.mxu0 %v494
    %835 = vmatprep.subr.bf16.mxu0 %v503
    %836 = vmatpush1.bf16.msra.mxu0 %v502
    %837 = vmatprep.subr.bf16.mxu0 %v511
    %838 = vmatpush1.bf16.msra.mxu0 %v510
    %839 = vmatprep.subr.bf16.mxu0 %v519
    %840 = vmatpush1.bf16.msra.mxu0 %v518
    %841 = vmatprep.subr.bf16.mxu0 %v527
    %842 = vmatpush1.bf16.msra.mxu0 %v526
    %843 = vmatprep.subr.bf16.mxu0 %v535
    %844 = vmatpush1.bf16.msra.mxu0 %v534
    %845 = vmatprep.subr.bf16.mxu0 %v543
    %846 = vmatpush1.bf16.msra.mxu0 %v542
    %847 = vmatprep.subr.bf16.mxu0 %v551
    %848 = vmatpush1.bf16.msra.mxu0 %v550
    %849 = vmatprep.subr.bf16.mxu0 %v559
    %850 = vmatpush1.bf16.msra.mxu0 %v558
    %851 = vmatprep.subr.bf16.mxu0 %v567
    %852 = vmatpush1.bf16.msra.mxu0 %v566
    %853 = vmatprep.subr.bf16.mxu0 %v575
    %854 = vmatpush1.bf16.msra.mxu0 %v574
    %855 = vmatprep.subr.bf16.mxu0 %v583
    %856 = vmatpush1.bf16.msra.mxu0 %v582
    %857 = vmatprep.subr.bf16.mxu0 %v591
    %858 = vmatpush1.bf16.msra.mxu0 %v590
    %859 = vmatprep.subr.bf16.mxu0 %v599
    %860 = vmatpush1.bf16.msra.mxu0 %v598
    %861 = vmatprep.subr.bf16.mxu0 %v607
    %862 = vmatpush1.bf16.msra.mxu0 %v606
    %863 = vmatprep.subr.bf16.mxu0 %v615
    %864 = vmatpush1.bf16.msra.mxu0 %v614
    %865 = vmatprep.mubr.bf16.mxu0 %v356
    %866 = vmatmul.mubr.bf16.gmra.mrb[0].mxu0 %v355
    %v867 = vpop.f32.mrb[0].mxu0
    %v868 = vadd.f32 %v827, %v867
    %v869 = vpop.f32.mrb[0].mxu0
    %v870 = vadd.f32 %v829, %v869
    %v871 = vpop.f32.mrb[0].mxu0
    %v872 = vpop.f32.mrb[0].mxu0
    %873 = vdwg.mxu0
    %874 = vmatprep.subr.bf16.mxu0 %v623
    %875 = vmatpush1.bf16.msra.mxu0 %v622
    %876 = vmatprep.subr.bf16.mxu0 %v631
    %877 = vmatpush1.bf16.msra.mxu0 %v630
    %878 = vmatprep.subr.bf16.mxu0 %v639
    %879 = vmatpush1.bf16.msra.mxu0 %v638
    %880 = vmatprep.subr.bf16.mxu0 %v647
    %881 = vmatpush1.bf16.msra.mxu0 %v646
    %882 = vmatprep.subr.bf16.mxu0 %v655
    %883 = vmatpush1.bf16.msra.mxu0 %v654
    %884 = vmatprep.subr.bf16.mxu0 %v663
    %885 = vmatpush1.bf16.msra.mxu0 %v662
    %886 = vmatprep.subr.bf16.mxu0 %v671
    %887 = vmatpush1.bf16.msra.mxu0 %v670
    %888 = vmatprep.subr.bf16.mxu0 %v679
    %889 = vmatpush1.bf16.msra.mxu0 %v678
    %890 = vmatprep.subr.bf16.mxu0 %v687
    %891 = vmatpush1.bf16.msra.mxu0 %v686
    %892 = vmatprep.subr.bf16.mxu0 %v695
    %893 = vmatpush1.bf16.msra.mxu0 %v694
    %894 = vmatprep.subr.bf16.mxu0 %v703
    %895 = vmatpush1.bf16.msra.mxu0 %v702
    %896 = vmatprep.subr.bf16.mxu0 %v711
    %897 = vmatpush1.bf16.msra.mxu0 %v710
    %898 = vmatprep.subr.bf16.mxu0 %v719
    %899 = vmatpush1.bf16.msra.mxu0 %v718
    %900 = vmatprep.subr.bf16.mxu0 %v727
    %901 = vmatpush1.bf16.msra.mxu0 %v726
    %902 = vmatprep.subr.bf16.mxu0 %v735
    %903 = vmatpush1.bf16.msra.mxu0 %v734
    %904 = vmatprep.subr.bf16.mxu0 %v743
    %905 = vmatpush1.bf16.msra.mxu0 %v742
    %906 = vmatprep.mubr.bf16.mxu0 %v358
    %907 = vmatmul.mubr.bf16.gmra.mrb[0].mxu0 %v357
    %v908 = vpop.f32.mrb[0].mxu0
    %v909 = vadd.f32 %v868, %v908
    %v910 = vpop.f32.mrb[0].mxu0
    %v911 = vadd.f32 %v870, %v910
    %v912 = vpop.f32.mrb[0].mxu0
    %v913 = vpop.f32.mrb[0].mxu0
    %914 = vdwg.mxu0
    %915 = vmatprep.subr.bf16.mxu0 %v369
    %916 = vmatpush1.bf16.msra.mxu0 %v368
    %917 = vmatprep.subr.bf16.mxu0 %v377
    %918 = vmatpush1.bf16.msra.mxu0 %v376
    %919 = vmatprep.subr.bf16.mxu0 %v385
    %920 = vmatpush1.bf16.msra.mxu0 %v384
    %921 = vmatprep.subr.bf16.mxu0 %v393
    %922 = vmatpush1.bf16.msra.mxu0 %v392
    %923 = vmatprep.subr.bf16.mxu0 %v401
    %924 = vmatpush1.bf16.msra.mxu0 %v400
    %925 = vmatprep.subr.bf16.mxu0 %v409
    %926 = vmatpush1.bf16.msra.mxu0 %v408
    %927 = vmatprep.subr.bf16.mxu0 %v417
    %928 = vmatpush1.bf16.msra.mxu0 %v416
    %929 = vmatprep.subr.bf16.mxu0 %v425
    %930 = vmatpush1.bf16.msra.mxu0 %v424
    %931 = vmatprep.subr.bf16.mxu0 %v433
    %932 = vmatpush1.bf16.msra.mxu0 %v432
    %933 = vmatprep.subr.bf16.mxu0 %v441
    %934 = vmatpush1.bf16.msra.mxu0 %v440
    %935 = vmatprep.subr.bf16.mxu0 %v449
    %936 = vmatpush1.bf16.msra.mxu0 %v448
    %937 = vmatprep.subr.bf16.mxu0 %v457
    %938 = vmatpush1.bf16.msra.mxu0 %v456
    %939 = vmatprep.subr.bf16.mxu0 %v465
    %940 = vmatpush1.bf16.msra.mxu0 %v464
    %941 = vmatprep.subr.bf16.mxu0 %v473
    %942 = vmatpush1.bf16.msra.mxu0 %v472
    %943 = vmatprep.subr.bf16.mxu0 %v481
    %944 = vmatpush1.bf16.msra.mxu0 %v480
    %945 = vmatprep.subr.bf16.mxu0 %v489
    %946 = vmatpush1.bf16.msra.mxu0 %v488
    %947 = vmatprep.mubr.bf16.mxu0 %v354
    %948 = vmatmul.mubr.bf16.gmra.mrb[0].mxu0 %v353
    %v949 = vpop.f32.mrb[0].mxu0
    %v950 = vadd.f32 %v763, %v949
    %v951 = vpop.f32.mrb[0].mxu0
    %v952 = vadd.f32 %v767, %v951
    %v953 = vpop.f32.mrb[0].mxu0
    %v954 = vpop.f32.mrb[0].mxu0
    %955 = vdwg.mxu0
    %956 = vmatprep.subr.bf16.mxu0 %v497
    %957 = vmatpush1.bf16.msra.mxu0 %v496
    %958 = vmatprep.subr.bf16.mxu0 %v505
    %959 = vmatpush1.bf16.msra.mxu0 %v504
    %960 = vmatprep.subr.bf16.mxu0 %v513
    %961 = vmatpush1.bf16.msra.mxu0 %v512
    %962 = vmatprep.subr.bf16.mxu0 %v521
    %963 = vmatpush1.bf16.msra.mxu0 %v520
    %964 = vmatprep.subr.bf16.mxu0 %v529
    %965 = vmatpush1.bf16.msra.mxu0 %v528
    %966 = vmatprep.subr.bf16.mxu0 %v537
    %967 = vmatpush1.bf16.msra.mxu0 %v536
    %968 = vmatprep.subr.bf16.mxu0 %v545
    %969 = vmatpush1.bf16.msra.mxu0 %v544
    %970 = vmatprep.subr.bf16.mxu0 %v553
    %971 = vmatpush1.bf16.msra.mxu0 %v552
    %972 = vmatprep.subr.bf16.mxu0 %v561
    %973 = vmatpush1.bf16.msra.mxu0 %v560
    %974 = vmatprep.subr.bf16.mxu0 %v569
    %975 = vmatpush1.bf16.msra.mxu0 %v568
    %976 = vmatprep.subr.bf16.mxu0 %v577
    %977 = vmatpush1.bf16.msra.mxu0 %v576
    %978 = vmatprep.subr.bf16.mxu0 %v585
    %979 = vmatpush1.bf16.msra.mxu0 %v584
    %980 = vmatprep.subr.bf16.mxu0 %v593
    %981 = vmatpush1.bf16.msra.mxu0 %v592
    %982 = vmatprep.subr.bf16.mxu0 %v601
    %983 = vmatpush1.bf16.msra.mxu0 %v600
    %984 = vmatprep.subr.bf16.mxu0 %v609
    %985 = vmatpush1.bf16.msra.mxu0 %v608
    %986 = vmatprep.subr.bf16.mxu0 %v617
    %987 = vmatpush1.bf16.msra.mxu0 %v616
    %988 = vmatprep.mubr.bf16.mxu0 %v356
    %989 = vmatmul.mubr.bf16.gmra.mrb[0].mxu0 %v355
    %v990 = vpop.f32.mrb[0].mxu0
    %v991 = vadd.f32 %v950, %v990
    %v992 = vpop.f32.mrb[0].mxu0
    %v993 = vadd.f32 %v952, %v992
    %v994 = vpop.f32.mrb[0].mxu0
    %v995 = vpop.f32.mrb[0].mxu0
    %996 = vdwg.mxu0
    %997 = vmatprep.subr.bf16.mxu0 %v625
    %998 = vmatpush1.bf16.msra.mxu0 %v624
    %999 = vmatprep.subr.bf16.mxu0 %v633
    %1000 = vmatpush1.bf16.msra.mxu0 %v632
    %1001 = vmatprep.subr.bf16.mxu0 %v641
    %1002 = vmatpush1.bf16.msra.mxu0 %v640
    %1003 = vmatprep.subr.bf16.mxu0 %v649
    %1004 = vmatpush1.bf16.msra.mxu0 %v648
    %1005 = vmatprep.subr.bf16.mxu0 %v657
    %1006 = vmatpush1.bf16.msra.mxu0 %v656
    %1007 = vmatprep.subr.bf16.mxu0 %v665
    %1008 = vmatpush1.bf16.msra.mxu0 %v664
    %1009 = vmatprep.subr.bf16.mxu0 %v673
    %1010 = vmatpush1.bf16.msra.mxu0 %v672
    %1011 = vmatprep.subr.bf16.mxu0 %v681
    %1012 = vmatpush1.bf16.msra.mxu0 %v680
    %1013 = vmatprep.subr.bf16.mxu0 %v689
    %1014 = vmatpush1.bf16.msra.mxu0 %v688
    %1015 = vmatprep.subr.bf16.mxu0 %v697
    %1016 = vmatpush1.bf16.msra.mxu0 %v696
    %1017 = vmatprep.subr.bf16.mxu0 %v705
    %1018 = vmatpush1.bf16.msra.mxu0 %v704
    %1019 = vmatprep.subr.bf16.mxu0 %v713
    %1020 = vmatpush1.bf16.msra.mxu0 %v712
    %1021 = vmatprep.subr.bf16.mxu0 %v721
    %1022 = vmatpush1.bf16.msra.mxu0 %v720
    %1023 = vmatprep.subr.bf16.mxu0 %v729
    %1024 = vmatpush1.bf16.msra.mxu0 %v728
    %1025 = vmatprep.subr.bf16.mxu0 %v737
    %1026 = vmatpush1.bf16.msra.mxu0 %v736
    %1027 = vmatprep.subr.bf16.mxu0 %v745
    %1028 = vmatpush1.bf16.msra.mxu0 %v744
    %1029 = vmatprep.mubr.bf16.mxu0 %v358
    %1030 = vmatmul.mubr.bf16.gmra.mrb[0].mxu0 %v357
    %v1031 = vpop.f32.mrb[0].mxu0
    %v1032 = vadd.f32 %v991, %v1031
    %v1033 = vpop.f32.mrb[0].mxu0
    %v1034 = vadd.f32 %v993, %v1033
    %v1035 = vpop.f32.mrb[0].mxu0
    %v1036 = vpop.f32.mrb[0].mxu0
    %1037 = vdwg.mxu0
    %1038 = vmatprep.subr.bf16.mxu0 %v371
    %1039 = vmatpush1.bf16.msra.mxu0 %v370
    %1040 = vmatprep.subr.bf16.mxu0 %v379
    %1041 = vmatpush1.bf16.msra.mxu0 %v378
    %1042 = vmatprep.subr.bf16.mxu0 %v387
    %1043 = vmatpush1.bf16.msra.mxu0 %v386
    %1044 = vmatprep.subr.bf16.mxu0 %v395
    %1045 = vmatpush1.bf16.msra.mxu0 %v394
    %1046 = vmatprep.subr.bf16.mxu0 %v403
    %1047 = vmatpush1.bf16.msra.mxu0 %v402
    %1048 = vmatprep.subr.bf16.mxu0 %v411
    %1049 = vmatpush1.bf16.msra.mxu0 %v410
    %1050 = vmatprep.subr.bf16.mxu0 %v419
    %1051 = vmatpush1.bf16.msra.mxu0 %v418
    %1052 = vmatprep.subr.bf16.mxu0 %v427
    %1053 = vmatpush1.bf16.msra.mxu0 %v426
    %1054 = vmatprep.subr.bf16.mxu0 %v435
    %1055 = vmatpush1.bf16.msra.mxu0 %v434
    %1056 = vmatprep.subr.bf16.mxu0 %v443
    %1057 = vmatpush1.bf16.msra.mxu0 %v442
    %1058 = vmatprep.subr.bf16.mxu0 %v451
    %1059 = vmatpush1.bf16.msra.mxu0 %v450
    %1060 = vmatprep.subr.bf16.mxu0 %v459
    %1061 = vmatpush1.bf16.msra.mxu0 %v458
    %1062 = vmatprep.subr.bf16.mxu0 %v467
    %1063 = vmatpush1.bf16.msra.mxu0 %v466
    %1064 = vmatprep.subr.bf16.mxu0 %v475
    %1065 = vmatpush1.bf16.msra.mxu0 %v474
    %1066 = vmatprep.subr.bf16.mxu0 %v483
    %1067 = vmatpush1.bf16.msra.mxu0 %v482
    %1068 = vmatprep.subr.bf16.mxu0 %v491
    %1069 = vmatpush1.bf16.msra.mxu0 %v490
    %1070 = vmatprep.mubr.bf16.mxu0 %v354
    %1071 = vmatmul.mubr.bf16.gmra.mrb[0].mxu0 %v353
    %v1072 = vpop.f32.mrb[0].mxu0
    %v1073 = vadd.f32 %v771, %v1072
    %v1074 = vpop.f32.mrb[0].mxu0
    %v1075 = vadd.f32 %v775, %v1074
    %v1076 = vpop.f32.mrb[0].mxu0
    %v1077 = vpop.f32.mrb[0].mxu0
    %1078 = vdwg.mxu0
    %1079 = vmatprep.subr.bf16.mxu0 %v499
    %1080 = vmatpush1.bf16.msra.mxu0 %v498
    %1081 = vmatprep.subr.bf16.mxu0 %v507
    %1082 = vmatpush1.bf16.msra.mxu0 %v506
    %1083 = vmatprep.subr.bf16.mxu0 %v515
    %1084 = vmatpush1.bf16.msra.mxu0 %v514
    %1085 = vmatprep.subr.bf16.mxu0 %v523
    %1086 = vmatpush1.bf16.msra.mxu0 %v522
    %1087 = vmatprep.subr.bf16.mxu0 %v531
    %1088 = vmatpush1.bf16.msra.mxu0 %v530
    %1089 = vmatprep.subr.bf16.mxu0 %v539
    %1090 = vmatpush1.bf16.msra.mxu0 %v538
    %1091 = vmatprep.subr.bf16.mxu0 %v547
    %1092 = vmatpush1.bf16.msra.mxu0 %v546
    %1093 = vmatprep.subr.bf16.mxu0 %v555
    %1094 = vmatpush1.bf16.msra.mxu0 %v554
    %1095 = vmatprep.subr.bf16.mxu0 %v563
    %1096 = vmatpush1.bf16.msra.mxu0 %v562
    %1097 = vmatprep.subr.bf16.mxu0 %v571
    %1098 = vmatpush1.bf16.msra.mxu0 %v570
    %1099 = vmatprep.subr.bf16.mxu0 %v579
    %1100 = vmatpush1.bf16.msra.mxu0 %v578
    %1101 = vmatprep.subr.bf16.mxu0 %v587
    %1102 = vmatpush1.bf16.msra.mxu0 %v586
    %1103 = vmatprep.subr.bf16.mxu0 %v595
    %1104 = vmatpush1.bf16.msra.mxu0 %v594
    %1105 = vmatprep.subr.bf16.mxu0 %v603
    %1106 = vmatpush1.bf16.msra.mxu0 %v602
    %1107 = vmatprep.subr.bf16.mxu0 %v611
    %1108 = vmatpush1.bf16.msra.mxu0 %v610
    %1109 = vmatprep.subr.bf16.mxu0 %v619
    %1110 = vmatpush1.bf16.msra.mxu0 %v618
    %1111 = vmatprep.mubr.bf16.mxu0 %v356
    %1112 = vmatmul.mubr.bf16.gmra.mrb[0].mxu0 %v355
    %v1113 = vpop.f32.mrb[0].mxu0
    %v1114 = vadd.f32 %v1073, %v1113
    %v1115 = vpop.f32.mrb[0].mxu0
    %v1116 = vadd.f32 %v1075, %v1115
    %v1117 = vpop.f32.mrb[0].mxu0
    %v1118 = vpop.f32.mrb[0].mxu0
    %1119 = vdwg.mxu0
    %1120 = vmatprep.subr.bf16.mxu0 %v627
    %1121 = vmatpush1.bf16.msra.mxu0 %v626
    %1122 = vmatprep.subr.bf16.mxu0 %v635
    %1123 = vmatpush1.bf16.msra.mxu0 %v634
    %1124 = vmatprep.subr.bf16.mxu0 %v643
    %1125 = vmatpush1.bf16.msra.mxu0 %v642
    %1126 = vmatprep.subr.bf16.mxu0 %v651
    %1127 = vmatpush1.bf16.msra.mxu0 %v650
    %1128 = vmatprep.subr.bf16.mxu0 %v659
    %1129 = vmatpush1.bf16.msra.mxu0 %v658
    %1130 = vmatprep.subr.bf16.mxu0 %v667
    %1131 = vmatpush1.bf16.msra.mxu0 %v666
    %1132 = vmatprep.subr.bf16.mxu0 %v675
    %1133 = vmatpush1.bf16.msra.mxu0 %v674
    %1134 = vmatprep.subr.bf16.mxu0 %v683
    %1135 = vmatpush1.bf16.msra.mxu0 %v682
    %1136 = vmatprep.subr.bf16.mxu0 %v691
    %1137 = vmatpush1.bf16.msra.mxu0 %v690
    %1138 = vmatprep.subr.bf16.mxu0 %v699
    %1139 = vmatpush1.bf16.msra.mxu0 %v698
    %1140 = vmatprep.subr.bf16.mxu0 %v707
    %1141 = vmatpush1.bf16.msra.mxu0 %v706
    %1142 = vmatprep.subr.bf16.mxu0 %v715
    %1143 = vmatpush1.bf16.msra.mxu0 %v714
    %1144 = vmatprep.subr.bf16.mxu0 %v723
    %1145 = vmatpush1.bf16.msra.mxu0 %v722
    %1146 = vmatprep.subr.bf16.mxu0 %v731
    %1147 = vmatpush1.bf16.msra.mxu0 %v730
    %1148 = vmatprep.subr.bf16.mxu0 %v739
    %1149 = vmatpush1.bf16.msra.mxu0 %v738
    %1150 = vmatprep.subr.bf16.mxu0 %v747
    %1151 = vmatpush1.bf16.msra.mxu0 %v746
    %1152 = vmatprep.mubr.bf16.mxu0 %v358
    %1153 = vmatmul.mubr.bf16.gmra.mrb[0].mxu0 %v357
    %v1154 = vpop.f32.mrb[0].mxu0
    %v1155 = vadd.f32 %v1114, %v1154
    %v1156 = vpop.f32.mrb[0].mxu0
    %v1157 = vadd.f32 %v1116, %v1156
    %v1158 = vpop.f32.mrb[0].mxu0
    %v1159 = vpop.f32.mrb[0].mxu0
    %1160 = vdwg.mxu0
    %1161 = vmatprep.subr.bf16.mxu0 %v373
    %1162 = vmatpush1.bf16.msra.mxu0 %v372
    %1163 = vmatprep.subr.bf16.mxu0 %v381
    %1164 = vmatpush1.bf16.msra.mxu0 %v380
    %1165 = vmatprep.subr.bf16.mxu0 %v389
    %1166 = vmatpush1.bf16.msra.mxu0 %v388
    %1167 = vmatprep.subr.bf16.mxu0 %v397
    %1168 = vmatpush1.bf16.msra.mxu0 %v396
    %1169 = vmatprep.subr.bf16.mxu0 %v405
    %1170 = vmatpush1.bf16.msra.mxu0 %v404
    %1171 = vmatprep.subr.bf16.mxu0 %v413
    %1172 = vmatpush1.bf16.msra.mxu0 %v412
    %1173 = vmatprep.subr.bf16.mxu0 %v421
    %1174 = vmatpush1.bf16.msra.mxu0 %v420
    %1175 = vmatprep.subr.bf16.mxu0 %v429
    %1176 = vmatpush1.bf16.msra.mxu0 %v428
    %1177 = vmatprep.subr.bf16.mxu0 %v437
    %1178 = vmatpush1.bf16.msra.mxu0 %v436
    %1179 = vmatprep.subr.bf16.mxu0 %v445
    %1180 = vmatpush1.bf16.msra.mxu0 %v444
    %1181 = vmatprep.subr.bf16.mxu0 %v453
    %1182 = vmatpush1.bf16.msra.mxu0 %v452
    %1183 = vmatprep.subr.bf16.mxu0 %v461
    %1184 = vmatpush1.bf16.msra.mxu0 %v460
    %1185 = vmatprep.subr.bf16.mxu0 %v469
    %1186 = vmatpush1.bf16.msra.mxu0 %v468
    %1187 = vmatprep.subr.bf16.mxu0 %v477
    %1188 = vmatpush1.bf16.msra.mxu0 %v476
    %1189 = vmatprep.subr.bf16.mxu0 %v485
    %1190 = vmatpush1.bf16.msra.mxu0 %v484
    %1191 = vmatprep.subr.bf16.mxu0 %v493
    %1192 = vmatpush1.bf16.msra.mxu0 %v492
    %1193 = vmatprep.mubr.bf16.mxu0 %v354
    %1194 = vmatmul.mubr.bf16.gmra.mrb[0].mxu0 %v353
    %v1195 = vpop.f32.mrb[0].mxu0
    %v1196 = vadd.f32 %v779, %v1195
    %v1197 = vpop.f32.mrb[0].mxu0
    %v1198 = vadd.f32 %v783, %v1197
    %v1199 = vpop.f32.mrb[0].mxu0
    %v1200 = vpop.f32.mrb[0].mxu0
    %1201 = vdwg.mxu0
    %1202 = vmatprep.subr.bf16.mxu0 %v501
    %1203 = vmatpush1.bf16.msra.mxu0 %v500
    %1204 = vmatprep.subr.bf16.mxu0 %v509
    %1205 = vmatpush1.bf16.msra.mxu0 %v508
    %1206 = vmatprep.subr.bf16.mxu0 %v517
    %1207 = vmatpush1.bf16.msra.mxu0 %v516
    %1208 = vmatprep.subr.bf16.mxu0 %v525
    %1209 = vmatpush1.bf16.msra.mxu0 %v524
    %1210 = vmatprep.subr.bf16.mxu0 %v533
    %1211 = vmatpush1.bf16.msra.mxu0 %v532
    %1212 = vmatprep.subr.bf16.mxu0 %v541
    %1213 = vmatpush1.bf16.msra.mxu0 %v540
    %1214 = vmatprep.subr.bf16.mxu0 %v549
    %1215 = vmatpush1.bf16.msra.mxu0 %v548
    %1216 = vmatprep.subr.bf16.mxu0 %v557
    %1217 = vmatpush1.bf16.msra.mxu0 %v556
    %1218 = vmatprep.subr.bf16.mxu0 %v565
    %1219 = vmatpush1.bf16.msra.mxu0 %v564
    %1220 = vmatprep.subr.bf16.mxu0 %v573
    %1221 = vmatpush1.bf16.msra.mxu0 %v572
    %1222 = vmatprep.subr.bf16.mxu0 %v581
    %1223 = vmatpush1.bf16.msra.mxu0 %v580
    %1224 = vmatprep.subr.bf16.mxu0 %v589
    %1225 = vmatpush1.bf16.msra.mxu0 %v588
    %1226 = vmatprep.subr.bf16.mxu0 %v597
    %1227 = vmatpush1.bf16.msra.mxu0 %v596
    %1228 = vmatprep.subr.bf16.mxu0 %v605
    %1229 = vmatpush1.bf16.msra.mxu0 %v604
    %1230 = vmatprep.subr.bf16.mxu0 %v613
    %1231 = vmatpush1.bf16.msra.mxu0 %v612
    %1232 = vmatprep.subr.bf16.mxu0 %v621
    %1233 = vmatpush1.bf16.msra.mxu0 %v620
    %1234 = vmatprep.mubr.bf16.mxu0 %v356
    %1235 = vmatmul.mubr.bf16.gmra.mrb[0].mxu0 %v355
    %v1236 = vpop.f32.mrb[0].mxu0
    %v1237 = vadd.f32 %v1196, %v1236
    %v1238 = vpop.f32.mrb[0].mxu0
    %v1239 = vadd.f32 %v1198, %v1238
    %v1240 = vpop.f32.mrb[0].mxu0
    %v1241 = vpop.f32.mrb[0].mxu0
    %1242 = vdwg.mxu0
    %1243 = vmatprep.subr.bf16.mxu0 %v629
    %1244 = vmatpush1.bf16.msra.mxu0 %v628
    %1245 = vmatprep.subr.bf16.mxu0 %v637
    %1246 = vmatpush1.bf16.msra.mxu0 %v636
    %1247 = vmatprep.subr.bf16.mxu0 %v645
    %1248 = vmatpush1.bf16.msra.mxu0 %v644
    %1249 = vmatprep.subr.bf16.mxu0 %v653
    %1250 = vmatpush1.bf16.msra.mxu0 %v652
    %1251 = vmatprep.subr.bf16.mxu0 %v661
    %1252 = vmatpush1.bf16.msra.mxu0 %v660
    %1253 = vmatprep.subr.bf16.mxu0 %v669
    %1254 = vmatpush1.bf16.msra.mxu0 %v668
    %1255 = vmatprep.subr.bf16.mxu0 %v677
    %1256 = vmatpush1.bf16.msra.mxu0 %v676
    %1257 = vmatprep.subr.bf16.mxu0 %v685
    %1258 = vmatpush1.bf16.msra.mxu0 %v684
    %1259 = vmatprep.subr.bf16.mxu0 %v693
    %1260 = vmatpush1.bf16.msra.mxu0 %v692
    %1261 = vmatprep.subr.bf16.mxu0 %v701
    %1262 = vmatpush1.bf16.msra.mxu0 %v700
    %1263 = vmatprep.subr.bf16.mxu0 %v709
    %1264 = vmatpush1.bf16.msra.mxu0 %v708
    %1265 = vmatprep.subr.bf16.mxu0 %v717
    %1266 = vmatpush1.bf16.msra.mxu0 %v716
    %1267 = vmatprep.subr.bf16.mxu0 %v725
    %1268 = vmatpush1.bf16.msra.mxu0 %v724
    %1269 = vmatprep.subr.bf16.mxu0 %v733
    %1270 = vmatpush1.bf16.msra.mxu0 %v732
    %1271 = vmatprep.subr.bf16.mxu0 %v741
    %1272 = vmatpush1.bf16.msra.mxu0 %v740
    %1273 = vmatprep.subr.bf16.mxu0 %v749
    %1274 = vmatpush1.bf16.msra.mxu0 %v748
    %1275 = vmatprep.mubr.bf16.mxu0 %v358
    %1276 = vmatmul.mubr.bf16.gmra.mrb[0].mxu0 %v357
    %v1277 = vpop.f32.mrb[0].mxu0
    %v1278 = vadd.f32 %v1237, %v1277
    %v1279 = vpop.f32.mrb[0].mxu0
    %v1280 = vadd.f32 %v1239, %v1279
    %v1281 = vpop.f32.mrb[0].mxu0
    %v1282 = vpop.f32.mrb[0].mxu0
    %1283 = vdwg.mxu0
    %vm1284 = vcmp.ge.f32.partialorder %v909, 0.0
    %vm1285 = vcmp.ge.f32.partialorder %v911, 0.0
    %vm1286 = vcmp.ge.f32.partialorder %v1032, 0.0
    %vm1287 = vcmp.ge.f32.partialorder %v1034, 0.0
    %vm1288 = vcmp.ge.f32.partialorder %v1155, 0.0
    %vm1289 = vcmp.ge.f32.partialorder %v1157, 0.0
    %vm1290 = vcmp.ge.f32.partialorder %v1278, 0.0
    %vm1291 = vcmp.ge.f32.partialorder %v1280, 0.0
    %v1292 = vmul.f32 %v909, 0.2
    %v1293 = vmul.f32 %v911, 0.2
    %v1294 = vmul.f32 %v1032, 0.2
    %v1295 = vmul.f32 %v1034, 0.2
    %v1296 = vmul.f32 %v1155, 0.2
    %v1297 = vmul.f32 %v1157, 0.2
    %v1298 = vmul.f32 %v1278, 0.2
    %v1299 = vmul.f32 %v1280, 0.2
    %v1300 = vsel %vm1284, %v909, %v1292
    %v1301 = vsel %vm1285, %v911, %v1293
    %v1302 = vsel %vm1286, %v1032, %v1294
    %v1303 = vsel %vm1287, %v1034, %v1295
    %v1304 = vsel %vm1288, %v1155, %v1296
    %v1305 = vsel %vm1289, %v1157, %v1297
    %v1306 = vsel %vm1290, %v1278, %v1298
    %v1307 = vsel %vm1291, %v1280, %v1299
    %v1308 = vpack.c.bf16 %v1300, %v1300
    %v1309 = vpack.c.bf16 %v1301, %v1301
    %v1310 = vpack.c.bf16 %v1302, %v1302
    %v1311 = vpack.c.bf16 %v1303, %v1303
    %v1312 = vpack.c.bf16 %v1304, %v1304
    %v1313 = vpack.c.bf16 %v1305, %v1305
    %v1314 = vpack.c.bf16 %v1306, %v1306
    %v1315 = vpack.c.bf16 %v1307, %v1307
    // Predicated region
    $region62: #{conv_autoencoder_forward.1} parent=1 // pred_check
      %p1316 = pneg %p104
    $region63: #{conv_autoencoder_forward.1} parent=1 // pred_check_branch
      %1318 = sbr.rel (%p1316) target = $region65
    $region64: #{conv_autoencoder_forward.1} parent=1 // pred_region
      %s1319 = scalar_lea.sflag [#allocation8], 1
      %s1320 = smul.u32 4, 128
      %s1321 = smul.u32 %s1320, 4
      %s1322 = sshll.u32 %s1321, 4
      %1323 = dma.done %s1319, %s1322
    $region65: #{conv_autoencoder_forward.1} parent=1 // pred_fallthru
      _
    %v1324 = vld [vmem:[#allocation3] sm:$0xff]
    %v1325 = vld [vmem:[#allocation3 + $0x8] sm:$0xff]
    %v1326 = vld [vmem:[#allocation3 + $0x10] sm:$0xff]
    %v1327 = vld [vmem:[#allocation3 + $0x18] sm:$0xff]
    %v1328 = vld [vmem:[#allocation3 + $0x20] sm:$0xff]
    %v1329 = vld [vmem:[#allocation3 + $0x28] sm:$0xff]
    %v1330 = vld [vmem:[#allocation3 + $0x30] sm:$0xff]
    %v1331 = vld [vmem:[#allocation3 + $0x38] sm:$0xff]
    %v1332 = vld [vmem:[#allocation3 + $0x40] sm:$0xff]
    %v1333 = vld [vmem:[#allocation3 + $0x48] sm:$0xff]
    %v1334 = vld [vmem:[#allocation3 + $0x50] sm:$0xff]
    %v1335 = vld [vmem:[#allocation3 + $0x58] sm:$0xff]
    %v1336 = vld [vmem:[#allocation3 + $0x60] sm:$0xff]
    %v1337 = vld [vmem:[#allocation3 + $0x68] sm:$0xff]
    %v1338 = vld [vmem:[#allocation3 + $0x70] sm:$0xff]
    %v1339 = vld [vmem:[#allocation3 + $0x78] sm:$0xff]
    %v1340 = vld [vmem:[#allocation3 + $0x80] sm:$0xff]
    %v1341 = vld [vmem:[#allocation3 + $0x88] sm:$0xff]
    %v1342 = vld [vmem:[#allocation3 + $0x90] sm:$0xff]
    %v1343 = vld [vmem:[#allocation3 + $0x98] sm:$0xff]
    %v1344 = vld [vmem:[#allocation3 + $0xa0] sm:$0xff]
    %v1345 = vld [vmem:[#allocation3 + $0xa8] sm:$0xff]
    %v1346 = vld [vmem:[#allocation3 + $0xb0] sm:$0xff]
    %v1347 = vld [vmem:[#allocation3 + $0xb8] sm:$0xff]
    %v1348 = vld [vmem:[#allocation3 + $0xc0] sm:$0xff]
    %v1349 = vld [vmem:[#allocation3 + $0xc8] sm:$0xff]
    %v1350 = vld [vmem:[#allocation3 + $0xd0] sm:$0xff]
    %v1351 = vld [vmem:[#allocation3 + $0xd8] sm:$0xff]
    %v1352 = vld [vmem:[#allocation3 + $0xe0] sm:$0xff]
    %v1353 = vld [vmem:[#allocation3 + $0xe8] sm:$0xff]
    %v1354 = vld [vmem:[#allocation3 + $0xf0] sm:$0xff]
    %v1355 = vld [vmem:[#allocation3 + $0xf8] sm:$0xff]
    %v1356 = vld [vmem:[#allocation3 + $0x100] sm:$0xff]
    %v1357 = vld [vmem:[#allocation3 + $0x108] sm:$0xff]
    %v1358 = vld [vmem:[#allocation3 + $0x110] sm:$0xff]
    %v1359 = vld [vmem:[#allocation3 + $0x118] sm:$0xff]
    %v1360 = vld [vmem:[#allocation3 + $0x120] sm:$0xff]
    %v1361 = vld [vmem:[#allocation3 + $0x128] sm:$0xff]
    %v1362 = vld [vmem:[#allocation3 + $0x130] sm:$0xff]
    %v1363 = vld [vmem:[#allocation3 + $0x138] sm:$0xff]
    %v1364 = vld [vmem:[#allocation3 + $0x140] sm:$0xff]
    %v1365 = vld [vmem:[#allocation3 + $0x148] sm:$0xff]
    %v1366 = vld [vmem:[#allocation3 + $0x150] sm:$0xff]
    %v1367 = vld [vmem:[#allocation3 + $0x158] sm:$0xff]
    %v1368 = vld [vmem:[#allocation3 + $0x160] sm:$0xff]
    %v1369 = vld [vmem:[#allocation3 + $0x168] sm:$0xff]
    %v1370 = vld [vmem:[#allocation3 + $0x170] sm:$0xff]
    %v1371 = vld [vmem:[#allocation3 + $0x178] sm:$0xff]
    %v1372 = vld [vmem:[#allocation3 + $0x180] sm:$0xff]
    %v1373 = vld [vmem:[#allocation3 + $0x188] sm:$0xff]
    %v1374 = vld [vmem:[#allocation3 + $0x190] sm:$0xff]
    %v1375 = vld [vmem:[#allocation3 + $0x198] sm:$0xff]
    %v1376 = vld [vmem:[#allocation3 + $0x1a0] sm:$0xff]
    %v1377 = vld [vmem:[#allocation3 + $0x1a8] sm:$0xff]
    %v1378 = vld [vmem:[#allocation3 + $0x1b0] sm:$0xff]
    %v1379 = vld [vmem:[#allocation3 + $0x1b8] sm:$0xff]
    %v1380 = vld [vmem:[#allocation3 + $0x1c0] sm:$0xff]
    %v1381 = vld [vmem:[#allocation3 + $0x1c8] sm:$0xff]
    %v1382 = vld [vmem:[#allocation3 + $0x1d0] sm:$0xff]
    %v1383 = vld [vmem:[#allocation3 + $0x1d8] sm:$0xff]
    %v1384 = vld [vmem:[#allocation3 + $0x1e0] sm:$0xff]
    %v1385 = vld [vmem:[#allocation3 + $0x1e8] sm:$0xff]
    %v1386 = vld [vmem:[#allocation3 + $0x1f0] sm:$0xff]
    %v1387 = vld [vmem:[#allocation3 + $0x1f8] sm:$0xff]
    %v1388 = vld [vmem:[#allocation3 + $0x200] sm:$0xff]
    %v1389 = vld [vmem:[#allocation3 + $0x208] sm:$0xff]
    %v1390 = vld [vmem:[#allocation3 + $0x210] sm:$0xff]
    %v1391 = vld [vmem:[#allocation3 + $0x218] sm:$0xff]
    %v1392 = vld [vmem:[#allocation3 + $0x220] sm:$0xff]
    %v1393 = vld [vmem:[#allocation3 + $0x228] sm:$0xff]
    %v1394 = vld [vmem:[#allocation3 + $0x230] sm:$0xff]
    %v1395 = vld [vmem:[#allocation3 + $0x238] sm:$0xff]
    %v1396 = vld [vmem:[#allocation3 + $0x240] sm:$0xff]
    %v1397 = vld [vmem:[#allocation3 + $0x248] sm:$0xff]
    %v1398 = vld [vmem:[#allocation3 + $0x250] sm:$0xff]
    %v1399 = vld [vmem:[#allocation3 + $0x258] sm:$0xff]
    %v1400 = vld [vmem:[#allocation3 + $0x260] sm:$0xff]
    %v1401 = vld [vmem:[#allocation3 + $0x268] sm:$0xff]
    %v1402 = vld [vmem:[#allocation3 + $0x270] sm:$0xff]
    %v1403 = vld [vmem:[#allocation3 + $0x278] sm:$0xff]
    %v1404 = vld [vmem:[#allocation3 + $0x280] sm:$0xff]
    %v1405 = vld [vmem:[#allocation3 + $0x288] sm:$0xff]
    %v1406 = vld [vmem:[#allocation3 + $0x290] sm:$0xff]
    %v1407 = vld [vmem:[#allocation3 + $0x298] sm:$0xff]
    %v1408 = vld [vmem:[#allocation3 + $0x2a0] sm:$0xff]
    %v1409 = vld [vmem:[#allocation3 + $0x2a8] sm:$0xff]
    %v1410 = vld [vmem:[#allocation3 + $0x2b0] sm:$0xff]
    %v1411 = vld [vmem:[#allocation3 + $0x2b8] sm:$0xff]
    %v1412 = vld [vmem:[#allocation3 + $0x2c0] sm:$0xff]
    %v1413 = vld [vmem:[#allocation3 + $0x2c8] sm:$0xff]
    %v1414 = vld [vmem:[#allocation3 + $0x2d0] sm:$0xff]
    %v1415 = vld [vmem:[#allocation3 + $0x2d8] sm:$0xff]
    %v1416 = vld [vmem:[#allocation3 + $0x2e0] sm:$0xff]
    %v1417 = vld [vmem:[#allocation3 + $0x2e8] sm:$0xff]
    %v1418 = vld [vmem:[#allocation3 + $0x2f0] sm:$0xff]
    %v1419 = vld [vmem:[#allocation3 + $0x2f8] sm:$0xff]
    %v1420 = vld [vmem:[#allocation3 + $0x300] sm:$0xff]
    %v1421 = vld [vmem:[#allocation3 + $0x308] sm:$0xff]
    %v1422 = vld [vmem:[#allocation3 + $0x310] sm:$0xff]
    %v1423 = vld [vmem:[#allocation3 + $0x318] sm:$0xff]
    %v1424 = vld [vmem:[#allocation3 + $0x320] sm:$0xff]
    %v1425 = vld [vmem:[#allocation3 + $0x328] sm:$0xff]
    %v1426 = vld [vmem:[#allocation3 + $0x330] sm:$0xff]
    %v1427 = vld [vmem:[#allocation3 + $0x338] sm:$0xff]
    %v1428 = vld [vmem:[#allocation3 + $0x340] sm:$0xff]
    %v1429 = vld [vmem:[#allocation3 + $0x348] sm:$0xff]
    %v1430 = vld [vmem:[#allocation3 + $0x350] sm:$0xff]
    %v1431 = vld [vmem:[#allocation3 + $0x358] sm:$0xff]
    %v1432 = vld [vmem:[#allocation3 + $0x360] sm:$0xff]
    %v1433 = vld [vmem:[#allocation3 + $0x368] sm:$0xff]
    %v1434 = vld [vmem:[#allocation3 + $0x370] sm:$0xff]
    %v1435 = vld [vmem:[#allocation3 + $0x378] sm:$0xff]
    %v1436 = vld [vmem:[#allocation3 + $0x380] sm:$0xff]
    %v1437 = vld [vmem:[#allocation3 + $0x388] sm:$0xff]
    %v1438 = vld [vmem:[#allocation3 + $0x390] sm:$0xff]
    %v1439 = vld [vmem:[#allocation3 + $0x398] sm:$0xff]
    %v1440 = vld [vmem:[#allocation3 + $0x3a0] sm:$0xff]
    %v1441 = vld [vmem:[#allocation3 + $0x3a8] sm:$0xff]
    %v1442 = vld [vmem:[#allocation3 + $0x3b0] sm:$0xff]
    %v1443 = vld [vmem:[#allocation3 + $0x3b8] sm:$0xff]
    %v1444 = vld [vmem:[#allocation3 + $0x3c0] sm:$0xff]
    %v1445 = vld [vmem:[#allocation3 + $0x3c8] sm:$0xff]
    %v1446 = vld [vmem:[#allocation3 + $0x3d0] sm:$0xff]
    %v1447 = vld [vmem:[#allocation3 + $0x3d8] sm:$0xff]
    %v1448 = vld [vmem:[#allocation3 + $0x3e0] sm:$0xff]
    %v1449 = vld [vmem:[#allocation3 + $0x3e8] sm:$0xff]
    %v1450 = vld [vmem:[#allocation3 + $0x3f0] sm:$0xff]
    %v1451 = vld [vmem:[#allocation3 + $0x3f8] sm:$0xff]
    %v1452 = vld [vmem:[#allocation3 + $0x400] sm:$0xff]
    %v1453 = vld [vmem:[#allocation3 + $0x408] sm:$0xff]
    %v1454 = vld [vmem:[#allocation3 + $0x410] sm:$0xff]
    %v1455 = vld [vmem:[#allocation3 + $0x418] sm:$0xff]
    %v1456 = vld [vmem:[#allocation3 + $0x420] sm:$0xff]
    %v1457 = vld [vmem:[#allocation3 + $0x428] sm:$0xff]
    %v1458 = vld [vmem:[#allocation3 + $0x430] sm:$0xff]
    %v1459 = vld [vmem:[#allocation3 + $0x438] sm:$0xff]
    %v1460 = vld [vmem:[#allocation3 + $0x440] sm:$0xff]
    %v1461 = vld [vmem:[#allocation3 + $0x448] sm:$0xff]
    %v1462 = vld [vmem:[#allocation3 + $0x450] sm:$0xff]
    %v1463 = vld [vmem:[#allocation3 + $0x458] sm:$0xff]
    %v1464 = vld [vmem:[#allocation3 + $0x460] sm:$0xff]
    %v1465 = vld [vmem:[#allocation3 + $0x468] sm:$0xff]
    %v1466 = vld [vmem:[#allocation3 + $0x470] sm:$0xff]
    %v1467 = vld [vmem:[#allocation3 + $0x478] sm:$0xff]
    %v1468 = vld [vmem:[#allocation3 + $0x480] sm:$0xff]
    %v1469 = vld [vmem:[#allocation3 + $0x488] sm:$0xff]
    %v1470 = vld [vmem:[#allocation3 + $0x490] sm:$0xff]
    %v1471 = vld [vmem:[#allocation3 + $0x498] sm:$0xff]
    %v1472 = vld [vmem:[#allocation3 + $0x4a0] sm:$0xff]
    %v1473 = vld [vmem:[#allocation3 + $0x4a8] sm:$0xff]
    %v1474 = vld [vmem:[#allocation3 + $0x4b0] sm:$0xff]
    %v1475 = vld [vmem:[#allocation3 + $0x4b8] sm:$0xff]
    %v1476 = vld [vmem:[#allocation3 + $0x4c0] sm:$0xff]
    %v1477 = vld [vmem:[#allocation3 + $0x4c8] sm:$0xff]
    %v1478 = vld [vmem:[#allocation3 + $0x4d0] sm:$0xff]
    %v1479 = vld [vmem:[#allocation3 + $0x4d8] sm:$0xff]
    %v1480 = vld [vmem:[#allocation3 + $0x4e0] sm:$0xff]
    %v1481 = vld [vmem:[#allocation3 + $0x4e8] sm:$0xff]
    %v1482 = vld [vmem:[#allocation3 + $0x4f0] sm:$0xff]
    %v1483 = vld [vmem:[#allocation3 + $0x4f8] sm:$0xff]
    %v1484 = vld [vmem:[#allocation3 + $0x500] sm:$0xff]
    %v1485 = vld [vmem:[#allocation3 + $0x508] sm:$0xff]
    %v1486 = vld [vmem:[#allocation3 + $0x510] sm:$0xff]
    %v1487 = vld [vmem:[#allocation3 + $0x518] sm:$0xff]
    %v1488 = vld [vmem:[#allocation3 + $0x520] sm:$0xff]
    %v1489 = vld [vmem:[#allocation3 + $0x528] sm:$0xff]
    %v1490 = vld [vmem:[#allocation3 + $0x530] sm:$0xff]
    %v1491 = vld [vmem:[#allocation3 + $0x538] sm:$0xff]
    %v1492 = vld [vmem:[#allocation3 + $0x540] sm:$0xff]
    %v1493 = vld [vmem:[#allocation3 + $0x548] sm:$0xff]
    %v1494 = vld [vmem:[#allocation3 + $0x550] sm:$0xff]
    %v1495 = vld [vmem:[#allocation3 + $0x558] sm:$0xff]
    %v1496 = vld [vmem:[#allocation3 + $0x560] sm:$0xff]
    %v1497 = vld [vmem:[#allocation3 + $0x568] sm:$0xff]
    %v1498 = vld [vmem:[#allocation3 + $0x570] sm:$0xff]
    %v1499 = vld [vmem:[#allocation3 + $0x578] sm:$0xff]
    %v1500 = vld [vmem:[#allocation3 + $0x580] sm:$0xff]
    %v1501 = vld [vmem:[#allocation3 + $0x588] sm:$0xff]
    %v1502 = vld [vmem:[#allocation3 + $0x590] sm:$0xff]
    %v1503 = vld [vmem:[#allocation3 + $0x598] sm:$0xff]
    %v1504 = vld [vmem:[#allocation3 + $0x5a0] sm:$0xff]
    %v1505 = vld [vmem:[#allocation3 + $0x5a8] sm:$0xff]
    %v1506 = vld [vmem:[#allocation3 + $0x5b0] sm:$0xff]
    %v1507 = vld [vmem:[#allocation3 + $0x5b8] sm:$0xff]
    %v1508 = vld [vmem:[#allocation3 + $0x5c0] sm:$0xff]
    %v1509 = vld [vmem:[#allocation3 + $0x5c8] sm:$0xff]
    %v1510 = vld [vmem:[#allocation3 + $0x5d0] sm:$0xff]
    %v1511 = vld [vmem:[#allocation3 + $0x5d8] sm:$0xff]
    %v1512 = vld [vmem:[#allocation3 + $0x5e0] sm:$0xff]
    %v1513 = vld [vmem:[#allocation3 + $0x5e8] sm:$0xff]
    %v1514 = vld [vmem:[#allocation3 + $0x5f0] sm:$0xff]
    %v1515 = vld [vmem:[#allocation3 + $0x5f8] sm:$0xff]
    %v1516 = vld [vmem:[#allocation3 + $0x600] sm:$0xff]
    %v1517 = vld [vmem:[#allocation3 + $0x608] sm:$0xff]
    %v1518 = vld [vmem:[#allocation3 + $0x610] sm:$0xff]
    %v1519 = vld [vmem:[#allocation3 + $0x618] sm:$0xff]
    %v1520 = vld [vmem:[#allocation3 + $0x620] sm:$0xff]
    %v1521 = vld [vmem:[#allocation3 + $0x628] sm:$0xff]
    %v1522 = vld [vmem:[#allocation3 + $0x630] sm:$0xff]
    %v1523 = vld [vmem:[#allocation3 + $0x638] sm:$0xff]
    %v1524 = vld [vmem:[#allocation3 + $0x640] sm:$0xff]
    %v1525 = vld [vmem:[#allocation3 + $0x648] sm:$0xff]
    %v1526 = vld [vmem:[#allocation3 + $0x650] sm:$0xff]
    %v1527 = vld [vmem:[#allocation3 + $0x658] sm:$0xff]
    %v1528 = vld [vmem:[#allocation3 + $0x660] sm:$0xff]
    %v1529 = vld [vmem:[#allocation3 + $0x668] sm:$0xff]
    %v1530 = vld [vmem:[#allocation3 + $0x670] sm:$0xff]
    %v1531 = vld [vmem:[#allocation3 + $0x678] sm:$0xff]
    %v1532 = vld [vmem:[#allocation3 + $0x680] sm:$0xff]
    %v1533 = vld [vmem:[#allocation3 + $0x688] sm:$0xff]
    %v1534 = vld [vmem:[#allocation3 + $0x690] sm:$0xff]
    %v1535 = vld [vmem:[#allocation3 + $0x698] sm:$0xff]
    %v1536 = vld [vmem:[#allocation3 + $0x6a0] sm:$0xff]
    %v1537 = vld [vmem:[#allocation3 + $0x6a8] sm:$0xff]
    %v1538 = vld [vmem:[#allocation3 + $0x6b0] sm:$0xff]
    %v1539 = vld [vmem:[#allocation3 + $0x6b8] sm:$0xff]
    %v1540 = vld [vmem:[#allocation3 + $0x6c0] sm:$0xff]
    %v1541 = vld [vmem:[#allocation3 + $0x6c8] sm:$0xff]
    %v1542 = vld [vmem:[#allocation3 + $0x6d0] sm:$0xff]
    %v1543 = vld [vmem:[#allocation3 + $0x6d8] sm:$0xff]
    %v1544 = vld [vmem:[#allocation3 + $0x6e0] sm:$0xff]
    %v1545 = vld [vmem:[#allocation3 + $0x6e8] sm:$0xff]
    %v1546 = vld [vmem:[#allocation3 + $0x6f0] sm:$0xff]
    %v1547 = vld [vmem:[#allocation3 + $0x6f8] sm:$0xff]
    %v1548 = vld [vmem:[#allocation3 + $0x700] sm:$0xff]
    %v1549 = vld [vmem:[#allocation3 + $0x708] sm:$0xff]
    %v1550 = vld [vmem:[#allocation3 + $0x710] sm:$0xff]
    %v1551 = vld [vmem:[#allocation3 + $0x718] sm:$0xff]
    %v1552 = vld [vmem:[#allocation3 + $0x720] sm:$0xff]
    %v1553 = vld [vmem:[#allocation3 + $0x728] sm:$0xff]
    %v1554 = vld [vmem:[#allocation3 + $0x730] sm:$0xff]
    %v1555 = vld [vmem:[#allocation3 + $0x738] sm:$0xff]
    %v1556 = vld [vmem:[#allocation3 + $0x740] sm:$0xff]
    %v1557 = vld [vmem:[#allocation3 + $0x748] sm:$0xff]
    %v1558 = vld [vmem:[#allocation3 + $0x750] sm:$0xff]
    %v1559 = vld [vmem:[#allocation3 + $0x758] sm:$0xff]
    %v1560 = vld [vmem:[#allocation3 + $0x760] sm:$0xff]
    %v1561 = vld [vmem:[#allocation3 + $0x768] sm:$0xff]
    %v1562 = vld [vmem:[#allocation3 + $0x770] sm:$0xff]
    %v1563 = vld [vmem:[#allocation3 + $0x778] sm:$0xff]
    %v1564 = vld [vmem:[#allocation3 + $0x780] sm:$0xff]
    %v1565 = vld [vmem:[#allocation3 + $0x788] sm:$0xff]
    %v1566 = vld [vmem:[#allocation3 + $0x790] sm:$0xff]
    %v1567 = vld [vmem:[#allocation3 + $0x798] sm:$0xff]
    %v1568 = vld [vmem:[#allocation3 + $0x7a0] sm:$0xff]
    %v1569 = vld [vmem:[#allocation3 + $0x7a8] sm:$0xff]
    %v1570 = vld [vmem:[#allocation3 + $0x7b0] sm:$0xff]
    %v1571 = vld [vmem:[#allocation3 + $0x7b8] sm:$0xff]
    %v1572 = vld [vmem:[#allocation3 + $0x7c0] sm:$0xff]
    %v1573 = vld [vmem:[#allocation3 + $0x7c8] sm:$0xff]
    %v1574 = vld [vmem:[#allocation3 + $0x7d0] sm:$0xff]
    %v1575 = vld [vmem:[#allocation3 + $0x7d8] sm:$0xff]
    %v1576 = vld [vmem:[#allocation3 + $0x7e0] sm:$0xff]
    %v1577 = vld [vmem:[#allocation3 + $0x7e8] sm:$0xff]
    %v1578 = vld [vmem:[#allocation3 + $0x7f0] sm:$0xff]
    %v1579 = vld [vmem:[#allocation3 + $0x7f8] sm:$0xff]
    %v1580 = vld [vmem:[#allocation11] sm:$0xf]
    %v1582 = vlaneseq
    %v1583 = vshrl.u32 %v1582, 7
    %v1584 = vsub.s32 0, %v1583
    %v1585 = vrot.slane %v1580, %v1584
    %v1586 = vlaneseq
    %v1587 = vshrl.u32 %v1586, 7
    %v1588 = vsub.s32 1, %v1587
    %v1589 = vrot.slane %v1580, %v1588
    %v1590 = vlaneseq
    %v1591 = vshrl.u32 %v1590, 7
    %v1592 = vsub.s32 2, %v1591
    %v1593 = vrot.slane %v1580, %v1592
    %v1594 = vlaneseq
    %v1595 = vshrl.u32 %v1594, 7
    %v1596 = vsub.s32 3, %v1595
    %v1597 = vrot.slane %v1580, %v1596
    %1602 = vmatprep.subr.bf16.mxu0 %v1325
    %1603 = vmatpush1.bf16.msra.mxu0 %v1324
    %1604 = vmatprep.subr.bf16.mxu0 %v1329
    %1605 = vmatpush1.bf16.msra.mxu0 %v1328
    %1606 = vmatprep.subr.bf16.mxu0 %v1333
    %1607 = vmatpush1.bf16.msra.mxu0 %v1332
    %1608 = vmatprep.subr.bf16.mxu0 %v1337
    %1609 = vmatpush1.bf16.msra.mxu0 %v1336
    %1610 = vmatprep.subr.bf16.mxu0 %v1341
    %1611 = vmatpush1.bf16.msra.mxu0 %v1340
    %1612 = vmatprep.subr.bf16.mxu0 %v1345
    %1613 = vmatpush1.bf16.msra.mxu0 %v1344
    %1614 = vmatprep.subr.bf16.mxu0 %v1349
    %1615 = vmatpush1.bf16.msra.mxu0 %v1348
    %1616 = vmatprep.subr.bf16.mxu0 %v1353
    %1617 = vmatpush1.bf16.msra.mxu0 %v1352
    %1618 = vmatprep.subr.bf16.mxu0 %v1357
    %1619 = vmatpush1.bf16.msra.mxu0 %v1356
    %1620 = vmatprep.subr.bf16.mxu0 %v1361
    %1621 = vmatpush1.bf16.msra.mxu0 %v1360
    %1622 = vmatprep.subr.bf16.mxu0 %v1365
    %1623 = vmatpush1.bf16.msra.mxu0 %v1364
    %1624 = vmatprep.subr.bf16.mxu0 %v1369
    %1625 = vmatpush1.bf16.msra.mxu0 %v1368
    %1626 = vmatprep.subr.bf16.mxu0 %v1373
    %1627 = vmatpush1.bf16.msra.mxu0 %v1372
    %1628 = vmatprep.subr.bf16.mxu0 %v1377
    %1629 = vmatpush1.bf16.msra.mxu0 %v1376
    %1630 = vmatprep.subr.bf16.mxu0 %v1381
    %1631 = vmatpush1.bf16.msra.mxu0 %v1380
    %1632 = vmatprep.subr.bf16.mxu0 %v1385
    %1633 = vmatpush1.bf16.msra.mxu0 %v1384
    %1634 = vmatprep.mubr.bf16.mxu0 %v1309
    %1635 = vmatmul.mubr.bf16.gmra.mrb[0].mxu0 %v1308
    %v1636 = vpop.f32.mrb[0].mxu0
    %v1637 = vadd.f32 %v1585, %v1636
    %v1638 = vpop.f32.mrb[0].mxu0
    %v1639 = vadd.f32 %v1589, %v1638
    %v1640 = vpop.f32.mrb[0].mxu0
    %v1641 = vpop.f32.mrb[0].mxu0
    %1642 = vdwg.mxu0
    %1643 = vmatprep.subr.bf16.mxu0 %v1389
    %1644 = vmatpush1.bf16.msra.mxu0 %v1388
    %1645 = vmatprep.subr.bf16.mxu0 %v1393
    %1646 = vmatpush1.bf16.msra.mxu0 %v1392
    %1647 = vmatprep.subr.bf16.mxu0 %v1397
    %1648 = vmatpush1.bf16.msra.mxu0 %v1396
    %1649 = vmatprep.subr.bf16.mxu0 %v1401
    %1650 = vmatpush1.bf16.msra.mxu0 %v1400
    %1651 = vmatprep.subr.bf16.mxu0 %v1405
    %1652 = vmatpush1.bf16.msra.mxu0 %v1404
    %1653 = vmatprep.subr.bf16.mxu0 %v1409
    %1654 = vmatpush1.bf16.msra.mxu0 %v1408
    %1655 = vmatprep.subr.bf16.mxu0 %v1413
    %1656 = vmatpush1.bf16.msra.mxu0 %v1412
    %1657 = vmatprep.subr.bf16.mxu0 %v1417
    %1658 = vmatpush1.bf16.msra.mxu0 %v1416
    %1659 = vmatprep.subr.bf16.mxu0 %v1421
    %1660 = vmatpush1.bf16.msra.mxu0 %v1420
    %1661 = vmatprep.subr.bf16.mxu0 %v1425
    %1662 = vmatpush1.bf16.msra.mxu0 %v1424
    %1663 = vmatprep.subr.bf16.mxu0 %v1429
    %1664 = vmatpush1.bf16.msra.mxu0 %v1428
    %1665 = vmatprep.subr.bf16.mxu0 %v1433
    %1666 = vmatpush1.bf16.msra.mxu0 %v1432
    %1667 = vmatprep.subr.bf16.mxu0 %v1437
    %1668 = vmatpush1.bf16.msra.mxu0 %v1436
    %1669 = vmatprep.subr.bf16.mxu0 %v1441
    %1670 = vmatpush1.bf16.msra.mxu0 %v1440
    %1671 = vmatprep.subr.bf16.mxu0 %v1445
    %1672 = vmatpush1.bf16.msra.mxu0 %v1444
    %1673 = vmatprep.subr.bf16.mxu0 %v1449
    %1674 = vmatpush1.bf16.msra.mxu0 %v1448
    %1675 = vmatprep.mubr.bf16.mxu0 %v1311
    %1676 = vmatmul.mubr.bf16.gmra.mrb[0].mxu0 %v1310
    %v1677 = vpop.f32.mrb[0].mxu0
    %v1678 = vadd.f32 %v1637, %v1677
    %v1679 = vpop.f32.mrb[0].mxu0
    %v1680 = vadd.f32 %v1639, %v1679
    %v1681 = vpop.f32.mrb[0].mxu0
    %v1682 = vpop.f32.mrb[0].mxu0
    %1683 = vdwg.mxu0
    %1684 = vmatprep.subr.bf16.mxu0 %v1453
    %1685 = vmatpush1.bf16.msra.mxu0 %v1452
    %1686 = vmatprep.subr.bf16.mxu0 %v1457
    %1687 = vmatpush1.bf16.msra.mxu0 %v1456
    %1688 = vmatprep.subr.bf16.mxu0 %v1461
    %1689 = vmatpush1.bf16.msra.mxu0 %v1460
    %1690 = vmatprep.subr.bf16.mxu0 %v1465
    %1691 = vmatpush1.bf16.msra.mxu0 %v1464
    %1692 = vmatprep.subr.bf16.mxu0 %v1469
    %1693 = vmatpush1.bf16.msra.mxu0 %v1468
    %1694 = vmatprep.subr.bf16.mxu0 %v1473
    %1695 = vmatpush1.bf16.msra.mxu0 %v1472
    %1696 = vmatprep.subr.bf16.mxu0 %v1477
    %1697 = vmatpush1.bf16.msra.mxu0 %v1476
    %1698 = vmatprep.subr.bf16.mxu0 %v1481
    %1699 = vmatpush1.bf16.msra.mxu0 %v1480
    %1700 = vmatprep.subr.bf16.mxu0 %v1485
    %1701 = vmatpush1.bf16.msra.mxu0 %v1484
    %1702 = vmatprep.subr.bf16.mxu0 %v1489
    %1703 = vmatpush1.bf16.msra.mxu0 %v1488
    %1704 = vmatprep.subr.bf16.mxu0 %v1493
    %1705 = vmatpush1.bf16.msra.mxu0 %v1492
    %1706 = vmatprep.subr.bf16.mxu0 %v1497
    %1707 = vmatpush1.bf16.msra.mxu0 %v1496
    %1708 = vmatprep.subr.bf16.mxu0 %v1501
    %1709 = vmatpush1.bf16.msra.mxu0 %v1500
    %1710 = vmatprep.subr.bf16.mxu0 %v1505
    %1711 = vmatpush1.bf16.msra.mxu0 %v1504
    %1712 = vmatprep.subr.bf16.mxu0 %v1509
    %1713 = vmatpush1.bf16.msra.mxu0 %v1508
    %1714 = vmatprep.subr.bf16.mxu0 %v1513
    %1715 = vmatpush1.bf16.msra.mxu0 %v1512
    %1716 = vmatprep.mubr.bf16.mxu0 %v1313
    %1717 = vmatmul.mubr.bf16.gmra.mrb[0].mxu0 %v1312
    %v1718 = vpop.f32.mrb[0].mxu0
    %v1719 = vadd.f32 %v1678, %v1718
    %v1720 = vpop.f32.mrb[0].mxu0
    %v1721 = vadd.f32 %v1680, %v1720
    %v1722 = vpop.f32.mrb[0].mxu0
    %v1723 = vpop.f32.mrb[0].mxu0
    %1724 = vdwg.mxu0
    %1725 = vmatprep.subr.bf16.mxu0 %v1517
    %1726 = vmatpush1.bf16.msra.mxu0 %v1516
    %1727 = vmatprep.subr.bf16.mxu0 %v1521
    %1728 = vmatpush1.bf16.msra.mxu0 %v1520
    %1729 = vmatprep.subr.bf16.mxu0 %v1525
    %1730 = vmatpush1.bf16.msra.mxu0 %v1524
    %1731 = vmatprep.subr.bf16.mxu0 %v1529
    %1732 = vmatpush1.bf16.msra.mxu0 %v1528
    %1733 = vmatprep.subr.bf16.mxu0 %v1533
    %1734 = vmatpush1.bf16.msra.mxu0 %v1532
    %1735 = vmatprep.subr.bf16.mxu0 %v1537
    %1736 = vmatpush1.bf16.msra.mxu0 %v1536
    %1737 = vmatprep.subr.bf16.mxu0 %v1541
    %1738 = vmatpush1.bf16.msra.mxu0 %v1540
    %1739 = vmatprep.subr.bf16.mxu0 %v1545
    %1740 = vmatpush1.bf16.msra.mxu0 %v1544
    %1741 = vmatprep.subr.bf16.mxu0 %v1549
    %1742 = vmatpush1.bf16.msra.mxu0 %v1548
    %1743 = vmatprep.subr.bf16.mxu0 %v1553
    %1744 = vmatpush1.bf16.msra.mxu0 %v1552
    %1745 = vmatprep.subr.bf16.mxu0 %v1557
    %1746 = vmatpush1.bf16.msra.mxu0 %v1556
    %1747 = vmatprep.subr.bf16.mxu0 %v1561
    %1748 = vmatpush1.bf16.msra.mxu0 %v1560
    %1749 = vmatprep.subr.bf16.mxu0 %v1565
    %1750 = vmatpush1.bf16.msra.mxu0 %v1564
    %1751 = vmatprep.subr.bf16.mxu0 %v1569
    %1752 = vmatpush1.bf16.msra.mxu0 %v1568
    %1753 = vmatprep.subr.bf16.mxu0 %v1573
    %1754 = vmatpush1.bf16.msra.mxu0 %v1572
    %1755 = vmatprep.subr.bf16.mxu0 %v1577
    %1756 = vmatpush1.bf16.msra.mxu0 %v1576
    %1757 = vmatprep.mubr.bf16.mxu0 %v1315
    %1758 = vmatmul.mubr.bf16.gmra.mrb[0].mxu0 %v1314
    %v1759 = vpop.f32.mrb[0].mxu0
    %v1760 = vadd.f32 %v1719, %v1759
    %v1761 = vpop.f32.mrb[0].mxu0
    %v1762 = vadd.f32 %v1721, %v1761
    %v1763 = vpop.f32.mrb[0].mxu0
    %v1764 = vpop.f32.mrb[0].mxu0
    %1765 = vdwg.mxu0
    %1766 = vmatprep.subr.bf16.mxu0 %v1327
    %1767 = vmatpush1.bf16.msra.mxu0 %v1326
    %1768 = vmatprep.subr.bf16.mxu0 %v1331
    %1769 = vmatpush1.bf16.msra.mxu0 %v1330
    %1770 = vmatprep.subr.bf16.mxu0 %v1335
    %1771 = vmatpush1.bf16.msra.mxu0 %v1334
    %1772 = vmatprep.subr.bf16.mxu0 %v1339
    %1773 = vmatpush1.bf16.msra.mxu0 %v1338
    %1774 = vmatprep.subr.bf16.mxu0 %v1343
    %1775 = vmatpush1.bf16.msra.mxu0 %v1342
    %1776 = vmatprep.subr.bf16.mxu0 %v1347
    %1777 = vmatpush1.bf16.msra.mxu0 %v1346
    %1778 = vmatprep.subr.bf16.mxu0 %v1351
    %1779 = vmatpush1.bf16.msra.mxu0 %v1350
    %1780 = vmatprep.subr.bf16.mxu0 %v1355
    %1781 = vmatpush1.bf16.msra.mxu0 %v1354
    %1782 = vmatprep.subr.bf16.mxu0 %v1359
    %1783 = vmatpush1.bf16.msra.mxu0 %v1358
    %1784 = vmatprep.subr.bf16.mxu0 %v1363
    %1785 = vmatpush1.bf16.msra.mxu0 %v1362
    %1786 = vmatprep.subr.bf16.mxu0 %v1367
    %1787 = vmatpush1.bf16.msra.mxu0 %v1366
    %1788 = vmatprep.subr.bf16.mxu0 %v1371
    %1789 = vmatpush1.bf16.msra.mxu0 %v1370
    %1790 = vmatprep.subr.bf16.mxu0 %v1375
    %1791 = vmatpush1.bf16.msra.mxu0 %v1374
    %1792 = vmatprep.subr.bf16.mxu0 %v1379
    %1793 = vmatpush1.bf16.msra.mxu0 %v1378
    %1794 = vmatprep.subr.bf16.mxu0 %v1383
    %1795 = vmatpush1.bf16.msra.mxu0 %v1382
    %1796 = vmatprep.subr.bf16.mxu0 %v1387
    %1797 = vmatpush1.bf16.msra.mxu0 %v1386
    %1798 = vmatprep.mubr.bf16.mxu0 %v1309
    %1799 = vmatmul.mubr.bf16.gmra.mrb[0].mxu0 %v1308
    %v1800 = vpop.f32.mrb[0].mxu0
    %v1801 = vadd.f32 %v1593, %v1800
    %v1802 = vpop.f32.mrb[0].mxu0
    %v1803 = vadd.f32 %v1597, %v1802
    %v1804 = vpop.f32.mrb[0].mxu0
    %v1805 = vpop.f32.mrb[0].mxu0
    %1806 = vdwg.mxu0
    %1807 = vmatprep.subr.bf16.mxu0 %v1391
    %1808 = vmatpush1.bf16.msra.mxu0 %v1390
    %1809 = vmatprep.subr.bf16.mxu0 %v1395
    %1810 = vmatpush1.bf16.msra.mxu0 %v1394
    %1811 = vmatprep.subr.bf16.mxu0 %v1399
    %1812 = vmatpush1.bf16.msra.mxu0 %v1398
    %1813 = vmatprep.subr.bf16.mxu0 %v1403
    %1814 = vmatpush1.bf16.msra.mxu0 %v1402
    %1815 = vmatprep.subr.bf16.mxu0 %v1407
    %1816 = vmatpush1.bf16.msra.mxu0 %v1406
    %1817 = vmatprep.subr.bf16.mxu0 %v1411
    %1818 = vmatpush1.bf16.msra.mxu0 %v1410
    %1819 = vmatprep.subr.bf16.mxu0 %v1415
    %1820 = vmatpush1.bf16.msra.mxu0 %v1414
    %1821 = vmatprep.subr.bf16.mxu0 %v1419
    %1822 = vmatpush1.bf16.msra.mxu0 %v1418
    %1823 = vmatprep.subr.bf16.mxu0 %v1423
    %1824 = vmatpush1.bf16.msra.mxu0 %v1422
    %1825 = vmatprep.subr.bf16.mxu0 %v1427
    %1826 = vmatpush1.bf16.msra.mxu0 %v1426
    %1827 = vmatprep.subr.bf16.mxu0 %v1431
    %1828 = vmatpush1.bf16.msra.mxu0 %v1430
    %1829 = vmatprep.subr.bf16.mxu0 %v1435
    %1830 = vmatpush1.bf16.msra.mxu0 %v1434
    %1831 = vmatprep.subr.bf16.mxu0 %v1439
    %1832 = vmatpush1.bf16.msra.mxu0 %v1438
    %1833 = vmatprep.subr.bf16.mxu0 %v1443
    %1834 = vmatpush1.bf16.msra.mxu0 %v1442
    %1835 = vmatprep.subr.bf16.mxu0 %v1447
    %1836 = vmatpush1.bf16.msra.mxu0 %v1446
    %1837 = vmatprep.subr.bf16.mxu0 %v1451
    %1838 = vmatpush1.bf16.msra.mxu0 %v1450
    %1839 = vmatprep.mubr.bf16.mxu0 %v1311
    %1840 = vmatmul.mubr.bf16.gmra.mrb[0].mxu0 %v1310
    %v1841 = vpop.f32.mrb[0].mxu0
    %v1842 = vadd.f32 %v1801, %v1841
    %v1843 = vpop.f32.mrb[0].mxu0
    %v1844 = vadd.f32 %v1803, %v1843
    %v1845 = vpop.f32.mrb[0].mxu0
    %v1846 = vpop.f32.mrb[0].mxu0
    %1847 = vdwg.mxu0
    %1848 = vmatprep.subr.bf16.mxu0 %v1455
    %1849 = vmatpush1.bf16.msra.mxu0 %v1454
    %1850 = vmatprep.subr.bf16.mxu0 %v1459
    %1851 = vmatpush1.bf16.msra.mxu0 %v1458
    %1852 = vmatprep.subr.bf16.mxu0 %v1463
    %1853 = vmatpush1.bf16.msra.mxu0 %v1462
    %1854 = vmatprep.subr.bf16.mxu0 %v1467
    %1855 = vmatpush1.bf16.msra.mxu0 %v1466
    %1856 = vmatprep.subr.bf16.mxu0 %v1471
    %1857 = vmatpush1.bf16.msra.mxu0 %v1470
    %1858 = vmatprep.subr.bf16.mxu0 %v1475
    %1859 = vmatpush1.bf16.msra.mxu0 %v1474
    %1860 = vmatprep.subr.bf16.mxu0 %v1479
    %1861 = vmatpush1.bf16.msra.mxu0 %v1478
    %1862 = vmatprep.subr.bf16.mxu0 %v1483
    %1863 = vmatpush1.bf16.msra.mxu0 %v1482
    %1864 = vmatprep.subr.bf16.mxu0 %v1487
    %1865 = vmatpush1.bf16.msra.mxu0 %v1486
    %1866 = vmatprep.subr.bf16.mxu0 %v1491
    %1867 = vmatpush1.bf16.msra.mxu0 %v1490
    %1868 = vmatprep.subr.bf16.mxu0 %v1495
    %1869 = vmatpush1.bf16.msra.mxu0 %v1494
    %1870 = vmatprep.subr.bf16.mxu0 %v1499
    %1871 = vmatpush1.bf16.msra.mxu0 %v1498
    %1872 = vmatprep.subr.bf16.mxu0 %v1503
    %1873 = vmatpush1.bf16.msra.mxu0 %v1502
    %1874 = vmatprep.subr.bf16.mxu0 %v1507
    %1875 = vmatpush1.bf16.msra.mxu0 %v1506
    %1876 = vmatprep.subr.bf16.mxu0 %v1511
    %1877 = vmatpush1.bf16.msra.mxu0 %v1510
    %1878 = vmatprep.subr.bf16.mxu0 %v1515
    %1879 = vmatpush1.bf16.msra.mxu0 %v1514
    %1880 = vmatprep.mubr.bf16.mxu0 %v1313
    %1881 = vmatmul.mubr.bf16.gmra.mrb[0].mxu0 %v1312
    %v1882 = vpop.f32.mrb[0].mxu0
    %v1883 = vadd.f32 %v1842, %v1882
    %v1884 = vpop.f32.mrb[0].mxu0
    %v1885 = vadd.f32 %v1844, %v1884
    %v1886 = vpop.f32.mrb[0].mxu0
    %v1887 = vpop.f32.mrb[0].mxu0
    %1888 = vdwg.mxu0
    %1889 = vmatprep.subr.bf16.mxu0 %v1519
    %1890 = vmatpush1.bf16.msra.mxu0 %v1518
    %1891 = vmatprep.subr.bf16.mxu0 %v1523
    %1892 = vmatpush1.bf16.msra.mxu0 %v1522
    %1893 = vmatprep.subr.bf16.mxu0 %v1527
    %1894 = vmatpush1.bf16.msra.mxu0 %v1526
    %1895 = vmatprep.subr.bf16.mxu0 %v1531
    %1896 = vmatpush1.bf16.msra.mxu0 %v1530
    %1897 = vmatprep.subr.bf16.mxu0 %v1535
    %1898 = vmatpush1.bf16.msra.mxu0 %v1534
    %1899 = vmatprep.subr.bf16.mxu0 %v1539
    %1900 = vmatpush1.bf16.msra.mxu0 %v1538
    %1901 = vmatprep.subr.bf16.mxu0 %v1543
    %1902 = vmatpush1.bf16.msra.mxu0 %v1542
    %1903 = vmatprep.subr.bf16.mxu0 %v1547
    %1904 = vmatpush1.bf16.msra.mxu0 %v1546
    %1905 = vmatprep.subr.bf16.mxu0 %v1551
    %1906 = vmatpush1.bf16.msra.mxu0 %v1550
    %1907 = vmatprep.subr.bf16.mxu0 %v1555
    %1908 = vmatpush1.bf16.msra.mxu0 %v1554
    %1909 = vmatprep.subr.bf16.mxu0 %v1559
    %1910 = vmatpush1.bf16.msra.mxu0 %v1558
    %1911 = vmatprep.subr.bf16.mxu0 %v1563
    %1912 = vmatpush1.bf16.msra.mxu0 %v1562
    %1913 = vmatprep.subr.bf16.mxu0 %v1567
    %1914 = vmatpush1.bf16.msra.mxu0 %v1566
    %1915 = vmatprep.subr.bf16.mxu0 %v1571
    %1916 = vmatpush1.bf16.msra.mxu0 %v1570
    %1917 = vmatprep.subr.bf16.mxu0 %v1575
    %1918 = vmatpush1.bf16.msra.mxu0 %v1574
    %1919 = vmatprep.subr.bf16.mxu0 %v1579
    %1920 = vmatpush1.bf16.msra.mxu0 %v1578
    %1921 = vmatprep.mubr.bf16.mxu0 %v1315
    %1922 = vmatmul.mubr.bf16.gmra.mrb[0].mxu0 %v1314
    %v1923 = vpop.f32.mrb[0].mxu0
    %v1924 = vadd.f32 %v1883, %v1923
    %v1925 = vpop.f32.mrb[0].mxu0
    %v1926 = vadd.f32 %v1885, %v1925
    %v1927 = vpop.f32.mrb[0].mxu0
    %v1928 = vpop.f32.mrb[0].mxu0
    %1929 = vdwg.mxu0
    %vm1930 = vcmp.ge.f32.partialorder %v1760, 0.0
    %vm1931 = vcmp.ge.f32.partialorder %v1762, 0.0
    %vm1932 = vcmp.ge.f32.partialorder %v1924, 0.0
    %vm1933 = vcmp.ge.f32.partialorder %v1926, 0.0
    %v1934 = vmul.f32 %v1760, 0.2
    %v1935 = vmul.f32 %v1762, 0.2
    %v1936 = vmul.f32 %v1924, 0.2
    %v1937 = vmul.f32 %v1926, 0.2
    %v1938 = vsel %vm1930, %v1760, %v1934
    %v1939 = vsel %vm1931, %v1762, %v1935
    %v1940 = vsel %vm1932, %v1924, %v1936
    %v1941 = vsel %vm1933, %v1926, %v1937
    %v1942 = vpack.c.bf16 %v1938, %v1938
    %v1943 = vpack.c.bf16 %v1939, %v1939
    %v1944 = vpack.c.bf16 %v1940, %v1940
    %v1945 = vpack.c.bf16 %v1941, %v1941
    // Predicated region
    $region66: #{conv_autoencoder_forward.1} parent=1 // pred_check
      %p1946 = pneg %p104
    $region67: #{conv_autoencoder_forward.1} parent=1 // pred_check_branch
      %1948 = sbr.rel (%p1946) target = $region69
    $region68: #{conv_autoencoder_forward.1} parent=1 // pred_region
      %s1949 = scalar_lea.sflag [#allocation8], 2
      %s1950 = smul.u32 4, 64
      %s1951 = smul.u32 %s1950, 2
      %s1952 = sshll.u32 %s1951, 4
      %1953 = dma.done %s1949, %s1952
    $region69: #{conv_autoencoder_forward.1} parent=1 // pred_fallthru
      _
    %v1954 = vld [vmem:[#allocation4] sm:$0xff]
    %v1955 = vld [vmem:[#allocation4 + $0x8] sm:$0xff]
    %v1956 = vld [vmem:[#allocation4 + $0x10] sm:$0xff]
    %v1957 = vld [vmem:[#allocation4 + $0x18] sm:$0xff]
    %v1958 = vld [vmem:[#allocation4 + $0x20] sm:$0xff]
    %v1959 = vld [vmem:[#allocation4 + $0x28] sm:$0xff]
    %v1960 = vld [vmem:[#allocation4 + $0x30] sm:$0xff]
    %v1961 = vld [vmem:[#allocation4 + $0x38] sm:$0xff]
    %v1962 = vld [vmem:[#allocation4 + $0x40] sm:$0xff]
    %v1963 = vld [vmem:[#allocation4 + $0x48] sm:$0xff]
    %v1964 = vld [vmem:[#allocation4 + $0x50] sm:$0xff]
    %v1965 = vld [vmem:[#allocation4 + $0x58] sm:$0xff]
    %v1966 = vld [vmem:[#allocation4 + $0x60] sm:$0xff]
    %v1967 = vld [vmem:[#allocation4 + $0x68] sm:$0xff]
    %v1968 = vld [vmem:[#allocation4 + $0x70] sm:$0xff]
    %v1969 = vld [vmem:[#allocation4 + $0x78] sm:$0xff]
    %v1970 = vld [vmem:[#allocation4 + $0x80] sm:$0xff]
    %v1971 = vld [vmem:[#allocation4 + $0x88] sm:$0xff]
    %v1972 = vld [vmem:[#allocation4 + $0x90] sm:$0xff]
    %v1973 = vld [vmem:[#allocation4 + $0x98] sm:$0xff]
    %v1974 = vld [vmem:[#allocation4 + $0xa0] sm:$0xff]
    %v1975 = vld [vmem:[#allocation4 + $0xa8] sm:$0xff]
    %v1976 = vld [vmem:[#allocation4 + $0xb0] sm:$0xff]
    %v1977 = vld [vmem:[#allocation4 + $0xb8] sm:$0xff]
    %v1978 = vld [vmem:[#allocation4 + $0xc0] sm:$0xff]
    %v1979 = vld [vmem:[#allocation4 + $0xc8] sm:$0xff]
    %v1980 = vld [vmem:[#allocation4 + $0xd0] sm:$0xff]
    %v1981 = vld [vmem:[#allocation4 + $0xd8] sm:$0xff]
    %v1982 = vld [vmem:[#allocation4 + $0xe0] sm:$0xff]
    %v1983 = vld [vmem:[#allocation4 + $0xe8] sm:$0xff]
    %v1984 = vld [vmem:[#allocation4 + $0xf0] sm:$0xff]
    %v1985 = vld [vmem:[#allocation4 + $0xf8] sm:$0xff]
    %v1986 = vld [vmem:[#allocation4 + $0x100] sm:$0xff]
    %v1987 = vld [vmem:[#allocation4 + $0x108] sm:$0xff]
    %v1988 = vld [vmem:[#allocation4 + $0x110] sm:$0xff]
    %v1989 = vld [vmem:[#allocation4 + $0x118] sm:$0xff]
    %v1990 = vld [vmem:[#allocation4 + $0x120] sm:$0xff]
    %v1991 = vld [vmem:[#allocation4 + $0x128] sm:$0xff]
    %v1992 = vld [vmem:[#allocation4 + $0x130] sm:$0xff]
    %v1993 = vld [vmem:[#allocation4 + $0x138] sm:$0xff]
    %v1994 = vld [vmem:[#allocation4 + $0x140] sm:$0xff]
    %v1995 = vld [vmem:[#allocation4 + $0x148] sm:$0xff]
    %v1996 = vld [vmem:[#allocation4 + $0x150] sm:$0xff]
    %v1997 = vld [vmem:[#allocation4 + $0x158] sm:$0xff]
    %v1998 = vld [vmem:[#allocation4 + $0x160] sm:$0xff]
    %v1999 = vld [vmem:[#allocation4 + $0x168] sm:$0xff]
    %v2000 = vld [vmem:[#allocation4 + $0x170] sm:$0xff]
    %v2001 = vld [vmem:[#allocation4 + $0x178] sm:$0xff]
    %v2002 = vld [vmem:[#allocation4 + $0x180] sm:$0xff]
    %v2003 = vld [vmem:[#allocation4 + $0x188] sm:$0xff]
    %v2004 = vld [vmem:[#allocation4 + $0x190] sm:$0xff]
    %v2005 = vld [vmem:[#allocation4 + $0x198] sm:$0xff]
    %v2006 = vld [vmem:[#allocation4 + $0x1a0] sm:$0xff]
    %v2007 = vld [vmem:[#allocation4 + $0x1a8] sm:$0xff]
    %v2008 = vld [vmem:[#allocation4 + $0x1b0] sm:$0xff]
    %v2009 = vld [vmem:[#allocation4 + $0x1b8] sm:$0xff]
    %v2010 = vld [vmem:[#allocation4 + $0x1c0] sm:$0xff]
    %v2011 = vld [vmem:[#allocation4 + $0x1c8] sm:$0xff]
    %v2012 = vld [vmem:[#allocation4 + $0x1d0] sm:$0xff]
    %v2013 = vld [vmem:[#allocation4 + $0x1d8] sm:$0xff]
    %v2014 = vld [vmem:[#allocation4 + $0x1e0] sm:$0xff]
    %v2015 = vld [vmem:[#allocation4 + $0x1e8] sm:$0xff]
    %v2016 = vld [vmem:[#allocation4 + $0x1f0] sm:$0xff]
    %v2017 = vld [vmem:[#allocation4 + $0x1f8] sm:$0xff]
    %v2018 = vld [vmem:[#allocation13] sm:$0x3]
    %v2020 = vlaneseq
    %v2021 = vshrl.u32 %v2020, 7
    %v2022 = vsub.s32 0, %v2021
    %v2023 = vrot.slane %v2018, %v2022
    %v2024 = vlaneseq
    %v2025 = vshrl.u32 %v2024, 7
    %v2026 = vsub.s32 1, %v2025
    %v2027 = vrot.slane %v2018, %v2026
    %2030 = vmatprep.subr.bf16.mxu0 %v1955
    %2031 = vmatpush1.bf16.msra.mxu0 %v1954
    %2032 = vmatprep.subr.bf16.mxu0 %v1957
    %2033 = vmatpush1.bf16.msra.mxu0 %v1956
    %2034 = vmatprep.subr.bf16.mxu0 %v1959
    %2035 = vmatpush1.bf16.msra.mxu0 %v1958
    %2036 = vmatprep.subr.bf16.mxu0 %v1961
    %2037 = vmatpush1.bf16.msra.mxu0 %v1960
    %2038 = vmatprep.subr.bf16.mxu0 %v1963
    %2039 = vmatpush1.bf16.msra.mxu0 %v1962
    %2040 = vmatprep.subr.bf16.mxu0 %v1965
    %2041 = vmatpush1.bf16.msra.mxu0 %v1964
    %2042 = vmatprep.subr.bf16.mxu0 %v1967
    %2043 = vmatpush1.bf16.msra.mxu0 %v1966
    %2044 = vmatprep.subr.bf16.mxu0 %v1969
    %2045 = vmatpush1.bf16.msra.mxu0 %v1968
    %2046 = vmatprep.subr.bf16.mxu0 %v1971
    %2047 = vmatpush1.bf16.msra.mxu0 %v1970
    %2048 = vmatprep.subr.bf16.mxu0 %v1973
    %2049 = vmatpush1.bf16.msra.mxu0 %v1972
    %2050 = vmatprep.subr.bf16.mxu0 %v1975
    %2051 = vmatpush1.bf16.msra.mxu0 %v1974
    %2052 = vmatprep.subr.bf16.mxu0 %v1977
    %2053 = vmatpush1.bf16.msra.mxu0 %v1976
    %2054 = vmatprep.subr.bf16.mxu0 %v1979
    %2055 = vmatpush1.bf16.msra.mxu0 %v1978
    %2056 = vmatprep.subr.bf16.mxu0 %v1981
    %2057 = vmatpush1.bf16.msra.mxu0 %v1980
    %2058 = vmatprep.subr.bf16.mxu0 %v1983
    %2059 = vmatpush1.bf16.msra.mxu0 %v1982
    %2060 = vmatprep.subr.bf16.mxu0 %v1985
    %2061 = vmatpush1.bf16.msra.mxu0 %v1984
    %2062 = vmatprep.mubr.bf16.mxu0 %v1943
    %2063 = vmatmul.mubr.bf16.gmra.mrb[0].mxu0 %v1942
    %v2064 = vpop.f32.mrb[0].mxu0
    %v2065 = vadd.f32 %v2023, %v2064
    %v2066 = vpop.f32.mrb[0].mxu0
    %v2067 = vadd.f32 %v2027, %v2066
    %v2068 = vpop.f32.mrb[0].mxu0
    %v2069 = vpop.f32.mrb[0].mxu0
    %2070 = vdwg.mxu0
    %2071 = vmatprep.subr.bf16.mxu0 %v1987
    %2072 = vmatpush1.bf16.msra.mxu0 %v1986
    %2073 = vmatprep.subr.bf16.mxu0 %v1989
    %2074 = vmatpush1.bf16.msra.mxu0 %v1988
    %2075 = vmatprep.subr.bf16.mxu0 %v1991
    %2076 = vmatpush1.bf16.msra.mxu0 %v1990
    %2077 = vmatprep.subr.bf16.mxu0 %v1993
    %2078 = vmatpush1.bf16.msra.mxu0 %v1992
    %2079 = vmatprep.subr.bf16.mxu0 %v1995
    %2080 = vmatpush1.bf16.msra.mxu0 %v1994
    %2081 = vmatprep.subr.bf16.mxu0 %v1997
    %2082 = vmatpush1.bf16.msra.mxu0 %v1996
    %2083 = vmatprep.subr.bf16.mxu0 %v1999
    %2084 = vmatpush1.bf16.msra.mxu0 %v1998
    %2085 = vmatprep.subr.bf16.mxu0 %v2001
    %2086 = vmatpush1.bf16.msra.mxu0 %v2000
    %2087 = vmatprep.subr.bf16.mxu0 %v2003
    %2088 = vmatpush1.bf16.msra.mxu0 %v2002
    %2089 = vmatprep.subr.bf16.mxu0 %v2005
    %2090 = vmatpush1.bf16.msra.mxu0 %v2004
    %2091 = vmatprep.subr.bf16.mxu0 %v2007
    %2092 = vmatpush1.bf16.msra.mxu0 %v2006
    %2093 = vmatprep.subr.bf16.mxu0 %v2009
    %2094 = vmatpush1.bf16.msra.mxu0 %v2008
    %2095 = vmatprep.subr.bf16.mxu0 %v2011
    %2096 = vmatpush1.bf16.msra.mxu0 %v2010
    %2097 = vmatprep.subr.bf16.mxu0 %v2013
    %2098 = vmatpush1.bf16.msra.mxu0 %v2012
    %2099 = vmatprep.subr.bf16.mxu0 %v2015
    %2100 = vmatpush1.bf16.msra.mxu0 %v2014
    %2101 = vmatprep.subr.bf16.mxu0 %v2017
    %2102 = vmatpush1.bf16.msra.mxu0 %v2016
    %2103 = vmatprep.mubr.bf16.mxu0 %v1945
    %2104 = vmatmul.mubr.bf16.gmra.mrb[0].mxu0 %v1944
    %v2105 = vpop.f32.mrb[0].mxu0
    %v2106 = vadd.f32 %v2065, %v2105
    %v2107 = vpop.f32.mrb[0].mxu0
    %v2108 = vadd.f32 %v2067, %v2107
    %v2109 = vpop.f32.mrb[0].mxu0
    %v2110 = vpop.f32.mrb[0].mxu0
    %2111 = vdwg.mxu0
    %vm2112 = vcmp.ge.f32.partialorder %v2106, 0.0
    %vm2113 = vcmp.ge.f32.partialorder %v2108, 0.0
    %v2114 = vmul.f32 %v2106, 0.2
    %v2115 = vmul.f32 %v2108, 0.2
    %v2116 = vsel %vm2112, %v2106, %v2114
    %v2117 = vsel %vm2113, %v2108, %v2115
    %v2118 = vpack.c.bf16 %v2116, %v2116
    %v2119 = vpack.c.bf16 %v2117, %v2117
    %v2122 = vcombine.low %v2116, %v2117
    %v2124 = vunpack.c.l.s4 1983009808
    %v2125 = vunpack.c.0.s8 %v2124
    %v2126 = vlaneseq
    %v2127 = vshrl.u32 %v2126, 7
    %v2128 = vsub.s32 %v2125, %v2127
    %v2129 = vrot.slane %v2122, %v2128
    %2131 = vst [vmem:[%s13] sm:$0xf] %v2129
    // Predicated region
    $region70: #{conv_autoencoder_forward.1} parent=1 // pred_check
      %p2132 = pneg %p104
    $region71: #{conv_autoencoder_forward.1} parent=1 // pred_check_branch
      %2134 = sbr.rel (%p2132) target = $region73
    $region72: #{conv_autoencoder_forward.1} parent=1 // pred_region
      %s2135 = scalar_lea.sflag [#allocation8], 3
      %s2136 = smul.u32 4, 32
      %s2137 = smul.u32 %s2136, 4
      %s2138 = sshll.u32 %s2137, 4
      %2139 = dma.done %s2135, %s2138
    $region73: #{conv_autoencoder_forward.1} parent=1 // pred_fallthru
      _
    %v2140 = vld [vmem:[#allocation5] sm:$0xff]
    %v2141 = vld [vmem:[#allocation5 + $0x8] sm:$0xff]
    %v2142 = vld [vmem:[#allocation5 + $0x10] sm:$0xff]
    %v2143 = vld [vmem:[#allocation5 + $0x18] sm:$0xff]
    %v2144 = vld [vmem:[#allocation5 + $0x20] sm:$0xff]
    %v2145 = vld [vmem:[#allocation5 + $0x28] sm:$0xff]
    %v2146 = vld [vmem:[#allocation5 + $0x30] sm:$0xff]
    %v2147 = vld [vmem:[#allocation5 + $0x38] sm:$0xff]
    %v2148 = vld [vmem:[#allocation5 + $0x40] sm:$0xff]
    %v2149 = vld [vmem:[#allocation5 + $0x48] sm:$0xff]
    %v2150 = vld [vmem:[#allocation5 + $0x50] sm:$0xff]
    %v2151 = vld [vmem:[#allocation5 + $0x58] sm:$0xff]
    %v2152 = vld [vmem:[#allocation5 + $0x60] sm:$0xff]
    %v2153 = vld [vmem:[#allocation5 + $0x68] sm:$0xff]
    %v2154 = vld [vmem:[#allocation5 + $0x70] sm:$0xff]
    %v2155 = vld [vmem:[#allocation5 + $0x78] sm:$0xff]
    %v2156 = vld [vmem:[#allocation5 + $0x80] sm:$0xff]
    %v2157 = vld [vmem:[#allocation5 + $0x88] sm:$0xff]
    %v2158 = vld [vmem:[#allocation5 + $0x90] sm:$0xff]
    %v2159 = vld [vmem:[#allocation5 + $0x98] sm:$0xff]
    %v2160 = vld [vmem:[#allocation5 + $0xa0] sm:$0xff]
    %v2161 = vld [vmem:[#allocation5 + $0xa8] sm:$0xff]
    %v2162 = vld [vmem:[#allocation5 + $0xb0] sm:$0xff]
    %v2163 = vld [vmem:[#allocation5 + $0xb8] sm:$0xff]
    %v2164 = vld [vmem:[#allocation5 + $0xc0] sm:$0xff]
    %v2165 = vld [vmem:[#allocation5 + $0xc8] sm:$0xff]
    %v2166 = vld [vmem:[#allocation5 + $0xd0] sm:$0xff]
    %v2167 = vld [vmem:[#allocation5 + $0xd8] sm:$0xff]
    %v2168 = vld [vmem:[#allocation5 + $0xe0] sm:$0xff]
    %v2169 = vld [vmem:[#allocation5 + $0xe8] sm:$0xff]
    %v2170 = vld [vmem:[#allocation5 + $0xf0] sm:$0xff]
    %v2171 = vld [vmem:[#allocation5 + $0xf8] sm:$0xff]
    %v2172 = vld [vmem:[#allocation5 + $0x100] sm:$0xff]
    %v2173 = vld [vmem:[#allocation5 + $0x108] sm:$0xff]
    %v2174 = vld [vmem:[#allocation5 + $0x110] sm:$0xff]
    %v2175 = vld [vmem:[#allocation5 + $0x118] sm:$0xff]
    %v2176 = vld [vmem:[#allocation5 + $0x120] sm:$0xff]
    %v2177 = vld [vmem:[#allocation5 + $0x128] sm:$0xff]
    %v2178 = vld [vmem:[#allocation5 + $0x130] sm:$0xff]
    %v2179 = vld [vmem:[#allocation5 + $0x138] sm:$0xff]
    %v2180 = vld [vmem:[#allocation5 + $0x140] sm:$0xff]
    %v2181 = vld [vmem:[#allocation5 + $0x148] sm:$0xff]
    %v2182 = vld [vmem:[#allocation5 + $0x150] sm:$0xff]
    %v2183 = vld [vmem:[#allocation5 + $0x158] sm:$0xff]
    %v2184 = vld [vmem:[#allocation5 + $0x160] sm:$0xff]
    %v2185 = vld [vmem:[#allocation5 + $0x168] sm:$0xff]
    %v2186 = vld [vmem:[#allocation5 + $0x170] sm:$0xff]
    %v2187 = vld [vmem:[#allocation5 + $0x178] sm:$0xff]
    %v2188 = vld [vmem:[#allocation5 + $0x180] sm:$0xff]
    %v2189 = vld [vmem:[#allocation5 + $0x188] sm:$0xff]
    %v2190 = vld [vmem:[#allocation5 + $0x190] sm:$0xff]
    %v2191 = vld [vmem:[#allocation5 + $0x198] sm:$0xff]
    %v2192 = vld [vmem:[#allocation5 + $0x1a0] sm:$0xff]
    %v2193 = vld [vmem:[#allocation5 + $0x1a8] sm:$0xff]
    %v2194 = vld [vmem:[#allocation5 + $0x1b0] sm:$0xff]
    %v2195 = vld [vmem:[#allocation5 + $0x1b8] sm:$0xff]
    %v2196 = vld [vmem:[#allocation5 + $0x1c0] sm:$0xff]
    %v2197 = vld [vmem:[#allocation5 + $0x1c8] sm:$0xff]
    %v2198 = vld [vmem:[#allocation5 + $0x1d0] sm:$0xff]
    %v2199 = vld [vmem:[#allocation5 + $0x1d8] sm:$0xff]
    %v2200 = vld [vmem:[#allocation5 + $0x1e0] sm:$0xff]
    %v2201 = vld [vmem:[#allocation5 + $0x1e8] sm:$0xff]
    %v2202 = vld [vmem:[#allocation5 + $0x1f0] sm:$0xff]
    %v2203 = vld [vmem:[#allocation5 + $0x1f8] sm:$0xff]
    %v2204 = vld [vmem:[#allocation14] sm:$0xf]
    %v2206 = vlaneseq
    %v2207 = vshrl.u32 %v2206, 7
    %v2208 = vsub.s32 0, %v2207
    %v2209 = vrot.slane %v2204, %v2208
    %v2210 = vlaneseq
    %v2211 = vshrl.u32 %v2210, 7
    %v2212 = vsub.s32 1, %v2211
    %v2213 = vrot.slane %v2204, %v2212
    %v2214 = vlaneseq
    %v2215 = vshrl.u32 %v2214, 7
    %v2216 = vsub.s32 2, %v2215
    %v2217 = vrot.slane %v2204, %v2216
    %v2218 = vlaneseq
    %v2219 = vshrl.u32 %v2218, 7
    %v2220 = vsub.s32 3, %v2219
    %v2221 = vrot.slane %v2204, %v2220
    %2226 = vmatprep.subr.bf16.mxu0 %v2141
    %2227 = vmatpush1.bf16.msra.mxu0 %v2140
    %2228 = vmatprep.subr.bf16.mxu0 %v2145
    %2229 = vmatpush1.bf16.msra.mxu0 %v2144
    %2230 = vmatprep.subr.bf16.mxu0 %v2149
    %2231 = vmatpush1.bf16.msra.mxu0 %v2148
    %2232 = vmatprep.subr.bf16.mxu0 %v2153
    %2233 = vmatpush1.bf16.msra.mxu0 %v2152
    %2234 = vmatprep.subr.bf16.mxu0 %v2157
    %2235 = vmatpush1.bf16.msra.mxu0 %v2156
    %2236 = vmatprep.subr.bf16.mxu0 %v2161
    %2237 = vmatpush1.bf16.msra.mxu0 %v2160
    %2238 = vmatprep.subr.bf16.mxu0 %v2165
    %2239 = vmatpush1.bf16.msra.mxu0 %v2164
    %2240 = vmatprep.subr.bf16.mxu0 %v2169
    %2241 = vmatpush1.bf16.msra.mxu0 %v2168
    %2242 = vmatprep.subr.bf16.mxu0 %v2173
    %2243 = vmatpush1.bf16.msra.mxu0 %v2172
    %2244 = vmatprep.subr.bf16.mxu0 %v2177
    %2245 = vmatpush1.bf16.msra.mxu0 %v2176
    %2246 = vmatprep.subr.bf16.mxu0 %v2181
    %2247 = vmatpush1.bf16.msra.mxu0 %v2180
    %2248 = vmatprep.subr.bf16.mxu0 %v2185
    %2249 = vmatpush1.bf16.msra.mxu0 %v2184
    %2250 = vmatprep.subr.bf16.mxu0 %v2189
    %2251 = vmatpush1.bf16.msra.mxu0 %v2188
    %2252 = vmatprep.subr.bf16.mxu0 %v2193
    %2253 = vmatpush1.bf16.msra.mxu0 %v2192
    %2254 = vmatprep.subr.bf16.mxu0 %v2197
    %2255 = vmatpush1.bf16.msra.mxu0 %v2196
    %2256 = vmatprep.subr.bf16.mxu0 %v2201
    %2257 = vmatpush1.bf16.msra.mxu0 %v2200
    %2258 = vmatprep.mubr.bf16.mxu0 %v2119
    %2259 = vmatmul.mubr.bf16.gmra.mrb[0].mxu0 %v2118
    %v2260 = vpop.f32.mrb[0].mxu0
    %v2261 = vadd.f32 %v2209, %v2260
    %v2262 = vpop.f32.mrb[0].mxu0
    %v2263 = vadd.f32 %v2213, %v2262
    %v2264 = vpop.f32.mrb[0].mxu0
    %v2265 = vpop.f32.mrb[0].mxu0
    %2266 = vdwg.mxu0
    %2267 = vmatprep.subr.bf16.mxu0 %v2143
    %2268 = vmatpush1.bf16.msra.mxu0 %v2142
    %2269 = vmatprep.subr.bf16.mxu0 %v2147
    %2270 = vmatpush1.bf16.msra.mxu0 %v2146
    %2271 = vmatprep.subr.bf16.mxu0 %v2151
    %2272 = vmatpush1.bf16.msra.mxu0 %v2150
    %2273 = vmatprep.subr.bf16.mxu0 %v2155
    %2274 = vmatpush1.bf16.msra.mxu0 %v2154
    %2275 = vmatprep.subr.bf16.mxu0 %v2159
    %2276 = vmatpush1.bf16.msra.mxu0 %v2158
    %2277 = vmatprep.subr.bf16.mxu0 %v2163
    %2278 = vmatpush1.bf16.msra.mxu0 %v2162
    %2279 = vmatprep.subr.bf16.mxu0 %v2167
    %2280 = vmatpush1.bf16.msra.mxu0 %v2166
    %2281 = vmatprep.subr.bf16.mxu0 %v2171
    %2282 = vmatpush1.bf16.msra.mxu0 %v2170
    %2283 = vmatprep.subr.bf16.mxu0 %v2175
    %2284 = vmatpush1.bf16.msra.mxu0 %v2174
    %2285 = vmatprep.subr.bf16.mxu0 %v2179
    %2286 = vmatpush1.bf16.msra.mxu0 %v2178
    %2287 = vmatprep.subr.bf16.mxu0 %v2183
    %2288 = vmatpush1.bf16.msra.mxu0 %v2182
    %2289 = vmatprep.subr.bf16.mxu0 %v2187
    %2290 = vmatpush1.bf16.msra.mxu0 %v2186
    %2291 = vmatprep.subr.bf16.mxu0 %v2191
    %2292 = vmatpush1.bf16.msra.mxu0 %v2190
    %2293 = vmatprep.subr.bf16.mxu0 %v2195
    %2294 = vmatpush1.bf16.msra.mxu0 %v2194
    %2295 = vmatprep.subr.bf16.mxu0 %v2199
    %2296 = vmatpush1.bf16.msra.mxu0 %v2198
    %2297 = vmatprep.subr.bf16.mxu0 %v2203
    %2298 = vmatpush1.bf16.msra.mxu0 %v2202
    %2299 = vmatprep.mubr.bf16.mxu0 %v2119
    %2300 = vmatmul.mubr.bf16.gmra.mrb[0].mxu0 %v2118
    %v2301 = vpop.f32.mrb[0].mxu0
    %v2302 = vadd.f32 %v2217, %v2301
    %v2303 = vpop.f32.mrb[0].mxu0
    %v2304 = vadd.f32 %v2221, %v2303
    %v2305 = vpop.f32.mrb[0].mxu0
    %v2306 = vpop.f32.mrb[0].mxu0
    %2307 = vdwg.mxu0
    %v2308 = vmax.f32 %v2261, 0.0
    %v2309 = vmax.f32 %v2263, 0.0
    %v2310 = vmax.f32 %v2302, 0.0
    %v2311 = vmax.f32 %v2304, 0.0
    %v2312 = vpack.c.bf16 %v2308, %v2308
    %v2313 = vpack.c.bf16 %v2309, %v2309
    %v2314 = vpack.c.bf16 %v2310, %v2310
    %v2315 = vpack.c.bf16 %v2311, %v2311
    // Predicated region
    $region74: #{conv_autoencoder_forward.1} parent=1 // pred_check
      %p2316 = pneg %p104
    $region75: #{conv_autoencoder_forward.1} parent=1 // pred_check_branch
      %2318 = sbr.rel (%p2316) target = $region77
    $region76: #{conv_autoencoder_forward.1} parent=1 // pred_region
      %s2319 = scalar_lea.sflag [#allocation8], 4
      %s2320 = smul.u32 4, 64
      %s2321 = smul.u32 %s2320, 8
      %s2322 = sshll.u32 %s2321, 4
      %2323 = dma.done %s2319, %s2322
    $region77: #{conv_autoencoder_forward.1} parent=1 // pred_fallthru
      _
    %v2324 = vld [vmem:[#allocation6] sm:$0xff]
    %v2325 = vld [vmem:[#allocation6 + $0x8] sm:$0xff]
    %v2326 = vld [vmem:[#allocation6 + $0x10] sm:$0xff]
    %v2327 = vld [vmem:[#allocation6 + $0x18] sm:$0xff]
    %v2328 = vld [vmem:[#allocation6 + $0x20] sm:$0xff]
    %v2329 = vld [vmem:[#allocation6 + $0x28] sm:$0xff]
    %v2330 = vld [vmem:[#allocation6 + $0x30] sm:$0xff]
    %v2331 = vld [vmem:[#allocation6 + $0x38] sm:$0xff]
    %v2332 = vld [vmem:[#allocation6 + $0x40] sm:$0xff]
    %v2333 = vld [vmem:[#allocation6 + $0x48] sm:$0xff]
    %v2334 = vld [vmem:[#allocation6 + $0x50] sm:$0xff]
    %v2335 = vld [vmem:[#allocation6 + $0x58] sm:$0xff]
    %v2336 = vld [vmem:[#allocation6 + $0x60] sm:$0xff]
    %v2337 = vld [vmem:[#allocation6 + $0x68] sm:$0xff]
    %v2338 = vld [vmem:[#allocation6 + $0x70] sm:$0xff]
    %v2339 = vld [vmem:[#allocation6 + $0x78] sm:$0xff]
    %v2340 = vld [vmem:[#allocation6 + $0x80] sm:$0xff]
    %v2341 = vld [vmem:[#allocation6 + $0x88] sm:$0xff]
    %v2342 = vld [vmem:[#allocation6 + $0x90] sm:$0xff]
    %v2343 = vld [vmem:[#allocation6 + $0x98] sm:$0xff]
    %v2344 = vld [vmem:[#allocation6 + $0xa0] sm:$0xff]
    %v2345 = vld [vmem:[#allocation6 + $0xa8] sm:$0xff]
    %v2346 = vld [vmem:[#allocation6 + $0xb0] sm:$0xff]
    %v2347 = vld [vmem:[#allocation6 + $0xb8] sm:$0xff]
    %v2348 = vld [vmem:[#allocation6 + $0xc0] sm:$0xff]
    %v2349 = vld [vmem:[#allocation6 + $0xc8] sm:$0xff]
    %v2350 = vld [vmem:[#allocation6 + $0xd0] sm:$0xff]
    %v2351 = vld [vmem:[#allocation6 + $0xd8] sm:$0xff]
    %v2352 = vld [vmem:[#allocation6 + $0xe0] sm:$0xff]
    %v2353 = vld [vmem:[#allocation6 + $0xe8] sm:$0xff]
    %v2354 = vld [vmem:[#allocation6 + $0xf0] sm:$0xff]
    %v2355 = vld [vmem:[#allocation6 + $0xf8] sm:$0xff]
    %v2356 = vld [vmem:[#allocation6 + $0x100] sm:$0xff]
    %v2357 = vld [vmem:[#allocation6 + $0x108] sm:$0xff]
    %v2358 = vld [vmem:[#allocation6 + $0x110] sm:$0xff]
    %v2359 = vld [vmem:[#allocation6 + $0x118] sm:$0xff]
    %v2360 = vld [vmem:[#allocation6 + $0x120] sm:$0xff]
    %v2361 = vld [vmem:[#allocation6 + $0x128] sm:$0xff]
    %v2362 = vld [vmem:[#allocation6 + $0x130] sm:$0xff]
    %v2363 = vld [vmem:[#allocation6 + $0x138] sm:$0xff]
    %v2364 = vld [vmem:[#allocation6 + $0x140] sm:$0xff]
    %v2365 = vld [vmem:[#allocation6 + $0x148] sm:$0xff]
    %v2366 = vld [vmem:[#allocation6 + $0x150] sm:$0xff]
    %v2367 = vld [vmem:[#allocation6 + $0x158] sm:$0xff]
    %v2368 = vld [vmem:[#allocation6 + $0x160] sm:$0xff]
    %v2369 = vld [vmem:[#allocation6 + $0x168] sm:$0xff]
    %v2370 = vld [vmem:[#allocation6 + $0x170] sm:$0xff]
    %v2371 = vld [vmem:[#allocation6 + $0x178] sm:$0xff]
    %v2372 = vld [vmem:[#allocation6 + $0x180] sm:$0xff]
    %v2373 = vld [vmem:[#allocation6 + $0x188] sm:$0xff]
    %v2374 = vld [vmem:[#allocation6 + $0x190] sm:$0xff]
    %v2375 = vld [vmem:[#allocation6 + $0x198] sm:$0xff]
    %v2376 = vld [vmem:[#allocation6 + $0x1a0] sm:$0xff]
    %v2377 = vld [vmem:[#allocation6 + $0x1a8] sm:$0xff]
    %v2378 = vld [vmem:[#allocation6 + $0x1b0] sm:$0xff]
    %v2379 = vld [vmem:[#allocation6 + $0x1b8] sm:$0xff]
    %v2380 = vld [vmem:[#allocation6 + $0x1c0] sm:$0xff]
    %v2381 = vld [vmem:[#allocation6 + $0x1c8] sm:$0xff]
    %v2382 = vld [vmem:[#allocation6 + $0x1d0] sm:$0xff]
    %v2383 = vld [vmem:[#allocation6 + $0x1d8] sm:$0xff]
    %v2384 = vld [vmem:[#allocation6 + $0x1e0] sm:$0xff]
    %v2385 = vld [vmem:[#allocation6 + $0x1e8] sm:$0xff]
    %v2386 = vld [vmem:[#allocation6 + $0x1f0] sm:$0xff]
    %v2387 = vld [vmem:[#allocation6 + $0x1f8] sm:$0xff]
    %v2388 = vld [vmem:[#allocation6 + $0x200] sm:$0xff]
    %v2389 = vld [vmem:[#allocation6 + $0x208] sm:$0xff]
    %v2390 = vld [vmem:[#allocation6 + $0x210] sm:$0xff]
    %v2391 = vld [vmem:[#allocation6 + $0x218] sm:$0xff]
    %v2392 = vld [vmem:[#allocation6 + $0x220] sm:$0xff]
    %v2393 = vld [vmem:[#allocation6 + $0x228] sm:$0xff]
    %v2394 = vld [vmem:[#allocation6 + $0x230] sm:$0xff]
    %v2395 = vld [vmem:[#allocation6 + $0x238] sm:$0xff]
    %v2396 = vld [vmem:[#allocation6 + $0x240] sm:$0xff]
    %v2397 = vld [vmem:[#allocation6 + $0x248] sm:$0xff]
    %v2398 = vld [vmem:[#allocation6 + $0x250] sm:$0xff]
    %v2399 = vld [vmem:[#allocation6 + $0x258] sm:$0xff]
    %v2400 = vld [vmem:[#allocation6 + $0x260] sm:$0xff]
    %v2401 = vld [vmem:[#allocation6 + $0x268] sm:$0xff]
    %v2402 = vld [vmem:[#allocation6 + $0x270] sm:$0xff]
    %v2403 = vld [vmem:[#allocation6 + $0x278] sm:$0xff]
    %v2404 = vld [vmem:[#allocation6 + $0x280] sm:$0xff]
    %v2405 = vld [vmem:[#allocation6 + $0x288] sm:$0xff]
    %v2406 = vld [vmem:[#allocation6 + $0x290] sm:$0xff]
    %v2407 = vld [vmem:[#allocation6 + $0x298] sm:$0xff]
    %v2408 = vld [vmem:[#allocation6 + $0x2a0] sm:$0xff]
    %v2409 = vld [vmem:[#allocation6 + $0x2a8] sm:$0xff]
    %v2410 = vld [vmem:[#allocation6 + $0x2b0] sm:$0xff]
    %v2411 = vld [vmem:[#allocation6 + $0x2b8] sm:$0xff]
    %v2412 = vld [vmem:[#allocation6 + $0x2c0] sm:$0xff]
    %v2413 = vld [vmem:[#allocation6 + $0x2c8] sm:$0xff]
    %v2414 = vld [vmem:[#allocation6 + $0x2d0] sm:$0xff]
    %v2415 = vld [vmem:[#allocation6 + $0x2d8] sm:$0xff]
    %v2416 = vld [vmem:[#allocation6 + $0x2e0] sm:$0xff]
    %v2417 = vld [vmem:[#allocation6 + $0x2e8] sm:$0xff]
    %v2418 = vld [vmem:[#allocation6 + $0x2f0] sm:$0xff]
    %v2419 = vld [vmem:[#allocation6 + $0x2f8] sm:$0xff]
    %v2420 = vld [vmem:[#allocation6 + $0x300] sm:$0xff]
    %v2421 = vld [vmem:[#allocation6 + $0x308] sm:$0xff]
    %v2422 = vld [vmem:[#allocation6 + $0x310] sm:$0xff]
    %v2423 = vld [vmem:[#allocation6 + $0x318] sm:$0xff]
    %v2424 = vld [vmem:[#allocation6 + $0x320] sm:$0xff]
    %v2425 = vld [vmem:[#allocation6 + $0x328] sm:$0xff]
    %v2426 = vld [vmem:[#allocation6 + $0x330] sm:$0xff]
    %v2427 = vld [vmem:[#allocation6 + $0x338] sm:$0xff]
    %v2428 = vld [vmem:[#allocation6 + $0x340] sm:$0xff]
    %v2429 = vld [vmem:[#allocation6 + $0x348] sm:$0xff]
    %v2430 = vld [vmem:[#allocation6 + $0x350] sm:$0xff]
    %v2431 = vld [vmem:[#allocation6 + $0x358] sm:$0xff]
    %v2432 = vld [vmem:[#allocation6 + $0x360] sm:$0xff]
    %v2433 = vld [vmem:[#allocation6 + $0x368] sm:$0xff]
    %v2434 = vld [vmem:[#allocation6 + $0x370] sm:$0xff]
    %v2435 = vld [vmem:[#allocation6 + $0x378] sm:$0xff]
    %v2436 = vld [vmem:[#allocation6 + $0x380] sm:$0xff]
    %v2437 = vld [vmem:[#allocation6 + $0x388] sm:$0xff]
    %v2438 = vld [vmem:[#allocation6 + $0x390] sm:$0xff]
    %v2439 = vld [vmem:[#allocation6 + $0x398] sm:$0xff]
    %v2440 = vld [vmem:[#allocation6 + $0x3a0] sm:$0xff]
    %v2441 = vld [vmem:[#allocation6 + $0x3a8] sm:$0xff]
    %v2442 = vld [vmem:[#allocation6 + $0x3b0] sm:$0xff]
    %v2443 = vld [vmem:[#allocation6 + $0x3b8] sm:$0xff]
    %v2444 = vld [vmem:[#allocation6 + $0x3c0] sm:$0xff]
    %v2445 = vld [vmem:[#allocation6 + $0x3c8] sm:$0xff]
    %v2446 = vld [vmem:[#allocation6 + $0x3d0] sm:$0xff]
    %v2447 = vld [vmem:[#allocation6 + $0x3d8] sm:$0xff]
    %v2448 = vld [vmem:[#allocation6 + $0x3e0] sm:$0xff]
    %v2449 = vld [vmem:[#allocation6 + $0x3e8] sm:$0xff]
    %v2450 = vld [vmem:[#allocation6 + $0x3f0] sm:$0xff]
    %v2451 = vld [vmem:[#allocation6 + $0x3f8] sm:$0xff]
    %v2452 = vld [vmem:[#allocation6 + $0x400] sm:$0xff]
    %v2453 = vld [vmem:[#allocation6 + $0x408] sm:$0xff]
    %v2454 = vld [vmem:[#allocation6 + $0x410] sm:$0xff]
    %v2455 = vld [vmem:[#allocation6 + $0x418] sm:$0xff]
    %v2456 = vld [vmem:[#allocation6 + $0x420] sm:$0xff]
    %v2457 = vld [vmem:[#allocation6 + $0x428] sm:$0xff]
    %v2458 = vld [vmem:[#allocation6 + $0x430] sm:$0xff]
    %v2459 = vld [vmem:[#allocation6 + $0x438] sm:$0xff]
    %v2460 = vld [vmem:[#allocation6 + $0x440] sm:$0xff]
    %v2461 = vld [vmem:[#allocation6 + $0x448] sm:$0xff]
    %v2462 = vld [vmem:[#allocation6 + $0x450] sm:$0xff]
    %v2463 = vld [vmem:[#allocation6 + $0x458] sm:$0xff]
    %v2464 = vld [vmem:[#allocation6 + $0x460] sm:$0xff]
    %v2465 = vld [vmem:[#allocation6 + $0x468] sm:$0xff]
    %v2466 = vld [vmem:[#allocation6 + $0x470] sm:$0xff]
    %v2467 = vld [vmem:[#allocation6 + $0x478] sm:$0xff]
    %v2468 = vld [vmem:[#allocation6 + $0x480] sm:$0xff]
    %v2469 = vld [vmem:[#allocation6 + $0x488] sm:$0xff]
    %v2470 = vld [vmem:[#allocation6 + $0x490] sm:$0xff]
    %v2471 = vld [vmem:[#allocation6 + $0x498] sm:$0xff]
    %v2472 = vld [vmem:[#allocation6 + $0x4a0] sm:$0xff]
    %v2473 = vld [vmem:[#allocation6 + $0x4a8] sm:$0xff]
    %v2474 = vld [vmem:[#allocation6 + $0x4b0] sm:$0xff]
    %v2475 = vld [vmem:[#allocation6 + $0x4b8] sm:$0xff]
    %v2476 = vld [vmem:[#allocation6 + $0x4c0] sm:$0xff]
    %v2477 = vld [vmem:[#allocation6 + $0x4c8] sm:$0xff]
    %v2478 = vld [vmem:[#allocation6 + $0x4d0] sm:$0xff]
    %v2479 = vld [vmem:[#allocation6 + $0x4d8] sm:$0xff]
    %v2480 = vld [vmem:[#allocation6 + $0x4e0] sm:$0xff]
    %v2481 = vld [vmem:[#allocation6 + $0x4e8] sm:$0xff]
    %v2482 = vld [vmem:[#allocation6 + $0x4f0] sm:$0xff]
    %v2483 = vld [vmem:[#allocation6 + $0x4f8] sm:$0xff]
    %v2484 = vld [vmem:[#allocation6 + $0x500] sm:$0xff]
    %v2485 = vld [vmem:[#allocation6 + $0x508] sm:$0xff]
    %v2486 = vld [vmem:[#allocation6 + $0x510] sm:$0xff]
    %v2487 = vld [vmem:[#allocation6 + $0x518] sm:$0xff]
    %v2488 = vld [vmem:[#allocation6 + $0x520] sm:$0xff]
    %v2489 = vld [vmem:[#allocation6 + $0x528] sm:$0xff]
    %v2490 = vld [vmem:[#allocation6 + $0x530] sm:$0xff]
    %v2491 = vld [vmem:[#allocation6 + $0x538] sm:$0xff]
    %v2492 = vld [vmem:[#allocation6 + $0x540] sm:$0xff]
    %v2493 = vld [vmem:[#allocation6 + $0x548] sm:$0xff]
    %v2494 = vld [vmem:[#allocation6 + $0x550] sm:$0xff]
    %v2495 = vld [vmem:[#allocation6 + $0x558] sm:$0xff]
    %v2496 = vld [vmem:[#allocation6 + $0x560] sm:$0xff]
    %v2497 = vld [vmem:[#allocation6 + $0x568] sm:$0xff]
    %v2498 = vld [vmem:[#allocation6 + $0x570] sm:$0xff]
    %v2499 = vld [vmem:[#allocation6 + $0x578] sm:$0xff]
    %v2500 = vld [vmem:[#allocation6 + $0x580] sm:$0xff]
    %v2501 = vld [vmem:[#allocation6 + $0x588] sm:$0xff]
    %v2502 = vld [vmem:[#allocation6 + $0x590] sm:$0xff]
    %v2503 = vld [vmem:[#allocation6 + $0x598] sm:$0xff]
    %v2504 = vld [vmem:[#allocation6 + $0x5a0] sm:$0xff]
    %v2505 = vld [vmem:[#allocation6 + $0x5a8] sm:$0xff]
    %v2506 = vld [vmem:[#allocation6 + $0x5b0] sm:$0xff]
    %v2507 = vld [vmem:[#allocation6 + $0x5b8] sm:$0xff]
    %v2508 = vld [vmem:[#allocation6 + $0x5c0] sm:$0xff]
    %v2509 = vld [vmem:[#allocation6 + $0x5c8] sm:$0xff]
    %v2510 = vld [vmem:[#allocation6 + $0x5d0] sm:$0xff]
    %v2511 = vld [vmem:[#allocation6 + $0x5d8] sm:$0xff]
    %v2512 = vld [vmem:[#allocation6 + $0x5e0] sm:$0xff]
    %v2513 = vld [vmem:[#allocation6 + $0x5e8] sm:$0xff]
    %v2514 = vld [vmem:[#allocation6 + $0x5f0] sm:$0xff]
    %v2515 = vld [vmem:[#allocation6 + $0x5f8] sm:$0xff]
    %v2516 = vld [vmem:[#allocation6 + $0x600] sm:$0xff]
    %v2517 = vld [vmem:[#allocation6 + $0x608] sm:$0xff]
    %v2518 = vld [vmem:[#allocation6 + $0x610] sm:$0xff]
    %v2519 = vld [vmem:[#allocation6 + $0x618] sm:$0xff]
    %v2520 = vld [vmem:[#allocation6 + $0x620] sm:$0xff]
    %v2521 = vld [vmem:[#allocation6 + $0x628] sm:$0xff]
    %v2522 = vld [vmem:[#allocation6 + $0x630] sm:$0xff]
    %v2523 = vld [vmem:[#allocation6 + $0x638] sm:$0xff]
    %v2524 = vld [vmem:[#allocation6 + $0x640] sm:$0xff]
    %v2525 = vld [vmem:[#allocation6 + $0x648] sm:$0xff]
    %v2526 = vld [vmem:[#allocation6 + $0x650] sm:$0xff]
    %v2527 = vld [vmem:[#allocation6 + $0x658] sm:$0xff]
    %v2528 = vld [vmem:[#allocation6 + $0x660] sm:$0xff]
    %v2529 = vld [vmem:[#allocation6 + $0x668] sm:$0xff]
    %v2530 = vld [vmem:[#allocation6 + $0x670] sm:$0xff]
    %v2531 = vld [vmem:[#allocation6 + $0x678] sm:$0xff]
    %v2532 = vld [vmem:[#allocation6 + $0x680] sm:$0xff]
    %v2533 = vld [vmem:[#allocation6 + $0x688] sm:$0xff]
    %v2534 = vld [vmem:[#allocation6 + $0x690] sm:$0xff]
    %v2535 = vld [vmem:[#allocation6 + $0x698] sm:$0xff]
    %v2536 = vld [vmem:[#allocation6 + $0x6a0] sm:$0xff]
    %v2537 = vld [vmem:[#allocation6 + $0x6a8] sm:$0xff]
    %v2538 = vld [vmem:[#allocation6 + $0x6b0] sm:$0xff]
    %v2539 = vld [vmem:[#allocation6 + $0x6b8] sm:$0xff]
    %v2540 = vld [vmem:[#allocation6 + $0x6c0] sm:$0xff]
    %v2541 = vld [vmem:[#allocation6 + $0x6c8] sm:$0xff]
    %v2542 = vld [vmem:[#allocation6 + $0x6d0] sm:$0xff]
    %v2543 = vld [vmem:[#allocation6 + $0x6d8] sm:$0xff]
    %v2544 = vld [vmem:[#allocation6 + $0x6e0] sm:$0xff]
    %v2545 = vld [vmem:[#allocation6 + $0x6e8] sm:$0xff]
    %v2546 = vld [vmem:[#allocation6 + $0x6f0] sm:$0xff]
    %v2547 = vld [vmem:[#allocation6 + $0x6f8] sm:$0xff]
    %v2548 = vld [vmem:[#allocation6 + $0x700] sm:$0xff]
    %v2549 = vld [vmem:[#allocation6 + $0x708] sm:$0xff]
    %v2550 = vld [vmem:[#allocation6 + $0x710] sm:$0xff]
    %v2551 = vld [vmem:[#allocation6 + $0x718] sm:$0xff]
    %v2552 = vld [vmem:[#allocation6 + $0x720] sm:$0xff]
    %v2553 = vld [vmem:[#allocation6 + $0x728] sm:$0xff]
    %v2554 = vld [vmem:[#allocation6 + $0x730] sm:$0xff]
    %v2555 = vld [vmem:[#allocation6 + $0x738] sm:$0xff]
    %v2556 = vld [vmem:[#allocation6 + $0x740] sm:$0xff]
    %v2557 = vld [vmem:[#allocation6 + $0x748] sm:$0xff]
    %v2558 = vld [vmem:[#allocation6 + $0x750] sm:$0xff]
    %v2559 = vld [vmem:[#allocation6 + $0x758] sm:$0xff]
    %v2560 = vld [vmem:[#allocation6 + $0x760] sm:$0xff]
    %v2561 = vld [vmem:[#allocation6 + $0x768] sm:$0xff]
    %v2562 = vld [vmem:[#allocation6 + $0x770] sm:$0xff]
    %v2563 = vld [vmem:[#allocation6 + $0x778] sm:$0xff]
    %v2564 = vld [vmem:[#allocation6 + $0x780] sm:$0xff]
    %v2565 = vld [vmem:[#allocation6 + $0x788] sm:$0xff]
    %v2566 = vld [vmem:[#allocation6 + $0x790] sm:$0xff]
    %v2567 = vld [vmem:[#allocation6 + $0x798] sm:$0xff]
    %v2568 = vld [vmem:[#allocation6 + $0x7a0] sm:$0xff]
    %v2569 = vld [vmem:[#allocation6 + $0x7a8] sm:$0xff]
    %v2570 = vld [vmem:[#allocation6 + $0x7b0] sm:$0xff]
    %v2571 = vld [vmem:[#allocation6 + $0x7b8] sm:$0xff]
    %v2572 = vld [vmem:[#allocation6 + $0x7c0] sm:$0xff]
    %v2573 = vld [vmem:[#allocation6 + $0x7c8] sm:$0xff]
    %v2574 = vld [vmem:[#allocation6 + $0x7d0] sm:$0xff]
    %v2575 = vld [vmem:[#allocation6 + $0x7d8] sm:$0xff]
    %v2576 = vld [vmem:[#allocation6 + $0x7e0] sm:$0xff]
    %v2577 = vld [vmem:[#allocation6 + $0x7e8] sm:$0xff]
    %v2578 = vld [vmem:[#allocation6 + $0x7f0] sm:$0xff]
    %v2579 = vld [vmem:[#allocation6 + $0x7f8] sm:$0xff]
    %v2580 = vld [vmem:[#allocation16] sm:$0xff]
    %v2582 = vlaneseq
    %v2583 = vshrl.u32 %v2582, 7
    %v2584 = vsub.s32 0, %v2583
    %v2585 = vrot.slane %v2580, %v2584
    %v2586 = vlaneseq
    %v2587 = vshrl.u32 %v2586, 7
    %v2588 = vsub.s32 1, %v2587
    %v2589 = vrot.slane %v2580, %v2588
    %v2590 = vlaneseq
    %v2591 = vshrl.u32 %v2590, 7
    %v2592 = vsub.s32 2, %v2591
    %v2593 = vrot.slane %v2580, %v2592
    %v2594 = vlaneseq
    %v2595 = vshrl.u32 %v2594, 7
    %v2596 = vsub.s32 3, %v2595
    %v2597 = vrot.slane %v2580, %v2596
    %v2598 = vlaneseq
    %v2599 = vshrl.u32 %v2598, 7
    %v2600 = vsub.s32 4, %v2599
    %v2601 = vrot.slane %v2580, %v2600
    %v2602 = vlaneseq
    %v2603 = vshrl.u32 %v2602, 7
    %v2604 = vsub.s32 5, %v2603
    %v2605 = vrot.slane %v2580, %v2604
    %v2606 = vlaneseq
    %v2607 = vshrl.u32 %v2606, 7
    %v2608 = vsub.s32 6, %v2607
    %v2609 = vrot.slane %v2580, %v2608
    %v2610 = vlaneseq
    %v2611 = vshrl.u32 %v2610, 7
    %v2612 = vsub.s32 7, %v2611
    %v2613 = vrot.slane %v2580, %v2612
    %2622 = vmatprep.subr.bf16.mxu0 %v2325
    %2623 = vmatpush1.bf16.msra.mxu0 %v2324
    %2624 = vmatprep.subr.bf16.mxu0 %v2333
    %2625 = vmatpush1.bf16.msra.mxu0 %v2332
    %2626 = vmatprep.subr.bf16.mxu0 %v2341
    %2627 = vmatpush1.bf16.msra.mxu0 %v2340
    %2628 = vmatprep.subr.bf16.mxu0 %v2349
    %2629 = vmatpush1.bf16.msra.mxu0 %v2348
    %2630 = vmatprep.subr.bf16.mxu0 %v2357
    %2631 = vmatpush1.bf16.msra.mxu0 %v2356
    %2632 = vmatprep.subr.bf16.mxu0 %v2365
    %2633 = vmatpush1.bf16.msra.mxu0 %v2364
    %2634 = vmatprep.subr.bf16.mxu0 %v2373
    %2635 = vmatpush1.bf16.msra.mxu0 %v2372
    %2636 = vmatprep.subr.bf16.mxu0 %v2381
    %2637 = vmatpush1.bf16.msra.mxu0 %v2380
    %2638 = vmatprep.subr.bf16.mxu0 %v2389
    %2639 = vmatpush1.bf16.msra.mxu0 %v2388
    %2640 = vmatprep.subr.bf16.mxu0 %v2397
    %2641 = vmatpush1.bf16.msra.mxu0 %v2396
    %2642 = vmatprep.subr.bf16.mxu0 %v2405
    %2643 = vmatpush1.bf16.msra.mxu0 %v2404
    %2644 = vmatprep.subr.bf16.mxu0 %v2413
    %2645 = vmatpush1.bf16.msra.mxu0 %v2412
    %2646 = vmatprep.subr.bf16.mxu0 %v2421
    %2647 = vmatpush1.bf16.msra.mxu0 %v2420
    %2648 = vmatprep.subr.bf16.mxu0 %v2429
    %2649 = vmatpush1.bf16.msra.mxu0 %v2428
    %2650 = vmatprep.subr.bf16.mxu0 %v2437
    %2651 = vmatpush1.bf16.msra.mxu0 %v2436
    %2652 = vmatprep.subr.bf16.mxu0 %v2445
    %2653 = vmatpush1.bf16.msra.mxu0 %v2444
    %2654 = vmatprep.mubr.bf16.mxu0 %v2313
    %2655 = vmatmul.mubr.bf16.gmra.mrb[0].mxu0 %v2312
    %v2656 = vpop.f32.mrb[0].mxu0
    %v2657 = vadd.f32 %v2585, %v2656
    %v2658 = vpop.f32.mrb[0].mxu0
    %v2659 = vadd.f32 %v2589, %v2658
    %v2660 = vpop.f32.mrb[0].mxu0
    %v2661 = vpop.f32.mrb[0].mxu0
    %2662 = vdwg.mxu0
    %2663 = vmatprep.subr.bf16.mxu0 %v2453
    %2664 = vmatpush1.bf16.msra.mxu0 %v2452
    %2665 = vmatprep.subr.bf16.mxu0 %v2461
    %2666 = vmatpush1.bf16.msra.mxu0 %v2460
    %2667 = vmatprep.subr.bf16.mxu0 %v2469
    %2668 = vmatpush1.bf16.msra.mxu0 %v2468
    %2669 = vmatprep.subr.bf16.mxu0 %v2477
    %2670 = vmatpush1.bf16.msra.mxu0 %v2476
    %2671 = vmatprep.subr.bf16.mxu0 %v2485
    %2672 = vmatpush1.bf16.msra.mxu0 %v2484
    %2673 = vmatprep.subr.bf16.mxu0 %v2493
    %2674 = vmatpush1.bf16.msra.mxu0 %v2492
    %2675 = vmatprep.subr.bf16.mxu0 %v2501
    %2676 = vmatpush1.bf16.msra.mxu0 %v2500
    %2677 = vmatprep.subr.bf16.mxu0 %v2509
    %2678 = vmatpush1.bf16.msra.mxu0 %v2508
    %2679 = vmatprep.subr.bf16.mxu0 %v2517
    %2680 = vmatpush1.bf16.msra.mxu0 %v2516
    %2681 = vmatprep.subr.bf16.mxu0 %v2525
    %2682 = vmatpush1.bf16.msra.mxu0 %v2524
    %2683 = vmatprep.subr.bf16.mxu0 %v2533
    %2684 = vmatpush1.bf16.msra.mxu0 %v2532
    %2685 = vmatprep.subr.bf16.mxu0 %v2541
    %2686 = vmatpush1.bf16.msra.mxu0 %v2540
    %2687 = vmatprep.subr.bf16.mxu0 %v2549
    %2688 = vmatpush1.bf16.msra.mxu0 %v2548
    %2689 = vmatprep.subr.bf16.mxu0 %v2557
    %2690 = vmatpush1.bf16.msra.mxu0 %v2556
    %2691 = vmatprep.subr.bf16.mxu0 %v2565
    %2692 = vmatpush1.bf16.msra.mxu0 %v2564
    %2693 = vmatprep.subr.bf16.mxu0 %v2573
    %2694 = vmatpush1.bf16.msra.mxu0 %v2572
    %2695 = vmatprep.mubr.bf16.mxu0 %v2315
    %2696 = vmatmul.mubr.bf16.gmra.mrb[0].mxu0 %v2314
    %v2697 = vpop.f32.mrb[0].mxu0
    %v2698 = vadd.f32 %v2657, %v2697
    %v2699 = vpop.f32.mrb[0].mxu0
    %v2700 = vadd.f32 %v2659, %v2699
    %v2701 = vpop.f32.mrb[0].mxu0
    %v2702 = vpop.f32.mrb[0].mxu0
    %2703 = vdwg.mxu0
    %2704 = vmatprep.subr.bf16.mxu0 %v2327
    %2705 = vmatpush1.bf16.msra.mxu0 %v2326
    %2706 = vmatprep.subr.bf16.mxu0 %v2335
    %2707 = vmatpush1.bf16.msra.mxu0 %v2334
    %2708 = vmatprep.subr.bf16.mxu0 %v2343
    %2709 = vmatpush1.bf16.msra.mxu0 %v2342
    %2710 = vmatprep.subr.bf16.mxu0 %v2351
    %2711 = vmatpush1.bf16.msra.mxu0 %v2350
    %2712 = vmatprep.subr.bf16.mxu0 %v2359
    %2713 = vmatpush1.bf16.msra.mxu0 %v2358
    %2714 = vmatprep.subr.bf16.mxu0 %v2367
    %2715 = vmatpush1.bf16.msra.mxu0 %v2366
    %2716 = vmatprep.subr.bf16.mxu0 %v2375
    %2717 = vmatpush1.bf16.msra.mxu0 %v2374
    %2718 = vmatprep.subr.bf16.mxu0 %v2383
    %2719 = vmatpush1.bf16.msra.mxu0 %v2382
    %2720 = vmatprep.subr.bf16.mxu0 %v2391
    %2721 = vmatpush1.bf16.msra.mxu0 %v2390
    %2722 = vmatprep.subr.bf16.mxu0 %v2399
    %2723 = vmatpush1.bf16.msra.mxu0 %v2398
    %2724 = vmatprep.subr.bf16.mxu0 %v2407
    %2725 = vmatpush1.bf16.msra.mxu0 %v2406
    %2726 = vmatprep.subr.bf16.mxu0 %v2415
    %2727 = vmatpush1.bf16.msra.mxu0 %v2414
    %2728 = vmatprep.subr.bf16.mxu0 %v2423
    %2729 = vmatpush1.bf16.msra.mxu0 %v2422
    %2730 = vmatprep.subr.bf16.mxu0 %v2431
    %2731 = vmatpush1.bf16.msra.mxu0 %v2430
    %2732 = vmatprep.subr.bf16.mxu0 %v2439
    %2733 = vmatpush1.bf16.msra.mxu0 %v2438
    %2734 = vmatprep.subr.bf16.mxu0 %v2447
    %2735 = vmatpush1.bf16.msra.mxu0 %v2446
    %2736 = vmatprep.mubr.bf16.mxu0 %v2313
    %2737 = vmatmul.mubr.bf16.gmra.mrb[0].mxu0 %v2312
    %v2738 = vpop.f32.mrb[0].mxu0
    %v2739 = vadd.f32 %v2593, %v2738
    %v2740 = vpop.f32.mrb[0].mxu0
    %v2741 = vadd.f32 %v2597, %v2740
    %v2742 = vpop.f32.mrb[0].mxu0
    %v2743 = vpop.f32.mrb[0].mxu0
    %2744 = vdwg.mxu0
    %2745 = vmatprep.subr.bf16.mxu0 %v2455
    %2746 = vmatpush1.bf16.msra.mxu0 %v2454
    %2747 = vmatprep.subr.bf16.mxu0 %v2463
    %2748 = vmatpush1.bf16.msra.mxu0 %v2462
    %2749 = vmatprep.subr.bf16.mxu0 %v2471
    %2750 = vmatpush1.bf16.msra.mxu0 %v2470
    %2751 = vmatprep.subr.bf16.mxu0 %v2479
    %2752 = vmatpush1.bf16.msra.mxu0 %v2478
    %2753 = vmatprep.subr.bf16.mxu0 %v2487
    %2754 = vmatpush1.bf16.msra.mxu0 %v2486
    %2755 = vmatprep.subr.bf16.mxu0 %v2495
    %2756 = vmatpush1.bf16.msra.mxu0 %v2494
    %2757 = vmatprep.subr.bf16.mxu0 %v2503
    %2758 = vmatpush1.bf16.msra.mxu0 %v2502
    %2759 = vmatprep.subr.bf16.mxu0 %v2511
    %2760 = vmatpush1.bf16.msra.mxu0 %v2510
    %2761 = vmatprep.subr.bf16.mxu0 %v2519
    %2762 = vmatpush1.bf16.msra.mxu0 %v2518
    %2763 = vmatprep.subr.bf16.mxu0 %v2527
    %2764 = vmatpush1.bf16.msra.mxu0 %v2526
    %2765 = vmatprep.subr.bf16.mxu0 %v2535
    %2766 = vmatpush1.bf16.msra.mxu0 %v2534
    %2767 = vmatprep.subr.bf16.mxu0 %v2543
    %2768 = vmatpush1.bf16.msra.mxu0 %v2542
    %2769 = vmatprep.subr.bf16.mxu0 %v2551
    %2770 = vmatpush1.bf16.msra.mxu0 %v2550
    %2771 = vmatprep.subr.bf16.mxu0 %v2559
    %2772 = vmatpush1.bf16.msra.mxu0 %v2558
    %2773 = vmatprep.subr.bf16.mxu0 %v2567
    %2774 = vmatpush1.bf16.msra.mxu0 %v2566
    %2775 = vmatprep.subr.bf16.mxu0 %v2575
    %2776 = vmatpush1.bf16.msra.mxu0 %v2574
    %2777 = vmatprep.mubr.bf16.mxu0 %v2315
    %2778 = vmatmul.mubr.bf16.gmra.mrb[0].mxu0 %v2314
    %v2779 = vpop.f32.mrb[0].mxu0
    %v2780 = vadd.f32 %v2739, %v2779
    %v2781 = vpop.f32.mrb[0].mxu0
    %v2782 = vadd.f32 %v2741, %v2781
    %v2783 = vpop.f32.mrb[0].mxu0
    %v2784 = vpop.f32.mrb[0].mxu0
    %2785 = vdwg.mxu0
    %2786 = vmatprep.subr.bf16.mxu0 %v2329
    %2787 = vmatpush1.bf16.msra.mxu0 %v2328
    %2788 = vmatprep.subr.bf16.mxu0 %v2337
    %2789 = vmatpush1.bf16.msra.mxu0 %v2336
    %2790 = vmatprep.subr.bf16.mxu0 %v2345
    %2791 = vmatpush1.bf16.msra.mxu0 %v2344
    %2792 = vmatprep.subr.bf16.mxu0 %v2353
    %2793 = vmatpush1.bf16.msra.mxu0 %v2352
    %2794 = vmatprep.subr.bf16.mxu0 %v2361
    %2795 = vmatpush1.bf16.msra.mxu0 %v2360
    %2796 = vmatprep.subr.bf16.mxu0 %v2369
    %2797 = vmatpush1.bf16.msra.mxu0 %v2368
    %2798 = vmatprep.subr.bf16.mxu0 %v2377
    %2799 = vmatpush1.bf16.msra.mxu0 %v2376
    %2800 = vmatprep.subr.bf16.mxu0 %v2385
    %2801 = vmatpush1.bf16.msra.mxu0 %v2384
    %2802 = vmatprep.subr.bf16.mxu0 %v2393
    %2803 = vmatpush1.bf16.msra.mxu0 %v2392
    %2804 = vmatprep.subr.bf16.mxu0 %v2401
    %2805 = vmatpush1.bf16.msra.mxu0 %v2400
    %2806 = vmatprep.subr.bf16.mxu0 %v2409
    %2807 = vmatpush1.bf16.msra.mxu0 %v2408
    %2808 = vmatprep.subr.bf16.mxu0 %v2417
    %2809 = vmatpush1.bf16.msra.mxu0 %v2416
    %2810 = vmatprep.subr.bf16.mxu0 %v2425
    %2811 = vmatpush1.bf16.msra.mxu0 %v2424
    %2812 = vmatprep.subr.bf16.mxu0 %v2433
    %2813 = vmatpush1.bf16.msra.mxu0 %v2432
    %2814 = vmatprep.subr.bf16.mxu0 %v2441
    %2815 = vmatpush1.bf16.msra.mxu0 %v2440
    %2816 = vmatprep.subr.bf16.mxu0 %v2449
    %2817 = vmatpush1.bf16.msra.mxu0 %v2448
    %2818 = vmatprep.mubr.bf16.mxu0 %v2313
    %2819 = vmatmul.mubr.bf16.gmra.mrb[0].mxu0 %v2312
    %v2820 = vpop.f32.mrb[0].mxu0
    %v2821 = vadd.f32 %v2601, %v2820
    %v2822 = vpop.f32.mrb[0].mxu0
    %v2823 = vadd.f32 %v2605, %v2822
    %v2824 = vpop.f32.mrb[0].mxu0
    %v2825 = vpop.f32.mrb[0].mxu0
    %2826 = vdwg.mxu0
    %2827 = vmatprep.subr.bf16.mxu0 %v2457
    %2828 = vmatpush1.bf16.msra.mxu0 %v2456
    %2829 = vmatprep.subr.bf16.mxu0 %v2465
    %2830 = vmatpush1.bf16.msra.mxu0 %v2464
    %2831 = vmatprep.subr.bf16.mxu0 %v2473
    %2832 = vmatpush1.bf16.msra.mxu0 %v2472
    %2833 = vmatprep.subr.bf16.mxu0 %v2481
    %2834 = vmatpush1.bf16.msra.mxu0 %v2480
    %2835 = vmatprep.subr.bf16.mxu0 %v2489
    %2836 = vmatpush1.bf16.msra.mxu0 %v2488
    %2837 = vmatprep.subr.bf16.mxu0 %v2497
    %2838 = vmatpush1.bf16.msra.mxu0 %v2496
    %2839 = vmatprep.subr.bf16.mxu0 %v2505
    %2840 = vmatpush1.bf16.msra.mxu0 %v2504
    %2841 = vmatprep.subr.bf16.mxu0 %v2513
    %2842 = vmatpush1.bf16.msra.mxu0 %v2512
    %2843 = vmatprep.subr.bf16.mxu0 %v2521
    %2844 = vmatpush1.bf16.msra.mxu0 %v2520
    %2845 = vmatprep.subr.bf16.mxu0 %v2529
    %2846 = vmatpush1.bf16.msra.mxu0 %v2528
    %2847 = vmatprep.subr.bf16.mxu0 %v2537
    %2848 = vmatpush1.bf16.msra.mxu0 %v2536
    %2849 = vmatprep.subr.bf16.mxu0 %v2545
    %2850 = vmatpush1.bf16.msra.mxu0 %v2544
    %2851 = vmatprep.subr.bf16.mxu0 %v2553
    %2852 = vmatpush1.bf16.msra.mxu0 %v2552
    %2853 = vmatprep.subr.bf16.mxu0 %v2561
    %2854 = vmatpush1.bf16.msra.mxu0 %v2560
    %2855 = vmatprep.subr.bf16.mxu0 %v2569
    %2856 = vmatpush1.bf16.msra.mxu0 %v2568
    %2857 = vmatprep.subr.bf16.mxu0 %v2577
    %2858 = vmatpush1.bf16.msra.mxu0 %v2576
    %2859 = vmatprep.mubr.bf16.mxu0 %v2315
    %2860 = vmatmul.mubr.bf16.gmra.mrb[0].mxu0 %v2314
    %v2861 = vpop.f32.mrb[0].mxu0
    %v2862 = vadd.f32 %v2821, %v2861
    %v2863 = vpop.f32.mrb[0].mxu0
    %v2864 = vadd.f32 %v2823, %v2863
    %v2865 = vpop.f32.mrb[0].mxu0
    %v2866 = vpop.f32.mrb[0].mxu0
    %2867 = vdwg.mxu0
    %2868 = vmatprep.subr.bf16.mxu0 %v2331
    %2869 = vmatpush1.bf16.msra.mxu0 %v2330
    %2870 = vmatprep.subr.bf16.mxu0 %v2339
    %2871 = vmatpush1.bf16.msra.mxu0 %v2338
    %2872 = vmatprep.subr.bf16.mxu0 %v2347
    %2873 = vmatpush1.bf16.msra.mxu0 %v2346
    %2874 = vmatprep.subr.bf16.mxu0 %v2355
    %2875 = vmatpush1.bf16.msra.mxu0 %v2354
    %2876 = vmatprep.subr.bf16.mxu0 %v2363
    %2877 = vmatpush1.bf16.msra.mxu0 %v2362
    %2878 = vmatprep.subr.bf16.mxu0 %v2371
    %2879 = vmatpush1.bf16.msra.mxu0 %v2370
    %2880 = vmatprep.subr.bf16.mxu0 %v2379
    %2881 = vmatpush1.bf16.msra.mxu0 %v2378
    %2882 = vmatprep.subr.bf16.mxu0 %v2387
    %2883 = vmatpush1.bf16.msra.mxu0 %v2386
    %2884 = vmatprep.subr.bf16.mxu0 %v2395
    %2885 = vmatpush1.bf16.msra.mxu0 %v2394
    %2886 = vmatprep.subr.bf16.mxu0 %v2403
    %2887 = vmatpush1.bf16.msra.mxu0 %v2402
    %2888 = vmatprep.subr.bf16.mxu0 %v2411
    %2889 = vmatpush1.bf16.msra.mxu0 %v2410
    %2890 = vmatprep.subr.bf16.mxu0 %v2419
    %2891 = vmatpush1.bf16.msra.mxu0 %v2418
    %2892 = vmatprep.subr.bf16.mxu0 %v2427
    %2893 = vmatpush1.bf16.msra.mxu0 %v2426
    %2894 = vmatprep.subr.bf16.mxu0 %v2435
    %2895 = vmatpush1.bf16.msra.mxu0 %v2434
    %2896 = vmatprep.subr.bf16.mxu0 %v2443
    %2897 = vmatpush1.bf16.msra.mxu0 %v2442
    %2898 = vmatprep.subr.bf16.mxu0 %v2451
    %2899 = vmatpush1.bf16.msra.mxu0 %v2450
    %2900 = vmatprep.mubr.bf16.mxu0 %v2313
    %2901 = vmatmul.mubr.bf16.gmra.mrb[0].mxu0 %v2312
    %v2902 = vpop.f32.mrb[0].mxu0
    %v2903 = vadd.f32 %v2609, %v2902
    %v2904 = vpop.f32.mrb[0].mxu0
    %v2905 = vadd.f32 %v2613, %v2904
    %v2906 = vpop.f32.mrb[0].mxu0
    %v2907 = vpop.f32.mrb[0].mxu0
    %2908 = vdwg.mxu0
    %2909 = vmatprep.subr.bf16.mxu0 %v2459
    %2910 = vmatpush1.bf16.msra.mxu0 %v2458
    %2911 = vmatprep.subr.bf16.mxu0 %v2467
    %2912 = vmatpush1.bf16.msra.mxu0 %v2466
    %2913 = vmatprep.subr.bf16.mxu0 %v2475
    %2914 = vmatpush1.bf16.msra.mxu0 %v2474
    %2915 = vmatprep.subr.bf16.mxu0 %v2483
    %2916 = vmatpush1.bf16.msra.mxu0 %v2482
    %2917 = vmatprep.subr.bf16.mxu0 %v2491
    %2918 = vmatpush1.bf16.msra.mxu0 %v2490
    %2919 = vmatprep.subr.bf16.mxu0 %v2499
    %2920 = vmatpush1.bf16.msra.mxu0 %v2498
    %2921 = vmatprep.subr.bf16.mxu0 %v2507
    %2922 = vmatpush1.bf16.msra.mxu0 %v2506
    %2923 = vmatprep.subr.bf16.mxu0 %v2515
    %2924 = vmatpush1.bf16.msra.mxu0 %v2514
    %2925 = vmatprep.subr.bf16.mxu0 %v2523
    %2926 = vmatpush1.bf16.msra.mxu0 %v2522
    %2927 = vmatprep.subr.bf16.mxu0 %v2531
    %2928 = vmatpush1.bf16.msra.mxu0 %v2530
    %2929 = vmatprep.subr.bf16.mxu0 %v2539
    %2930 = vmatpush1.bf16.msra.mxu0 %v2538
    %2931 = vmatprep.subr.bf16.mxu0 %v2547
    %2932 = vmatpush1.bf16.msra.mxu0 %v2546
    %2933 = vmatprep.subr.bf16.mxu0 %v2555
    %2934 = vmatpush1.bf16.msra.mxu0 %v2554
    %2935 = vmatprep.subr.bf16.mxu0 %v2563
    %2936 = vmatpush1.bf16.msra.mxu0 %v2562
    %2937 = vmatprep.subr.bf16.mxu0 %v2571
    %2938 = vmatpush1.bf16.msra.mxu0 %v2570
    %2939 = vmatprep.subr.bf16.mxu0 %v2579
    %2940 = vmatpush1.bf16.msra.mxu0 %v2578
    %2941 = vmatprep.mubr.bf16.mxu0 %v2315
    %2942 = vmatmul.mubr.bf16.gmra.mrb[0].mxu0 %v2314
    %v2943 = vpop.f32.mrb[0].mxu0
    %v2944 = vadd.f32 %v2903, %v2943
    %v2945 = vpop.f32.mrb[0].mxu0
    %v2946 = vadd.f32 %v2905, %v2945
    %v2947 = vpop.f32.mrb[0].mxu0
    %v2948 = vpop.f32.mrb[0].mxu0
    %2949 = vdwg.mxu0
    %v2950 = vmax.f32 %v2698, 0.0
    %v2951 = vmax.f32 %v2700, 0.0
    %v2952 = vmax.f32 %v2780, 0.0
    %v2953 = vmax.f32 %v2782, 0.0
    %v2954 = vmax.f32 %v2862, 0.0
    %v2955 = vmax.f32 %v2864, 0.0
    %v2956 = vmax.f32 %v2944, 0.0
    %v2957 = vmax.f32 %v2946, 0.0
    %v2958 = vpack.c.bf16 %v2950, %v2950
    %v2959 = vpack.c.bf16 %v2951, %v2951
    %v2960 = vpack.c.bf16 %v2952, %v2952
    %v2961 = vpack.c.bf16 %v2953, %v2953
    %v2962 = vpack.c.bf16 %v2954, %v2954
    %v2963 = vpack.c.bf16 %v2955, %v2955
    %v2964 = vpack.c.bf16 %v2956, %v2956
    %v2965 = vpack.c.bf16 %v2957, %v2957
    // Predicated region
    $region78: #{conv_autoencoder_forward.1} parent=1 // pred_check
      %p2966 = pneg %p104
    $region79: #{conv_autoencoder_forward.1} parent=1 // pred_check_branch
      %2968 = sbr.rel (%p2966) target = $region81
    $region80: #{conv_autoencoder_forward.1} parent=1 // pred_region
      %s2969 = scalar_lea.sflag [#allocation8], 5
      %s2970 = smul.u32 4, 128
      %s2971 = smul.u32 %s2970, 6
      %s2972 = sshll.u32 %s2971, 4
      %2973 = dma.done %s2969, %s2972
    $region81: #{conv_autoencoder_forward.1} parent=1 // pred_fallthru
      _
    %v2974 = vld [vmem:[#allocation7] sm:$0xff]
    %v2975 = vld [vmem:[#allocation7 + $0x8] sm:$0xff]
    %v2976 = vld [vmem:[#allocation7 + $0x10] sm:$0xff]
    %v2977 = vld [vmem:[#allocation7 + $0x18] sm:$0xff]
    %v2978 = vld [vmem:[#allocation7 + $0x20] sm:$0xff]
    %v2979 = vld [vmem:[#allocation7 + $0x28] sm:$0xff]
    %v2980 = vld [vmem:[#allocation7 + $0x30] sm:$0xff]
    %v2981 = vld [vmem:[#allocation7 + $0x38] sm:$0xff]
    %v2982 = vld [vmem:[#allocation7 + $0x40] sm:$0xff]
    %v2983 = vld [vmem:[#allocation7 + $0x48] sm:$0xff]
    %v2984 = vld [vmem:[#allocation7 + $0x50] sm:$0xff]
    %v2985 = vld [vmem:[#allocation7 + $0x58] sm:$0xff]
    %v2986 = vld [vmem:[#allocation7 + $0x60] sm:$0xff]
    %v2987 = vld [vmem:[#allocation7 + $0x68] sm:$0xff]
    %v2988 = vld [vmem:[#allocation7 + $0x70] sm:$0xff]
    %v2989 = vld [vmem:[#allocation7 + $0x78] sm:$0xff]
    %v2990 = vld [vmem:[#allocation7 + $0x80] sm:$0xff]
    %v2991 = vld [vmem:[#allocation7 + $0x88] sm:$0xff]
    %v2992 = vld [vmem:[#allocation7 + $0x90] sm:$0xff]
    %v2993 = vld [vmem:[#allocation7 + $0x98] sm:$0xff]
    %v2994 = vld [vmem:[#allocation7 + $0xa0] sm:$0xff]
    %v2995 = vld [vmem:[#allocation7 + $0xa8] sm:$0xff]
    %v2996 = vld [vmem:[#allocation7 + $0xb0] sm:$0xff]
    %v2997 = vld [vmem:[#allocation7 + $0xb8] sm:$0xff]
    %v2998 = vld [vmem:[#allocation7 + $0xc0] sm:$0xff]
    %v2999 = vld [vmem:[#allocation7 + $0xc8] sm:$0xff]
    %v3000 = vld [vmem:[#allocation7 + $0xd0] sm:$0xff]
    %v3001 = vld [vmem:[#allocation7 + $0xd8] sm:$0xff]
    %v3002 = vld [vmem:[#allocation7 + $0xe0] sm:$0xff]
    %v3003 = vld [vmem:[#allocation7 + $0xe8] sm:$0xff]
    %v3004 = vld [vmem:[#allocation7 + $0xf0] sm:$0xff]
    %v3005 = vld [vmem:[#allocation7 + $0xf8] sm:$0xff]
    %v3006 = vld [vmem:[#allocation7 + $0x100] sm:$0xff]
    %v3007 = vld [vmem:[#allocation7 + $0x108] sm:$0xff]
    %v3008 = vld [vmem:[#allocation7 + $0x110] sm:$0xff]
    %v3009 = vld [vmem:[#allocation7 + $0x118] sm:$0xff]
    %v3010 = vld [vmem:[#allocation7 + $0x120] sm:$0xff]
    %v3011 = vld [vmem:[#allocation7 + $0x128] sm:$0xff]
    %v3012 = vld [vmem:[#allocation7 + $0x130] sm:$0xff]
    %v3013 = vld [vmem:[#allocation7 + $0x138] sm:$0xff]
    %v3014 = vld [vmem:[#allocation7 + $0x140] sm:$0xff]
    %v3015 = vld [vmem:[#allocation7 + $0x148] sm:$0xff]
    %v3016 = vld [vmem:[#allocation7 + $0x150] sm:$0xff]
    %v3017 = vld [vmem:[#allocation7 + $0x158] sm:$0xff]
    %v3018 = vld [vmem:[#allocation7 + $0x160] sm:$0xff]
    %v3019 = vld [vmem:[#allocation7 + $0x168] sm:$0xff]
    %v3020 = vld [vmem:[#allocation7 + $0x170] sm:$0xff]
    %v3021 = vld [vmem:[#allocation7 + $0x178] sm:$0xff]
    %v3022 = vld [vmem:[#allocation7 + $0x180] sm:$0xff]
    %v3023 = vld [vmem:[#allocation7 + $0x188] sm:$0xff]
    %v3024 = vld [vmem:[#allocation7 + $0x190] sm:$0xff]
    %v3025 = vld [vmem:[#allocation7 + $0x198] sm:$0xff]
    %v3026 = vld [vmem:[#allocation7 + $0x1a0] sm:$0xff]
    %v3027 = vld [vmem:[#allocation7 + $0x1a8] sm:$0xff]
    %v3028 = vld [vmem:[#allocation7 + $0x1b0] sm:$0xff]
    %v3029 = vld [vmem:[#allocation7 + $0x1b8] sm:$0xff]
    %v3030 = vld [vmem:[#allocation7 + $0x1c0] sm:$0xff]
    %v3031 = vld [vmem:[#allocation7 + $0x1c8] sm:$0xff]
    %v3032 = vld [vmem:[#allocation7 + $0x1d0] sm:$0xff]
    %v3033 = vld [vmem:[#allocation7 + $0x1d8] sm:$0xff]
    %v3034 = vld [vmem:[#allocation7 + $0x1e0] sm:$0xff]
    %v3035 = vld [vmem:[#allocation7 + $0x1e8] sm:$0xff]
    %v3036 = vld [vmem:[#allocation7 + $0x1f0] sm:$0xff]
    %v3037 = vld [vmem:[#allocation7 + $0x1f8] sm:$0xff]
    %v3038 = vld [vmem:[#allocation7 + $0x200] sm:$0xff]
    %v3039 = vld [vmem:[#allocation7 + $0x208] sm:$0xff]
    %v3040 = vld [vmem:[#allocation7 + $0x210] sm:$0xff]
    %v3041 = vld [vmem:[#allocation7 + $0x218] sm:$0xff]
    %v3042 = vld [vmem:[#allocation7 + $0x220] sm:$0xff]
    %v3043 = vld [vmem:[#allocation7 + $0x228] sm:$0xff]
    %v3044 = vld [vmem:[#allocation7 + $0x230] sm:$0xff]
    %v3045 = vld [vmem:[#allocation7 + $0x238] sm:$0xff]
    %v3046 = vld [vmem:[#allocation7 + $0x240] sm:$0xff]
    %v3047 = vld [vmem:[#allocation7 + $0x248] sm:$0xff]
    %v3048 = vld [vmem:[#allocation7 + $0x250] sm:$0xff]
    %v3049 = vld [vmem:[#allocation7 + $0x258] sm:$0xff]
    %v3050 = vld [vmem:[#allocation7 + $0x260] sm:$0xff]
    %v3051 = vld [vmem:[#allocation7 + $0x268] sm:$0xff]
    %v3052 = vld [vmem:[#allocation7 + $0x270] sm:$0xff]
    %v3053 = vld [vmem:[#allocation7 + $0x278] sm:$0xff]
    %v3054 = vld [vmem:[#allocation7 + $0x280] sm:$0xff]
    %v3055 = vld [vmem:[#allocation7 + $0x288] sm:$0xff]
    %v3056 = vld [vmem:[#allocation7 + $0x290] sm:$0xff]
    %v3057 = vld [vmem:[#allocation7 + $0x298] sm:$0xff]
    %v3058 = vld [vmem:[#allocation7 + $0x2a0] sm:$0xff]
    %v3059 = vld [vmem:[#allocation7 + $0x2a8] sm:$0xff]
    %v3060 = vld [vmem:[#allocation7 + $0x2b0] sm:$0xff]
    %v3061 = vld [vmem:[#allocation7 + $0x2b8] sm:$0xff]
    %v3062 = vld [vmem:[#allocation7 + $0x2c0] sm:$0xff]
    %v3063 = vld [vmem:[#allocation7 + $0x2c8] sm:$0xff]
    %v3064 = vld [vmem:[#allocation7 + $0x2d0] sm:$0xff]
    %v3065 = vld [vmem:[#allocation7 + $0x2d8] sm:$0xff]
    %v3066 = vld [vmem:[#allocation7 + $0x2e0] sm:$0xff]
    %v3067 = vld [vmem:[#allocation7 + $0x2e8] sm:$0xff]
    %v3068 = vld [vmem:[#allocation7 + $0x2f0] sm:$0xff]
    %v3069 = vld [vmem:[#allocation7 + $0x2f8] sm:$0xff]
    %v3070 = vld [vmem:[#allocation7 + $0x300] sm:$0xff]
    %v3071 = vld [vmem:[#allocation7 + $0x308] sm:$0xff]
    %v3072 = vld [vmem:[#allocation7 + $0x310] sm:$0xff]
    %v3073 = vld [vmem:[#allocation7 + $0x318] sm:$0xff]
    %v3074 = vld [vmem:[#allocation7 + $0x320] sm:$0xff]
    %v3075 = vld [vmem:[#allocation7 + $0x328] sm:$0xff]
    %v3076 = vld [vmem:[#allocation7 + $0x330] sm:$0xff]
    %v3077 = vld [vmem:[#allocation7 + $0x338] sm:$0xff]
    %v3078 = vld [vmem:[#allocation7 + $0x340] sm:$0xff]
    %v3079 = vld [vmem:[#allocation7 + $0x348] sm:$0xff]
    %v3080 = vld [vmem:[#allocation7 + $0x350] sm:$0xff]
    %v3081 = vld [vmem:[#allocation7 + $0x358] sm:$0xff]
    %v3082 = vld [vmem:[#allocation7 + $0x360] sm:$0xff]
    %v3083 = vld [vmem:[#allocation7 + $0x368] sm:$0xff]
    %v3084 = vld [vmem:[#allocation7 + $0x370] sm:$0xff]
    %v3085 = vld [vmem:[#allocation7 + $0x378] sm:$0xff]
    %v3086 = vld [vmem:[#allocation7 + $0x380] sm:$0xff]
    %v3087 = vld [vmem:[#allocation7 + $0x388] sm:$0xff]
    %v3088 = vld [vmem:[#allocation7 + $0x390] sm:$0xff]
    %v3089 = vld [vmem:[#allocation7 + $0x398] sm:$0xff]
    %v3090 = vld [vmem:[#allocation7 + $0x3a0] sm:$0xff]
    %v3091 = vld [vmem:[#allocation7 + $0x3a8] sm:$0xff]
    %v3092 = vld [vmem:[#allocation7 + $0x3b0] sm:$0xff]
    %v3093 = vld [vmem:[#allocation7 + $0x3b8] sm:$0xff]
    %v3094 = vld [vmem:[#allocation7 + $0x3c0] sm:$0xff]
    %v3095 = vld [vmem:[#allocation7 + $0x3c8] sm:$0xff]
    %v3096 = vld [vmem:[#allocation7 + $0x3d0] sm:$0xff]
    %v3097 = vld [vmem:[#allocation7 + $0x3d8] sm:$0xff]
    %v3098 = vld [vmem:[#allocation7 + $0x3e0] sm:$0xff]
    %v3099 = vld [vmem:[#allocation7 + $0x3e8] sm:$0xff]
    %v3100 = vld [vmem:[#allocation7 + $0x3f0] sm:$0xff]
    %v3101 = vld [vmem:[#allocation7 + $0x3f8] sm:$0xff]
    %v3102 = vld [vmem:[#allocation7 + $0x400] sm:$0xff]
    %v3103 = vld [vmem:[#allocation7 + $0x408] sm:$0xff]
    %v3104 = vld [vmem:[#allocation7 + $0x410] sm:$0xff]
    %v3105 = vld [vmem:[#allocation7 + $0x418] sm:$0xff]
    %v3106 = vld [vmem:[#allocation7 + $0x420] sm:$0xff]
    %v3107 = vld [vmem:[#allocation7 + $0x428] sm:$0xff]
    %v3108 = vld [vmem:[#allocation7 + $0x430] sm:$0xff]
    %v3109 = vld [vmem:[#allocation7 + $0x438] sm:$0xff]
    %v3110 = vld [vmem:[#allocation7 + $0x440] sm:$0xff]
    %v3111 = vld [vmem:[#allocation7 + $0x448] sm:$0xff]
    %v3112 = vld [vmem:[#allocation7 + $0x450] sm:$0xff]
    %v3113 = vld [vmem:[#allocation7 + $0x458] sm:$0xff]
    %v3114 = vld [vmem:[#allocation7 + $0x460] sm:$0xff]
    %v3115 = vld [vmem:[#allocation7 + $0x468] sm:$0xff]
    %v3116 = vld [vmem:[#allocation7 + $0x470] sm:$0xff]
    %v3117 = vld [vmem:[#allocation7 + $0x478] sm:$0xff]
    %v3118 = vld [vmem:[#allocation7 + $0x480] sm:$0xff]
    %v3119 = vld [vmem:[#allocation7 + $0x488] sm:$0xff]
    %v3120 = vld [vmem:[#allocation7 + $0x490] sm:$0xff]
    %v3121 = vld [vmem:[#allocation7 + $0x498] sm:$0xff]
    %v3122 = vld [vmem:[#allocation7 + $0x4a0] sm:$0xff]
    %v3123 = vld [vmem:[#allocation7 + $0x4a8] sm:$0xff]
    %v3124 = vld [vmem:[#allocation7 + $0x4b0] sm:$0xff]
    %v3125 = vld [vmem:[#allocation7 + $0x4b8] sm:$0xff]
    %v3126 = vld [vmem:[#allocation7 + $0x4c0] sm:$0xff]
    %v3127 = vld [vmem:[#allocation7 + $0x4c8] sm:$0xff]
    %v3128 = vld [vmem:[#allocation7 + $0x4d0] sm:$0xff]
    %v3129 = vld [vmem:[#allocation7 + $0x4d8] sm:$0xff]
    %v3130 = vld [vmem:[#allocation7 + $0x4e0] sm:$0xff]
    %v3131 = vld [vmem:[#allocation7 + $0x4e8] sm:$0xff]
    %v3132 = vld [vmem:[#allocation7 + $0x4f0] sm:$0xff]
    %v3133 = vld [vmem:[#allocation7 + $0x4f8] sm:$0xff]
    %v3134 = vld [vmem:[#allocation7 + $0x500] sm:$0xff]
    %v3135 = vld [vmem:[#allocation7 + $0x508] sm:$0xff]
    %v3136 = vld [vmem:[#allocation7 + $0x510] sm:$0xff]
    %v3137 = vld [vmem:[#allocation7 + $0x518] sm:$0xff]
    %v3138 = vld [vmem:[#allocation7 + $0x520] sm:$0xff]
    %v3139 = vld [vmem:[#allocation7 + $0x528] sm:$0xff]
    %v3140 = vld [vmem:[#allocation7 + $0x530] sm:$0xff]
    %v3141 = vld [vmem:[#allocation7 + $0x538] sm:$0xff]
    %v3142 = vld [vmem:[#allocation7 + $0x540] sm:$0xff]
    %v3143 = vld [vmem:[#allocation7 + $0x548] sm:$0xff]
    %v3144 = vld [vmem:[#allocation7 + $0x550] sm:$0xff]
    %v3145 = vld [vmem:[#allocation7 + $0x558] sm:$0xff]
    %v3146 = vld [vmem:[#allocation7 + $0x560] sm:$0xff]
    %v3147 = vld [vmem:[#allocation7 + $0x568] sm:$0xff]
    %v3148 = vld [vmem:[#allocation7 + $0x570] sm:$0xff]
    %v3149 = vld [vmem:[#allocation7 + $0x578] sm:$0xff]
    %v3150 = vld [vmem:[#allocation7 + $0x580] sm:$0xff]
    %v3151 = vld [vmem:[#allocation7 + $0x588] sm:$0xff]
    %v3152 = vld [vmem:[#allocation7 + $0x590] sm:$0xff]
    %v3153 = vld [vmem:[#allocation7 + $0x598] sm:$0xff]
    %v3154 = vld [vmem:[#allocation7 + $0x5a0] sm:$0xff]
    %v3155 = vld [vmem:[#allocation7 + $0x5a8] sm:$0xff]
    %v3156 = vld [vmem:[#allocation7 + $0x5b0] sm:$0xff]
    %v3157 = vld [vmem:[#allocation7 + $0x5b8] sm:$0xff]
    %v3158 = vld [vmem:[#allocation7 + $0x5c0] sm:$0xff]
    %v3159 = vld [vmem:[#allocation7 + $0x5c8] sm:$0xff]
    %v3160 = vld [vmem:[#allocation7 + $0x5d0] sm:$0xff]
    %v3161 = vld [vmem:[#allocation7 + $0x5d8] sm:$0xff]
    %v3162 = vld [vmem:[#allocation7 + $0x5e0] sm:$0xff]
    %v3163 = vld [vmem:[#allocation7 + $0x5e8] sm:$0xff]
    %v3164 = vld [vmem:[#allocation7 + $0x5f0] sm:$0xff]
    %v3165 = vld [vmem:[#allocation7 + $0x5f8] sm:$0xff]
    %v3166 = vld [vmem:[#allocation7 + $0x600] sm:$0xff]
    %v3167 = vld [vmem:[#allocation7 + $0x608] sm:$0xff]
    %v3168 = vld [vmem:[#allocation7 + $0x610] sm:$0xff]
    %v3169 = vld [vmem:[#allocation7 + $0x618] sm:$0xff]
    %v3170 = vld [vmem:[#allocation7 + $0x620] sm:$0xff]
    %v3171 = vld [vmem:[#allocation7 + $0x628] sm:$0xff]
    %v3172 = vld [vmem:[#allocation7 + $0x630] sm:$0xff]
    %v3173 = vld [vmem:[#allocation7 + $0x638] sm:$0xff]
    %v3174 = vld [vmem:[#allocation7 + $0x640] sm:$0xff]
    %v3175 = vld [vmem:[#allocation7 + $0x648] sm:$0xff]
    %v3176 = vld [vmem:[#allocation7 + $0x650] sm:$0xff]
    %v3177 = vld [vmem:[#allocation7 + $0x658] sm:$0xff]
    %v3178 = vld [vmem:[#allocation7 + $0x660] sm:$0xff]
    %v3179 = vld [vmem:[#allocation7 + $0x668] sm:$0xff]
    %v3180 = vld [vmem:[#allocation7 + $0x670] sm:$0xff]
    %v3181 = vld [vmem:[#allocation7 + $0x678] sm:$0xff]
    %v3182 = vld [vmem:[#allocation7 + $0x680] sm:$0xff]
    %v3183 = vld [vmem:[#allocation7 + $0x688] sm:$0xff]
    %v3184 = vld [vmem:[#allocation7 + $0x690] sm:$0xff]
    %v3185 = vld [vmem:[#allocation7 + $0x698] sm:$0xff]
    %v3186 = vld [vmem:[#allocation7 + $0x6a0] sm:$0xff]
    %v3187 = vld [vmem:[#allocation7 + $0x6a8] sm:$0xff]
    %v3188 = vld [vmem:[#allocation7 + $0x6b0] sm:$0xff]
    %v3189 = vld [vmem:[#allocation7 + $0x6b8] sm:$0xff]
    %v3190 = vld [vmem:[#allocation7 + $0x6c0] sm:$0xff]
    %v3191 = vld [vmem:[#allocation7 + $0x6c8] sm:$0xff]
    %v3192 = vld [vmem:[#allocation7 + $0x6d0] sm:$0xff]
    %v3193 = vld [vmem:[#allocation7 + $0x6d8] sm:$0xff]
    %v3194 = vld [vmem:[#allocation7 + $0x6e0] sm:$0xff]
    %v3195 = vld [vmem:[#allocation7 + $0x6e8] sm:$0xff]
    %v3196 = vld [vmem:[#allocation7 + $0x6f0] sm:$0xff]
    %v3197 = vld [vmem:[#allocation7 + $0x6f8] sm:$0xff]
    %v3198 = vld [vmem:[#allocation7 + $0x700] sm:$0xff]
    %v3199 = vld [vmem:[#allocation7 + $0x708] sm:$0xff]
    %v3200 = vld [vmem:[#allocation7 + $0x710] sm:$0xff]
    %v3201 = vld [vmem:[#allocation7 + $0x718] sm:$0xff]
    %v3202 = vld [vmem:[#allocation7 + $0x720] sm:$0xff]
    %v3203 = vld [vmem:[#allocation7 + $0x728] sm:$0xff]
    %v3204 = vld [vmem:[#allocation7 + $0x730] sm:$0xff]
    %v3205 = vld [vmem:[#allocation7 + $0x738] sm:$0xff]
    %v3206 = vld [vmem:[#allocation7 + $0x740] sm:$0xff]
    %v3207 = vld [vmem:[#allocation7 + $0x748] sm:$0xff]
    %v3208 = vld [vmem:[#allocation7 + $0x750] sm:$0xff]
    %v3209 = vld [vmem:[#allocation7 + $0x758] sm:$0xff]
    %v3210 = vld [vmem:[#allocation7 + $0x760] sm:$0xff]
    %v3211 = vld [vmem:[#allocation7 + $0x768] sm:$0xff]
    %v3212 = vld [vmem:[#allocation7 + $0x770] sm:$0xff]
    %v3213 = vld [vmem:[#allocation7 + $0x778] sm:$0xff]
    %v3214 = vld [vmem:[#allocation7 + $0x780] sm:$0xff]
    %v3215 = vld [vmem:[#allocation7 + $0x788] sm:$0xff]
    %v3216 = vld [vmem:[#allocation7 + $0x790] sm:$0xff]
    %v3217 = vld [vmem:[#allocation7 + $0x798] sm:$0xff]
    %v3218 = vld [vmem:[#allocation7 + $0x7a0] sm:$0xff]
    %v3219 = vld [vmem:[#allocation7 + $0x7a8] sm:$0xff]
    %v3220 = vld [vmem:[#allocation7 + $0x7b0] sm:$0xff]
    %v3221 = vld [vmem:[#allocation7 + $0x7b8] sm:$0xff]
    %v3222 = vld [vmem:[#allocation7 + $0x7c0] sm:$0xff]
    %v3223 = vld [vmem:[#allocation7 + $0x7c8] sm:$0xff]
    %v3224 = vld [vmem:[#allocation7 + $0x7d0] sm:$0xff]
    %v3225 = vld [vmem:[#allocation7 + $0x7d8] sm:$0xff]
    %v3226 = vld [vmem:[#allocation7 + $0x7e0] sm:$0xff]
    %v3227 = vld [vmem:[#allocation7 + $0x7e8] sm:$0xff]
    %v3228 = vld [vmem:[#allocation7 + $0x7f0] sm:$0xff]
    %v3229 = vld [vmem:[#allocation7 + $0x7f8] sm:$0xff]
    %v3230 = vld [vmem:[#allocation7 + $0x800] sm:$0xff]
    %v3231 = vld [vmem:[#allocation7 + $0x808] sm:$0xff]
    %v3232 = vld [vmem:[#allocation7 + $0x810] sm:$0xff]
    %v3233 = vld [vmem:[#allocation7 + $0x818] sm:$0xff]
    %v3234 = vld [vmem:[#allocation7 + $0x820] sm:$0xff]
    %v3235 = vld [vmem:[#allocation7 + $0x828] sm:$0xff]
    %v3236 = vld [vmem:[#allocation7 + $0x830] sm:$0xff]
    %v3237 = vld [vmem:[#allocation7 + $0x838] sm:$0xff]
    %v3238 = vld [vmem:[#allocation7 + $0x840] sm:$0xff]
    %v3239 = vld [vmem:[#allocation7 + $0x848] sm:$0xff]
    %v3240 = vld [vmem:[#allocation7 + $0x850] sm:$0xff]
    %v3241 = vld [vmem:[#allocation7 + $0x858] sm:$0xff]
    %v3242 = vld [vmem:[#allocation7 + $0x860] sm:$0xff]
    %v3243 = vld [vmem:[#allocation7 + $0x868] sm:$0xff]
    %v3244 = vld [vmem:[#allocation7 + $0x870] sm:$0xff]
    %v3245 = vld [vmem:[#allocation7 + $0x878] sm:$0xff]
    %v3246 = vld [vmem:[#allocation7 + $0x880] sm:$0xff]
    %v3247 = vld [vmem:[#allocation7 + $0x888] sm:$0xff]
    %v3248 = vld [vmem:[#allocation7 + $0x890] sm:$0xff]
    %v3249 = vld [vmem:[#allocation7 + $0x898] sm:$0xff]
    %v3250 = vld [vmem:[#allocation7 + $0x8a0] sm:$0xff]
    %v3251 = vld [vmem:[#allocation7 + $0x8a8] sm:$0xff]
    %v3252 = vld [vmem:[#allocation7 + $0x8b0] sm:$0xff]
    %v3253 = vld [vmem:[#allocation7 + $0x8b8] sm:$0xff]
    %v3254 = vld [vmem:[#allocation7 + $0x8c0] sm:$0xff]
    %v3255 = vld [vmem:[#allocation7 + $0x8c8] sm:$0xff]
    %v3256 = vld [vmem:[#allocation7 + $0x8d0] sm:$0xff]
    %v3257 = vld [vmem:[#allocation7 + $0x8d8] sm:$0xff]
    %v3258 = vld [vmem:[#allocation7 + $0x8e0] sm:$0xff]
    %v3259 = vld [vmem:[#allocation7 + $0x8e8] sm:$0xff]
    %v3260 = vld [vmem:[#allocation7 + $0x8f0] sm:$0xff]
    %v3261 = vld [vmem:[#allocation7 + $0x8f8] sm:$0xff]
    %v3262 = vld [vmem:[#allocation7 + $0x900] sm:$0xff]
    %v3263 = vld [vmem:[#allocation7 + $0x908] sm:$0xff]
    %v3264 = vld [vmem:[#allocation7 + $0x910] sm:$0xff]
    %v3265 = vld [vmem:[#allocation7 + $0x918] sm:$0xff]
    %v3266 = vld [vmem:[#allocation7 + $0x920] sm:$0xff]
    %v3267 = vld [vmem:[#allocation7 + $0x928] sm:$0xff]
    %v3268 = vld [vmem:[#allocation7 + $0x930] sm:$0xff]
    %v3269 = vld [vmem:[#allocation7 + $0x938] sm:$0xff]
    %v3270 = vld [vmem:[#allocation7 + $0x940] sm:$0xff]
    %v3271 = vld [vmem:[#allocation7 + $0x948] sm:$0xff]
    %v3272 = vld [vmem:[#allocation7 + $0x950] sm:$0xff]
    %v3273 = vld [vmem:[#allocation7 + $0x958] sm:$0xff]
    %v3274 = vld [vmem:[#allocation7 + $0x960] sm:$0xff]
    %v3275 = vld [vmem:[#allocation7 + $0x968] sm:$0xff]
    %v3276 = vld [vmem:[#allocation7 + $0x970] sm:$0xff]
    %v3277 = vld [vmem:[#allocation7 + $0x978] sm:$0xff]
    %v3278 = vld [vmem:[#allocation7 + $0x980] sm:$0xff]
    %v3279 = vld [vmem:[#allocation7 + $0x988] sm:$0xff]
    %v3280 = vld [vmem:[#allocation7 + $0x990] sm:$0xff]
    %v3281 = vld [vmem:[#allocation7 + $0x998] sm:$0xff]
    %v3282 = vld [vmem:[#allocation7 + $0x9a0] sm:$0xff]
    %v3283 = vld [vmem:[#allocation7 + $0x9a8] sm:$0xff]
    %v3284 = vld [vmem:[#allocation7 + $0x9b0] sm:$0xff]
    %v3285 = vld [vmem:[#allocation7 + $0x9b8] sm:$0xff]
    %v3286 = vld [vmem:[#allocation7 + $0x9c0] sm:$0xff]
    %v3287 = vld [vmem:[#allocation7 + $0x9c8] sm:$0xff]
    %v3288 = vld [vmem:[#allocation7 + $0x9d0] sm:$0xff]
    %v3289 = vld [vmem:[#allocation7 + $0x9d8] sm:$0xff]
    %v3290 = vld [vmem:[#allocation7 + $0x9e0] sm:$0xff]
    %v3291 = vld [vmem:[#allocation7 + $0x9e8] sm:$0xff]
    %v3292 = vld [vmem:[#allocation7 + $0x9f0] sm:$0xff]
    %v3293 = vld [vmem:[#allocation7 + $0x9f8] sm:$0xff]
    %v3294 = vld [vmem:[#allocation7 + $0xa00] sm:$0xff]
    %v3295 = vld [vmem:[#allocation7 + $0xa08] sm:$0xff]
    %v3296 = vld [vmem:[#allocation7 + $0xa10] sm:$0xff]
    %v3297 = vld [vmem:[#allocation7 + $0xa18] sm:$0xff]
    %v3298 = vld [vmem:[#allocation7 + $0xa20] sm:$0xff]
    %v3299 = vld [vmem:[#allocation7 + $0xa28] sm:$0xff]
    %v3300 = vld [vmem:[#allocation7 + $0xa30] sm:$0xff]
    %v3301 = vld [vmem:[#allocation7 + $0xa38] sm:$0xff]
    %v3302 = vld [vmem:[#allocation7 + $0xa40] sm:$0xff]
    %v3303 = vld [vmem:[#allocation7 + $0xa48] sm:$0xff]
    %v3304 = vld [vmem:[#allocation7 + $0xa50] sm:$0xff]
    %v3305 = vld [vmem:[#allocation7 + $0xa58] sm:$0xff]
    %v3306 = vld [vmem:[#allocation7 + $0xa60] sm:$0xff]
    %v3307 = vld [vmem:[#allocation7 + $0xa68] sm:$0xff]
    %v3308 = vld [vmem:[#allocation7 + $0xa70] sm:$0xff]
    %v3309 = vld [vmem:[#allocation7 + $0xa78] sm:$0xff]
    %v3310 = vld [vmem:[#allocation7 + $0xa80] sm:$0xff]
    %v3311 = vld [vmem:[#allocation7 + $0xa88] sm:$0xff]
    %v3312 = vld [vmem:[#allocation7 + $0xa90] sm:$0xff]
    %v3313 = vld [vmem:[#allocation7 + $0xa98] sm:$0xff]
    %v3314 = vld [vmem:[#allocation7 + $0xaa0] sm:$0xff]
    %v3315 = vld [vmem:[#allocation7 + $0xaa8] sm:$0xff]
    %v3316 = vld [vmem:[#allocation7 + $0xab0] sm:$0xff]
    %v3317 = vld [vmem:[#allocation7 + $0xab8] sm:$0xff]
    %v3318 = vld [vmem:[#allocation7 + $0xac0] sm:$0xff]
    %v3319 = vld [vmem:[#allocation7 + $0xac8] sm:$0xff]
    %v3320 = vld [vmem:[#allocation7 + $0xad0] sm:$0xff]
    %v3321 = vld [vmem:[#allocation7 + $0xad8] sm:$0xff]
    %v3322 = vld [vmem:[#allocation7 + $0xae0] sm:$0xff]
    %v3323 = vld [vmem:[#allocation7 + $0xae8] sm:$0xff]
    %v3324 = vld [vmem:[#allocation7 + $0xaf0] sm:$0xff]
    %v3325 = vld [vmem:[#allocation7 + $0xaf8] sm:$0xff]
    %v3326 = vld [vmem:[#allocation7 + $0xb00] sm:$0xff]
    %v3327 = vld [vmem:[#allocation7 + $0xb08] sm:$0xff]
    %v3328 = vld [vmem:[#allocation7 + $0xb10] sm:$0xff]
    %v3329 = vld [vmem:[#allocation7 + $0xb18] sm:$0xff]
    %v3330 = vld [vmem:[#allocation7 + $0xb20] sm:$0xff]
    %v3331 = vld [vmem:[#allocation7 + $0xb28] sm:$0xff]
    %v3332 = vld [vmem:[#allocation7 + $0xb30] sm:$0xff]
    %v3333 = vld [vmem:[#allocation7 + $0xb38] sm:$0xff]
    %v3334 = vld [vmem:[#allocation7 + $0xb40] sm:$0xff]
    %v3335 = vld [vmem:[#allocation7 + $0xb48] sm:$0xff]
    %v3336 = vld [vmem:[#allocation7 + $0xb50] sm:$0xff]
    %v3337 = vld [vmem:[#allocation7 + $0xb58] sm:$0xff]
    %v3338 = vld [vmem:[#allocation7 + $0xb60] sm:$0xff]
    %v3339 = vld [vmem:[#allocation7 + $0xb68] sm:$0xff]
    %v3340 = vld [vmem:[#allocation7 + $0xb70] sm:$0xff]
    %v3341 = vld [vmem:[#allocation7 + $0xb78] sm:$0xff]
    %v3342 = vld [vmem:[#allocation7 + $0xb80] sm:$0xff]
    %v3343 = vld [vmem:[#allocation7 + $0xb88] sm:$0xff]
    %v3344 = vld [vmem:[#allocation7 + $0xb90] sm:$0xff]
    %v3345 = vld [vmem:[#allocation7 + $0xb98] sm:$0xff]
    %v3346 = vld [vmem:[#allocation7 + $0xba0] sm:$0xff]
    %v3347 = vld [vmem:[#allocation7 + $0xba8] sm:$0xff]
    %v3348 = vld [vmem:[#allocation7 + $0xbb0] sm:$0xff]
    %v3349 = vld [vmem:[#allocation7 + $0xbb8] sm:$0xff]
    %v3350 = vld [vmem:[#allocation7 + $0xbc0] sm:$0xff]
    %v3351 = vld [vmem:[#allocation7 + $0xbc8] sm:$0xff]
    %v3352 = vld [vmem:[#allocation7 + $0xbd0] sm:$0xff]
    %v3353 = vld [vmem:[#allocation7 + $0xbd8] sm:$0xff]
    %v3354 = vld [vmem:[#allocation7 + $0xbe0] sm:$0xff]
    %v3355 = vld [vmem:[#allocation7 + $0xbe8] sm:$0xff]
    %v3356 = vld [vmem:[#allocation7 + $0xbf0] sm:$0xff]
    %v3357 = vld [vmem:[#allocation7 + $0xbf8] sm:$0xff]
    %v3358 = vld [vmem:[#allocation17] sm:$0x3f]
    %v3360 = vlaneseq
    %v3361 = vshrl.u32 %v3360, 7
    %v3362 = vsub.s32 0, %v3361
    %v3363 = vrot.slane %v3358, %v3362
    %v3364 = vlaneseq
    %v3365 = vshrl.u32 %v3364, 7
    %v3366 = vsub.s32 1, %v3365
    %v3367 = vrot.slane %v3358, %v3366
    %v3368 = vlaneseq
    %v3369 = vshrl.u32 %v3368, 7
    %v3370 = vsub.s32 2, %v3369
    %v3371 = vrot.slane %v3358, %v3370
    %v3372 = vlaneseq
    %v3373 = vshrl.u32 %v3372, 7
    %v3374 = vsub.s32 3, %v3373
    %v3375 = vrot.slane %v3358, %v3374
    %v3376 = vlaneseq
    %v3377 = vshrl.u32 %v3376, 7
    %v3378 = vsub.s32 4, %v3377
    %v3379 = vrot.slane %v3358, %v3378
    %v3380 = vlaneseq
    %v3381 = vshrl.u32 %v3380, 7
    %v3382 = vsub.s32 5, %v3381
    %v3383 = vrot.slane %v3358, %v3382
    %3390 = vmatprep.subr.bf16.mxu0 %v2975
    %3391 = vmatpush1.bf16.msra.mxu0 %v2974
    %3392 = vmatprep.subr.bf16.mxu0 %v2981
    %3393 = vmatpush1.bf16.msra.mxu0 %v2980
    %3394 = vmatprep.subr.bf16.mxu0 %v2987
    %3395 = vmatpush1.bf16.msra.mxu0 %v2986
    %3396 = vmatprep.subr.bf16.mxu0 %v2993
    %3397 = vmatpush1.bf16.msra.mxu0 %v2992
    %3398 = vmatprep.subr.bf16.mxu0 %v2999
    %3399 = vmatpush1.bf16.msra.mxu0 %v2998
    %3400 = vmatprep.subr.bf16.mxu0 %v3005
    %3401 = vmatpush1.bf16.msra.mxu0 %v3004
    %3402 = vmatprep.subr.bf16.mxu0 %v3011
    %3403 = vmatpush1.bf16.msra.mxu0 %v3010
    %3404 = vmatprep.subr.bf16.mxu0 %v3017
    %3405 = vmatpush1.bf16.msra.mxu0 %v3016
    %3406 = vmatprep.subr.bf16.mxu0 %v3023
    %3407 = vmatpush1.bf16.msra.mxu0 %v3022
    %3408 = vmatprep.subr.bf16.mxu0 %v3029
    %3409 = vmatpush1.bf16.msra.mxu0 %v3028
    %3410 = vmatprep.subr.bf16.mxu0 %v3035
    %3411 = vmatpush1.bf16.msra.mxu0 %v3034
    %3412 = vmatprep.subr.bf16.mxu0 %v3041
    %3413 = vmatpush1.bf16.msra.mxu0 %v3040
    %3414 = vmatprep.subr.bf16.mxu0 %v3047
    %3415 = vmatpush1.bf16.msra.mxu0 %v3046
    %3416 = vmatprep.subr.bf16.mxu0 %v3053
    %3417 = vmatpush1.bf16.msra.mxu0 %v3052
    %3418 = vmatprep.subr.bf16.mxu0 %v3059
    %3419 = vmatpush1.bf16.msra.mxu0 %v3058
    %3420 = vmatprep.subr.bf16.mxu0 %v3065
    %3421 = vmatpush1.bf16.msra.mxu0 %v3064
    %3422 = vmatprep.mubr.bf16.mxu0 %v2959
    %3423 = vmatmul.mubr.bf16.gmra.mrb[0].mxu0 %v2958
    %v3424 = vpop.f32.mrb[0].mxu0
    %v3425 = vadd.f32 %v3363, %v3424
    %v3426 = vpop.f32.mrb[0].mxu0
    %v3427 = vadd.f32 %v3367, %v3426
    %v3428 = vpop.f32.mrb[0].mxu0
    %v3429 = vpop.f32.mrb[0].mxu0
    %3430 = vdwg.mxu0
    %3431 = vmatprep.subr.bf16.mxu0 %v3071
    %3432 = vmatpush1.bf16.msra.mxu0 %v3070
    %3433 = vmatprep.subr.bf16.mxu0 %v3077
    %3434 = vmatpush1.bf16.msra.mxu0 %v3076
    %3435 = vmatprep.subr.bf16.mxu0 %v3083
    %3436 = vmatpush1.bf16.msra.mxu0 %v3082
    %3437 = vmatprep.subr.bf16.mxu0 %v3089
    %3438 = vmatpush1.bf16.msra.mxu0 %v3088
    %3439 = vmatprep.subr.bf16.mxu0 %v3095
    %3440 = vmatpush1.bf16.msra.mxu0 %v3094
    %3441 = vmatprep.subr.bf16.mxu0 %v3101
    %3442 = vmatpush1.bf16.msra.mxu0 %v3100
    %3443 = vmatprep.subr.bf16.mxu0 %v3107
    %3444 = vmatpush1.bf16.msra.mxu0 %v3106
    %3445 = vmatprep.subr.bf16.mxu0 %v3113
    %3446 = vmatpush1.bf16.msra.mxu0 %v3112
    %3447 = vmatprep.subr.bf16.mxu0 %v3119
    %3448 = vmatpush1.bf16.msra.mxu0 %v3118
    %3449 = vmatprep.subr.bf16.mxu0 %v3125
    %3450 = vmatpush1.bf16.msra.mxu0 %v3124
    %3451 = vmatprep.subr.bf16.mxu0 %v3131
    %3452 = vmatpush1.bf16.msra.mxu0 %v3130
    %3453 = vmatprep.subr.bf16.mxu0 %v3137
    %3454 = vmatpush1.bf16.msra.mxu0 %v3136
    %3455 = vmatprep.subr.bf16.mxu0 %v3143
    %3456 = vmatpush1.bf16.msra.mxu0 %v3142
    %3457 = vmatprep.subr.bf16.mxu0 %v3149
    %3458 = vmatpush1.bf16.msra.mxu0 %v3148
    %3459 = vmatprep.subr.bf16.mxu0 %v3155
    %3460 = vmatpush1.bf16.msra.mxu0 %v3154
    %3461 = vmatprep.subr.bf16.mxu0 %v3161
    %3462 = vmatpush1.bf16.msra.mxu0 %v3160
    %3463 = vmatprep.mubr.bf16.mxu0 %v2961
    %3464 = vmatmul.mubr.bf16.gmra.mrb[0].mxu0 %v2960
    %v3465 = vpop.f32.mrb[0].mxu0
    %v3466 = vadd.f32 %v3425, %v3465
    %v3467 = vpop.f32.mrb[0].mxu0
    %v3468 = vadd.f32 %v3427, %v3467
    %v3469 = vpop.f32.mrb[0].mxu0
    %v3470 = vpop.f32.mrb[0].mxu0
    %3471 = vdwg.mxu0
    %3472 = vmatprep.subr.bf16.mxu0 %v3167
    %3473 = vmatpush1.bf16.msra.mxu0 %v3166
    %3474 = vmatprep.subr.bf16.mxu0 %v3173
    %3475 = vmatpush1.bf16.msra.mxu0 %v3172
    %3476 = vmatprep.subr.bf16.mxu0 %v3179
    %3477 = vmatpush1.bf16.msra.mxu0 %v3178
    %3478 = vmatprep.subr.bf16.mxu0 %v3185
    %3479 = vmatpush1.bf16.msra.mxu0 %v3184
    %3480 = vmatprep.subr.bf16.mxu0 %v3191
    %3481 = vmatpush1.bf16.msra.mxu0 %v3190
    %3482 = vmatprep.subr.bf16.mxu0 %v3197
    %3483 = vmatpush1.bf16.msra.mxu0 %v3196
    %3484 = vmatprep.subr.bf16.mxu0 %v3203
    %3485 = vmatpush1.bf16.msra.mxu0 %v3202
    %3486 = vmatprep.subr.bf16.mxu0 %v3209
    %3487 = vmatpush1.bf16.msra.mxu0 %v3208
    %3488 = vmatprep.subr.bf16.mxu0 %v3215
    %3489 = vmatpush1.bf16.msra.mxu0 %v3214
    %3490 = vmatprep.subr.bf16.mxu0 %v3221
    %3491 = vmatpush1.bf16.msra.mxu0 %v3220
    %3492 = vmatprep.subr.bf16.mxu0 %v3227
    %3493 = vmatpush1.bf16.msra.mxu0 %v3226
    %3494 = vmatprep.subr.bf16.mxu0 %v3233
    %3495 = vmatpush1.bf16.msra.mxu0 %v3232
    %3496 = vmatprep.subr.bf16.mxu0 %v3239
    %3497 = vmatpush1.bf16.msra.mxu0 %v3238
    %3498 = vmatprep.subr.bf16.mxu0 %v3245
    %3499 = vmatpush1.bf16.msra.mxu0 %v3244
    %3500 = vmatprep.subr.bf16.mxu0 %v3251
    %3501 = vmatpush1.bf16.msra.mxu0 %v3250
    %3502 = vmatprep.subr.bf16.mxu0 %v3257
    %3503 = vmatpush1.bf16.msra.mxu0 %v3256
    %3504 = vmatprep.mubr.bf16.mxu0 %v2963
    %3505 = vmatmul.mubr.bf16.gmra.mrb[0].mxu0 %v2962
    %v3506 = vpop.f32.mrb[0].mxu0
    %v3507 = vadd.f32 %v3466, %v3506
    %v3508 = vpop.f32.mrb[0].mxu0
    %v3509 = vadd.f32 %v3468, %v3508
    %v3510 = vpop.f32.mrb[0].mxu0
    %v3511 = vpop.f32.mrb[0].mxu0
    %3512 = vdwg.mxu0
    %3513 = vmatprep.subr.bf16.mxu0 %v3263
    %3514 = vmatpush1.bf16.msra.mxu0 %v3262
    %3515 = vmatprep.subr.bf16.mxu0 %v3269
    %3516 = vmatpush1.bf16.msra.mxu0 %v3268
    %3517 = vmatprep.subr.bf16.mxu0 %v3275
    %3518 = vmatpush1.bf16.msra.mxu0 %v3274
    %3519 = vmatprep.subr.bf16.mxu0 %v3281
    %3520 = vmatpush1.bf16.msra.mxu0 %v3280
    %3521 = vmatprep.subr.bf16.mxu0 %v3287
    %3522 = vmatpush1.bf16.msra.mxu0 %v3286
    %3523 = vmatprep.subr.bf16.mxu0 %v3293
    %3524 = vmatpush1.bf16.msra.mxu0 %v3292
    %3525 = vmatprep.subr.bf16.mxu0 %v3299
    %3526 = vmatpush1.bf16.msra.mxu0 %v3298
    %3527 = vmatprep.subr.bf16.mxu0 %v3305
    %3528 = vmatpush1.bf16.msra.mxu0 %v3304
    %3529 = vmatprep.subr.bf16.mxu0 %v3311
    %3530 = vmatpush1.bf16.msra.mxu0 %v3310
    %3531 = vmatprep.subr.bf16.mxu0 %v3317
    %3532 = vmatpush1.bf16.msra.mxu0 %v3316
    %3533 = vmatprep.subr.bf16.mxu0 %v3323
    %3534 = vmatpush1.bf16.msra.mxu0 %v3322
    %3535 = vmatprep.subr.bf16.mxu0 %v3329
    %3536 = vmatpush1.bf16.msra.mxu0 %v3328
    %3537 = vmatprep.subr.bf16.mxu0 %v3335
    %3538 = vmatpush1.bf16.msra.mxu0 %v3334
    %3539 = vmatprep.subr.bf16.mxu0 %v3341
    %3540 = vmatpush1.bf16.msra.mxu0 %v3340
    %3541 = vmatprep.subr.bf16.mxu0 %v3347
    %3542 = vmatpush1.bf16.msra.mxu0 %v3346
    %3543 = vmatprep.subr.bf16.mxu0 %v3353
    %3544 = vmatpush1.bf16.msra.mxu0 %v3352
    %3545 = vmatprep.mubr.bf16.mxu0 %v2965
    %3546 = vmatmul.mubr.bf16.gmra.mrb[0].mxu0 %v2964
    %v3547 = vpop.f32.mrb[0].mxu0
    %v3548 = vadd.f32 %v3507, %v3547
    %v3549 = vpop.f32.mrb[0].mxu0
    %v3550 = vadd.f32 %v3509, %v3549
    %v3551 = vpop.f32.mrb[0].mxu0
    %v3552 = vpop.f32.mrb[0].mxu0
    %3553 = vdwg.mxu0
    %3554 = vmatprep.subr.bf16.mxu0 %v2977
    %3555 = vmatpush1.bf16.msra.mxu0 %v2976
    %3556 = vmatprep.subr.bf16.mxu0 %v2983
    %3557 = vmatpush1.bf16.msra.mxu0 %v2982
    %3558 = vmatprep.subr.bf16.mxu0 %v2989
    %3559 = vmatpush1.bf16.msra.mxu0 %v2988
    %3560 = vmatprep.subr.bf16.mxu0 %v2995
    %3561 = vmatpush1.bf16.msra.mxu0 %v2994
    %3562 = vmatprep.subr.bf16.mxu0 %v3001
    %3563 = vmatpush1.bf16.msra.mxu0 %v3000
    %3564 = vmatprep.subr.bf16.mxu0 %v3007
    %3565 = vmatpush1.bf16.msra.mxu0 %v3006
    %3566 = vmatprep.subr.bf16.mxu0 %v3013
    %3567 = vmatpush1.bf16.msra.mxu0 %v3012
    %3568 = vmatprep.subr.bf16.mxu0 %v3019
    %3569 = vmatpush1.bf16.msra.mxu0 %v3018
    %3570 = vmatprep.subr.bf16.mxu0 %v3025
    %3571 = vmatpush1.bf16.msra.mxu0 %v3024
    %3572 = vmatprep.subr.bf16.mxu0 %v3031
    %3573 = vmatpush1.bf16.msra.mxu0 %v3030
    %3574 = vmatprep.subr.bf16.mxu0 %v3037
    %3575 = vmatpush1.bf16.msra.mxu0 %v3036
    %3576 = vmatprep.subr.bf16.mxu0 %v3043
    %3577 = vmatpush1.bf16.msra.mxu0 %v3042
    %3578 = vmatprep.subr.bf16.mxu0 %v3049
    %3579 = vmatpush1.bf16.msra.mxu0 %v3048
    %3580 = vmatprep.subr.bf16.mxu0 %v3055
    %3581 = vmatpush1.bf16.msra.mxu0 %v3054
    %3582 = vmatprep.subr.bf16.mxu0 %v3061
    %3583 = vmatpush1.bf16.msra.mxu0 %v3060
    %3584 = vmatprep.subr.bf16.mxu0 %v3067
    %3585 = vmatpush1.bf16.msra.mxu0 %v3066
    %3586 = vmatprep.mubr.bf16.mxu0 %v2959
    %3587 = vmatmul.mubr.bf16.gmra.mrb[0].mxu0 %v2958
    %v3588 = vpop.f32.mrb[0].mxu0
    %v3589 = vadd.f32 %v3371, %v3588
    %v3590 = vpop.f32.mrb[0].mxu0
    %v3591 = vadd.f32 %v3375, %v3590
    %v3592 = vpop.f32.mrb[0].mxu0
    %v3593 = vpop.f32.mrb[0].mxu0
    %3594 = vdwg.mxu0
    %3595 = vmatprep.subr.bf16.mxu0 %v3073
    %3596 = vmatpush1.bf16.msra.mxu0 %v3072
    %3597 = vmatprep.subr.bf16.mxu0 %v3079
    %3598 = vmatpush1.bf16.msra.mxu0 %v3078
    %3599 = vmatprep.subr.bf16.mxu0 %v3085
    %3600 = vmatpush1.bf16.msra.mxu0 %v3084
    %3601 = vmatprep.subr.bf16.mxu0 %v3091
    %3602 = vmatpush1.bf16.msra.mxu0 %v3090
    %3603 = vmatprep.subr.bf16.mxu0 %v3097
    %3604 = vmatpush1.bf16.msra.mxu0 %v3096
    %3605 = vmatprep.subr.bf16.mxu0 %v3103
    %3606 = vmatpush1.bf16.msra.mxu0 %v3102
    %3607 = vmatprep.subr.bf16.mxu0 %v3109
    %3608 = vmatpush1.bf16.msra.mxu0 %v3108
    %3609 = vmatprep.subr.bf16.mxu0 %v3115
    %3610 = vmatpush1.bf16.msra.mxu0 %v3114
    %3611 = vmatprep.subr.bf16.mxu0 %v3121
    %3612 = vmatpush1.bf16.msra.mxu0 %v3120
    %3613 = vmatprep.subr.bf16.mxu0 %v3127
    %3614 = vmatpush1.bf16.msra.mxu0 %v3126
    %3615 = vmatprep.subr.bf16.mxu0 %v3133
    %3616 = vmatpush1.bf16.msra.mxu0 %v3132
    %3617 = vmatprep.subr.bf16.mxu0 %v3139
    %3618 = vmatpush1.bf16.msra.mxu0 %v3138
    %3619 = vmatprep.subr.bf16.mxu0 %v3145
    %3620 = vmatpush1.bf16.msra.mxu0 %v3144
    %3621 = vmatprep.subr.bf16.mxu0 %v3151
    %3622 = vmatpush1.bf16.msra.mxu0 %v3150
    %3623 = vmatprep.subr.bf16.mxu0 %v3157
    %3624 = vmatpush1.bf16.msra.mxu0 %v3156
    %3625 = vmatprep.subr.bf16.mxu0 %v3163
    %3626 = vmatpush1.bf16.msra.mxu0 %v3162
    %3627 = vmatprep.mubr.bf16.mxu0 %v2961
    %3628 = vmatmul.mubr.bf16.gmra.mrb[0].mxu0 %v2960
    %v3629 = vpop.f32.mrb[0].mxu0
    %v3630 = vadd.f32 %v3589, %v3629
    %v3631 = vpop.f32.mrb[0].mxu0
    %v3632 = vadd.f32 %v3591, %v3631
    %v3633 = vpop.f32.mrb[0].mxu0
    %v3634 = vpop.f32.mrb[0].mxu0
    %3635 = vdwg.mxu0
    %3636 = vmatprep.subr.bf16.mxu0 %v3169
    %3637 = vmatpush1.bf16.msra.mxu0 %v3168
    %3638 = vmatprep.subr.bf16.mxu0 %v3175
    %3639 = vmatpush1.bf16.msra.mxu0 %v3174
    %3640 = vmatprep.subr.bf16.mxu0 %v3181
    %3641 = vmatpush1.bf16.msra.mxu0 %v3180
    %3642 = vmatprep.subr.bf16.mxu0 %v3187
    %3643 = vmatpush1.bf16.msra.mxu0 %v3186
    %3644 = vmatprep.subr.bf16.mxu0 %v3193
    %3645 = vmatpush1.bf16.msra.mxu0 %v3192
    %3646 = vmatprep.subr.bf16.mxu0 %v3199
    %3647 = vmatpush1.bf16.msra.mxu0 %v3198
    %3648 = vmatprep.subr.bf16.mxu0 %v3205
    %3649 = vmatpush1.bf16.msra.mxu0 %v3204
    %3650 = vmatprep.subr.bf16.mxu0 %v3211
    %3651 = vmatpush1.bf16.msra.mxu0 %v3210
    %3652 = vmatprep.subr.bf16.mxu0 %v3217
    %3653 = vmatpush1.bf16.msra.mxu0 %v3216
    %3654 = vmatprep.subr.bf16.mxu0 %v3223
    %3655 = vmatpush1.bf16.msra.mxu0 %v3222
    %3656 = vmatprep.subr.bf16.mxu0 %v3229
    %3657 = vmatpush1.bf16.msra.mxu0 %v3228
    %3658 = vmatprep.subr.bf16.mxu0 %v3235
    %3659 = vmatpush1.bf16.msra.mxu0 %v3234
    %3660 = vmatprep.subr.bf16.mxu0 %v3241
    %3661 = vmatpush1.bf16.msra.mxu0 %v3240
    %3662 = vmatprep.subr.bf16.mxu0 %v3247
    %3663 = vmatpush1.bf16.msra.mxu0 %v3246
    %3664 = vmatprep.subr.bf16.mxu0 %v3253
    %3665 = vmatpush1.bf16.msra.mxu0 %v3252
    %3666 = vmatprep.subr.bf16.mxu0 %v3259
    %3667 = vmatpush1.bf16.msra.mxu0 %v3258
    %3668 = vmatprep.mubr.bf16.mxu0 %v2963
    %3669 = vmatmul.mubr.bf16.gmra.mrb[0].mxu0 %v2962
    %v3670 = vpop.f32.mrb[0].mxu0
    %v3671 = vadd.f32 %v3630, %v3670
    %v3672 = vpop.f32.mrb[0].mxu0
    %v3673 = vadd.f32 %v3632, %v3672
    %v3674 = vpop.f32.mrb[0].mxu0
    %v3675 = vpop.f32.mrb[0].mxu0
    %3676 = vdwg.mxu0
    %3677 = vmatprep.subr.bf16.mxu0 %v3265
    %3678 = vmatpush1.bf16.msra.mxu0 %v3264
    %3679 = vmatprep.subr.bf16.mxu0 %v3271
    %3680 = vmatpush1.bf16.msra.mxu0 %v3270
    %3681 = vmatprep.subr.bf16.mxu0 %v3277
    %3682 = vmatpush1.bf16.msra.mxu0 %v3276
    %3683 = vmatprep.subr.bf16.mxu0 %v3283
    %3684 = vmatpush1.bf16.msra.mxu0 %v3282
    %3685 = vmatprep.subr.bf16.mxu0 %v3289
    %3686 = vmatpush1.bf16.msra.mxu0 %v3288
    %3687 = vmatprep.subr.bf16.mxu0 %v3295
    %3688 = vmatpush1.bf16.msra.mxu0 %v3294
    %3689 = vmatprep.subr.bf16.mxu0 %v3301
    %3690 = vmatpush1.bf16.msra.mxu0 %v3300
    %3691 = vmatprep.subr.bf16.mxu0 %v3307
    %3692 = vmatpush1.bf16.msra.mxu0 %v3306
    %3693 = vmatprep.subr.bf16.mxu0 %v3313
    %3694 = vmatpush1.bf16.msra.mxu0 %v3312
    %3695 = vmatprep.subr.bf16.mxu0 %v3319
    %3696 = vmatpush1.bf16.msra.mxu0 %v3318
    %3697 = vmatprep.subr.bf16.mxu0 %v3325
    %3698 = vmatpush1.bf16.msra.mxu0 %v3324
    %3699 = vmatprep.subr.bf16.mxu0 %v3331
    %3700 = vmatpush1.bf16.msra.mxu0 %v3330
    %3701 = vmatprep.subr.bf16.mxu0 %v3337
    %3702 = vmatpush1.bf16.msra.mxu0 %v3336
    %3703 = vmatprep.subr.bf16.mxu0 %v3343
    %3704 = vmatpush1.bf16.msra.mxu0 %v3342
    %3705 = vmatprep.subr.bf16.mxu0 %v3349
    %3706 = vmatpush1.bf16.msra.mxu0 %v3348
    %3707 = vmatprep.subr.bf16.mxu0 %v3355
    %3708 = vmatpush1.bf16.msra.mxu0 %v3354
    %3709 = vmatprep.mubr.bf16.mxu0 %v2965
    %3710 = vmatmul.mubr.bf16.gmra.mrb[0].mxu0 %v2964
    %v3711 = vpop.f32.mrb[0].mxu0
    %v3712 = vadd.f32 %v3671, %v3711
    %v3713 = vpop.f32.mrb[0].mxu0
    %v3714 = vadd.f32 %v3673, %v3713
    %v3715 = vpop.f32.mrb[0].mxu0
    %v3716 = vpop.f32.mrb[0].mxu0
    %3717 = vdwg.mxu0
    %3718 = vmatprep.subr.bf16.mxu0 %v2979
    %3719 = vmatpush1.bf16.msra.mxu0 %v2978
    %3720 = vmatprep.subr.bf16.mxu0 %v2985
    %3721 = vmatpush1.bf16.msra.mxu0 %v2984
    %3722 = vmatprep.subr.bf16.mxu0 %v2991
    %3723 = vmatpush1.bf16.msra.mxu0 %v2990
    %3724 = vmatprep.subr.bf16.mxu0 %v2997
    %3725 = vmatpush1.bf16.msra.mxu0 %v2996
    %3726 = vmatprep.subr.bf16.mxu0 %v3003
    %3727 = vmatpush1.bf16.msra.mxu0 %v3002
    %3728 = vmatprep.subr.bf16.mxu0 %v3009
    %3729 = vmatpush1.bf16.msra.mxu0 %v3008
    %3730 = vmatprep.subr.bf16.mxu0 %v3015
    %3731 = vmatpush1.bf16.msra.mxu0 %v3014
    %3732 = vmatprep.subr.bf16.mxu0 %v3021
    %3733 = vmatpush1.bf16.msra.mxu0 %v3020
    %3734 = vmatprep.subr.bf16.mxu0 %v3027
    %3735 = vmatpush1.bf16.msra.mxu0 %v3026
    %3736 = vmatprep.subr.bf16.mxu0 %v3033
    %3737 = vmatpush1.bf16.msra.mxu0 %v3032
    %3738 = vmatprep.subr.bf16.mxu0 %v3039
    %3739 = vmatpush1.bf16.msra.mxu0 %v3038
    %3740 = vmatprep.subr.bf16.mxu0 %v3045
    %3741 = vmatpush1.bf16.msra.mxu0 %v3044
    %3742 = vmatprep.subr.bf16.mxu0 %v3051
    %3743 = vmatpush1.bf16.msra.mxu0 %v3050
    %3744 = vmatprep.subr.bf16.mxu0 %v3057
    %3745 = vmatpush1.bf16.msra.mxu0 %v3056
    %3746 = vmatprep.subr.bf16.mxu0 %v3063
    %3747 = vmatpush1.bf16.msra.mxu0 %v3062
    %3748 = vmatprep.subr.bf16.mxu0 %v3069
    %3749 = vmatpush1.bf16.msra.mxu0 %v3068
    %3750 = vmatprep.mubr.bf16.mxu0 %v2959
    %3751 = vmatmul.mubr.bf16.gmra.mrb[0].mxu0 %v2958
    %v3752 = vpop.f32.mrb[0].mxu0
    %v3753 = vadd.f32 %v3379, %v3752
    %v3754 = vpop.f32.mrb[0].mxu0
    %v3755 = vadd.f32 %v3383, %v3754
    %v3756 = vpop.f32.mrb[0].mxu0
    %v3757 = vpop.f32.mrb[0].mxu0
    %3758 = vdwg.mxu0
    %3759 = vmatprep.subr.bf16.mxu0 %v3075
    %3760 = vmatpush1.bf16.msra.mxu0 %v3074
    %3761 = vmatprep.subr.bf16.mxu0 %v3081
    %3762 = vmatpush1.bf16.msra.mxu0 %v3080
    %3763 = vmatprep.subr.bf16.mxu0 %v3087
    %3764 = vmatpush1.bf16.msra.mxu0 %v3086
    %3765 = vmatprep.subr.bf16.mxu0 %v3093
    %3766 = vmatpush1.bf16.msra.mxu0 %v3092
    %3767 = vmatprep.subr.bf16.mxu0 %v3099
    %3768 = vmatpush1.bf16.msra.mxu0 %v3098
    %3769 = vmatprep.subr.bf16.mxu0 %v3105
    %3770 = vmatpush1.bf16.msra.mxu0 %v3104
    %3771 = vmatprep.subr.bf16.mxu0 %v3111
    %3772 = vmatpush1.bf16.msra.mxu0 %v3110
    %3773 = vmatprep.subr.bf16.mxu0 %v3117
    %3774 = vmatpush1.bf16.msra.mxu0 %v3116
    %3775 = vmatprep.subr.bf16.mxu0 %v3123
    %3776 = vmatpush1.bf16.msra.mxu0 %v3122
    %3777 = vmatprep.subr.bf16.mxu0 %v3129
    %3778 = vmatpush1.bf16.msra.mxu0 %v3128
    %3779 = vmatprep.subr.bf16.mxu0 %v3135
    %3780 = vmatpush1.bf16.msra.mxu0 %v3134
    %3781 = vmatprep.subr.bf16.mxu0 %v3141
    %3782 = vmatpush1.bf16.msra.mxu0 %v3140
    %3783 = vmatprep.subr.bf16.mxu0 %v3147
    %3784 = vmatpush1.bf16.msra.mxu0 %v3146
    %3785 = vmatprep.subr.bf16.mxu0 %v3153
    %3786 = vmatpush1.bf16.msra.mxu0 %v3152
    %3787 = vmatprep.subr.bf16.mxu0 %v3159
    %3788 = vmatpush1.bf16.msra.mxu0 %v3158
    %3789 = vmatprep.subr.bf16.mxu0 %v3165
    %3790 = vmatpush1.bf16.msra.mxu0 %v3164
    %3791 = vmatprep.mubr.bf16.mxu0 %v2961
    %3792 = vmatmul.mubr.bf16.gmra.mrb[0].mxu0 %v2960
    %v3793 = vpop.f32.mrb[0].mxu0
    %v3794 = vadd.f32 %v3753, %v3793
    %v3795 = vpop.f32.mrb[0].mxu0
    %v3796 = vadd.f32 %v3755, %v3795
    %v3797 = vpop.f32.mrb[0].mxu0
    %v3798 = vpop.f32.mrb[0].mxu0
    %3799 = vdwg.mxu0
    %3800 = vmatprep.subr.bf16.mxu0 %v3171
    %3801 = vmatpush1.bf16.msra.mxu0 %v3170
    %3802 = vmatprep.subr.bf16.mxu0 %v3177
    %3803 = vmatpush1.bf16.msra.mxu0 %v3176
    %3804 = vmatprep.subr.bf16.mxu0 %v3183
    %3805 = vmatpush1.bf16.msra.mxu0 %v3182
    %3806 = vmatprep.subr.bf16.mxu0 %v3189
    %3807 = vmatpush1.bf16.msra.mxu0 %v3188
    %3808 = vmatprep.subr.bf16.mxu0 %v3195
    %3809 = vmatpush1.bf16.msra.mxu0 %v3194
    %3810 = vmatprep.subr.bf16.mxu0 %v3201
    %3811 = vmatpush1.bf16.msra.mxu0 %v3200
    %3812 = vmatprep.subr.bf16.mxu0 %v3207
    %3813 = vmatpush1.bf16.msra.mxu0 %v3206
    %3814 = vmatprep.subr.bf16.mxu0 %v3213
    %3815 = vmatpush1.bf16.msra.mxu0 %v3212
    %3816 = vmatprep.subr.bf16.mxu0 %v3219
    %3817 = vmatpush1.bf16.msra.mxu0 %v3218
    %3818 = vmatprep.subr.bf16.mxu0 %v3225
    %3819 = vmatpush1.bf16.msra.mxu0 %v3224
    %3820 = vmatprep.subr.bf16.mxu0 %v3231
    %3821 = vmatpush1.bf16.msra.mxu0 %v3230
    %3822 = vmatprep.subr.bf16.mxu0 %v3237
    %3823 = vmatpush1.bf16.msra.mxu0 %v3236
    %3824 = vmatprep.subr.bf16.mxu0 %v3243
    %3825 = vmatpush1.bf16.msra.mxu0 %v3242
    %3826 = vmatprep.subr.bf16.mxu0 %v3249
    %3827 = vmatpush1.bf16.msra.mxu0 %v3248
    %3828 = vmatprep.subr.bf16.mxu0 %v3255
    %3829 = vmatpush1.bf16.msra.mxu0 %v3254
    %3830 = vmatprep.subr.bf16.mxu0 %v3261
    %3831 = vmatpush1.bf16.msra.mxu0 %v3260
    %3832 = vmatprep.mubr.bf16.mxu0 %v2963
    %3833 = vmatmul.mubr.bf16.gmra.mrb[0].mxu0 %v2962
    %v3834 = vpop.f32.mrb[0].mxu0
    %v3835 = vadd.f32 %v3794, %v3834
    %v3836 = vpop.f32.mrb[0].mxu0
    %v3837 = vadd.f32 %v3796, %v3836
    %v3838 = vpop.f32.mrb[0].mxu0
    %v3839 = vpop.f32.mrb[0].mxu0
    %3840 = vdwg.mxu0
    %3841 = vmatprep.subr.bf16.mxu0 %v3267
    %3842 = vmatpush1.bf16.msra.mxu0 %v3266
    %3843 = vmatprep.subr.bf16.mxu0 %v3273
    %3844 = vmatpush1.bf16.msra.mxu0 %v3272
    %3845 = vmatprep.subr.bf16.mxu0 %v3279
    %3846 = vmatpush1.bf16.msra.mxu0 %v3278
    %3847 = vmatprep.subr.bf16.mxu0 %v3285
    %3848 = vmatpush1.bf16.msra.mxu0 %v3284
    %3849 = vmatprep.subr.bf16.mxu0 %v3291
    %3850 = vmatpush1.bf16.msra.mxu0 %v3290
    %3851 = vmatprep.subr.bf16.mxu0 %v3297
    %3852 = vmatpush1.bf16.msra.mxu0 %v3296
    %3853 = vmatprep.subr.bf16.mxu0 %v3303
    %3854 = vmatpush1.bf16.msra.mxu0 %v3302
    %3855 = vmatprep.subr.bf16.mxu0 %v3309
    %3856 = vmatpush1.bf16.msra.mxu0 %v3308
    %3857 = vmatprep.subr.bf16.mxu0 %v3315
    %3858 = vmatpush1.bf16.msra.mxu0 %v3314
    %3859 = vmatprep.subr.bf16.mxu0 %v3321
    %3860 = vmatpush1.bf16.msra.mxu0 %v3320
    %3861 = vmatprep.subr.bf16.mxu0 %v3327
    %3862 = vmatpush1.bf16.msra.mxu0 %v3326
    %3863 = vmatprep.subr.bf16.mxu0 %v3333
    %3864 = vmatpush1.bf16.msra.mxu0 %v3332
    %3865 = vmatprep.subr.bf16.mxu0 %v3339
    %3866 = vmatpush1.bf16.msra.mxu0 %v3338
    %3867 = vmatprep.subr.bf16.mxu0 %v3345
    %3868 = vmatpush1.bf16.msra.mxu0 %v3344
    %3869 = vmatprep.subr.bf16.mxu0 %v3351
    %3870 = vmatpush1.bf16.msra.mxu0 %v3350
    %3871 = vmatprep.subr.bf16.mxu0 %v3357
    %3872 = vmatpush1.bf16.msra.mxu0 %v3356
    %3873 = vmatprep.mubr.bf16.mxu0 %v2965
    %3874 = vmatmul.mubr.bf16.gmra.mrb[0].mxu0 %v2964
    %v3875 = vpop.f32.mrb[0].mxu0
    %v3876 = vadd.f32 %v3835, %v3875
    %v3877 = vpop.f32.mrb[0].mxu0
    %v3878 = vadd.f32 %v3837, %v3877
    %v3879 = vpop.f32.mrb[0].mxu0
    %v3880 = vpop.f32.mrb[0].mxu0
    %3881 = vdwg.mxu0
    %v3882 = vxor.u32 %v3548, 2147483648
    %v3883 = vxor.u32 %v3550, 2147483648
    %v3884 = vxor.u32 %v3712, 2147483648
    %v3885 = vxor.u32 %v3714, 2147483648
    %v3886 = vxor.u32 %v3876, 2147483648
    %v3887 = vxor.u32 %v3878, 2147483648
    %v3888 = vmul.f32 %v3882, 1.442695
    %v3889 = vpow.pop %v3888
    %v3890 = vmul.f32 %v3883, 1.442695
    %v3891 = vpow.pop %v3890
    %v3892 = vmul.f32 %v3884, 1.442695
    %v3893 = vpow.pop %v3892
    %v3894 = vmul.f32 %v3885, 1.442695
    %v3895 = vpow.pop %v3894
    %v3896 = vmul.f32 %v3886, 1.442695
    %v3897 = vpow.pop %v3896
    %v3898 = vmul.f32 %v3887, 1.442695
    %v3899 = vpow.pop %v3898
    %v3900 = vadd.f32 %v3889, 1.0
    %v3901 = vadd.f32 %v3891, 1.0
    %v3902 = vadd.f32 %v3893, 1.0
    %v3903 = vadd.f32 %v3895, 1.0
    %v3904 = vadd.f32 %v3897, 1.0
    %v3905 = vadd.f32 %v3899, 1.0
    %v3906 = vrcp.pop %v3900
    %v3907 = vmul.f32 1.0, %v3906
    %v3908 = vrcp.pop %v3901
    %v3909 = vmul.f32 1.0, %v3908
    %v3910 = vrcp.pop %v3902
    %v3911 = vmul.f32 1.0, %v3910
    %v3912 = vrcp.pop %v3903
    %v3913 = vmul.f32 1.0, %v3912
    %v3914 = vrcp.pop %v3904
    %v3915 = vmul.f32 1.0, %v3914
    %v3916 = vrcp.pop %v3905
    %v3917 = vmul.f32 1.0, %v3916
    %v3924 = vcombine.low %v3907, %v3909
    %v3925 = vcombine.low %v3911, %v3913
    %v3927 = vunpack.c.l.s4 1983009808
    %v3928 = vunpack.c.0.s8 %v3927
    %v3929 = vlaneseq
    %v3930 = vshrl.u32 %v3929, 7
    %v3931 = vsub.s32 %v3928, %v3930
    %v3932 = vrot.slane %v3924, %v3931
    %v3934 = vunpack.c.l.s4 1983009808
    %v3935 = vunpack.c.0.s8 %v3934
    %v3936 = vlaneseq
    %v3937 = vshrl.u32 %v3936, 7
    %v3938 = vsub.s32 %v3935, %v3937
    %v3939 = vrot.slane %v3925, %v3938
    %v3940 = vcombine.low %v3932, %v3939
    %v3941 = vcombine.low %v3915, %v3917
    %v3943 = vunpack.c.l.s4 1983009808
    %v3944 = vunpack.c.0.s8 %v3943
    %v3945 = vlaneseq
    %v3946 = vshrl.u32 %v3945, 7
    %v3947 = vsub.s32 %v3944, %v3946
    %v3948 = vrot.slane %v3941, %v3947
    %3951 = vst [vmem:[%s14] sm:$0xff] %v3940
    %3952 = vst [vmem:[%s14 + $0x8] sm:$0xf] %v3948
    // Predicated region
    $region82: #{conv_autoencoder_forward.1} parent=1 // pred_check
      _
    $region83: #{conv_autoencoder_forward.1} parent=1 // pred_check_branch
      %3954 = sbr.rel (0) target = $region85
    $region84: #{conv_autoencoder_forward.1} parent=1 // pred_region
      _
    $region85: #{conv_autoencoder_forward.1} parent=1 // pred_fallthru
      _
    // Predicated region
    $region86: #{conv_autoencoder_forward.1} parent=1 // pred_check
      _
    $region87: #{conv_autoencoder_forward.1} parent=1 // pred_check_branch
      %3956 = sbr.rel (0) target = $region89
    $region88: #{conv_autoencoder_forward.1} parent=1 // pred_region
      _
    $region89: #{conv_autoencoder_forward.1} parent=1 // pred_fallthru
      _
    // Predicated region
    $region90: #{conv_autoencoder_forward.1} parent=1 // pred_check
      _
    $region91: #{conv_autoencoder_forward.1} parent=1 // pred_check_branch
      %3958 = sbr.rel (0) target = $region93
    $region92: #{conv_autoencoder_forward.1} parent=1 // pred_region
      _
    $region93: #{conv_autoencoder_forward.1} parent=1 // pred_fallthru
      _
    // Predicated region
    $region94: #{conv_autoencoder_forward.1} parent=1 // pred_check
      _
    $region95: #{conv_autoencoder_forward.1} parent=1 // pred_check_branch
      %3960 = sbr.rel (0) target = $region97
    $region96: #{conv_autoencoder_forward.1} parent=1 // pred_region
      _
    $region97: #{conv_autoencoder_forward.1} parent=1 // pred_fallthru
      _
    %3961 = vsyncpa [#allocation10], 1
    %3962 = vsyncpa [#allocation12], 1
    %3963 = vsyncpa [#allocation15], 1
    %3964 = vsyncpa [#allocation18], 1
  %3965 = vsyncmov [#allocation8]
  %s3966 = vpop.sfrf %3965
  %p3967 = scmp.eq.s32.totalorder %s3966, 0
  %p3968 = pneg %p3967
  %3970 = shalt.err (%p3968)
  %s3971 = scalar_lea.sflag [#allocation8], 1
  %3972 = vsyncmov %s3971
  %s3973 = vpop.sfrf %3972
  %p3974 = scmp.eq.s32.totalorder %s3973, 0
  %p3975 = pneg %p3974
  %3977 = shalt.err (%p3975)
  %s3978 = scalar_lea.sflag [#allocation8], 2
  %3979 = vsyncmov %s3978
  %s3980 = vpop.sfrf %3979
  %p3981 = scmp.eq.s32.totalorder %s3980, 0
  %p3982 = pneg %p3981
  %3984 = shalt.err (%p3982)
  %s3985 = scalar_lea.sflag [#allocation8], 3
  %3986 = vsyncmov %s3985
  %s3987 = vpop.sfrf %3986
  %p3988 = scmp.eq.s32.totalorder %s3987, 0
  %p3989 = pneg %p3988
  %3991 = shalt.err (%p3989)
  %s3992 = scalar_lea.sflag [#allocation8], 4
  %3993 = vsyncmov %s3992
  %s3994 = vpop.sfrf %3993
  %p3995 = scmp.eq.s32.totalorder %s3994, 0
  %p3996 = pneg %p3995
  %3998 = shalt.err (%p3996)
  %s3999 = scalar_lea.sflag [#allocation8], 5
  %4000 = vsyncmov %s3999
  %s4001 = vpop.sfrf %4000
  %p4002 = scmp.eq.s32.totalorder %s4001, 0
  %p4003 = pneg %p4002
  %4005 = shalt.err (%p4003)

</llo_original>
